<compile_context>
chip_gen: v6e
topology: v6e:2x2x1
jax: 0.10.0
libtpu: 0.0.40
codegen_flags: <defaults>
</compile_context>

<pallas_src>
import math
from functools import partial

import numpy as np
import jax
import jax.numpy as jnp
from jax.experimental import pallas as pl
from jax.experimental.pallas import tpu as pltpu


def _round_up(x, m):
    return (x + m - 1) // m * m


# ----------------------------------------------------------------------------
# Pallas kernel: one full encoder layer for one batch element.
# ----------------------------------------------------------------------------

def _encoder_layer_kernel(x_ref, wqkv_ref, bqkv_ref, wo_ref, bo_ref,
                          g1_ref, be1_ref, w1_ref, bf1_ref,
                          w2_ref, bf2_ref, g2_ref, be2_ref,
                          o_ref, xbf_ref, ctx_ref, *, H, hd, hd_p, eps):
    """x_ref: (S, E) f32.  wqkv: (H, hd, 3*hd_p) bf16 per-head [q|k|v] weights
    (columns beyond hd zero-padded).  wo: (Ep, E) bf16 (zero rows at padded
    head positions).  xbf_ref: (S, E) bf16 scratch, ctx_ref: (S, Ep) bf16
    scratch.  Output o_ref: (S, E) f32."""
    inv_sqrt_d = 1.0 / math.sqrt(hd)          # scale uses the TRUE head dim

    # Stage input once in bf16 (single cast, MXU-ready per-head slices).
    xbf_ref[...] = x_ref[...].astype(jnp.bfloat16)

    # Per-head QKV projection + attention.  Nothing large lives across
    # iterations: each head reads xbf_ref / weight refs and writes ctx_ref.
    # TODO(synk): switch this static unroll to lax.fori_loop(unroll=True) with
    # pl.ds offsets if H is ever scaled to 8+.
    for h in range(H):
        x_h = xbf_ref[:, h * hd:(h + 1) * hd]                     # (S, hd) bf16
        qkv = jnp.dot(x_h, wqkv_ref[h],
                      preferred_element_type=jnp.float32) + bqkv_ref[h]
        q = qkv[:, :hd_p]
        k = qkv[:, hd_p:2 * hd_p]
        v = qkv[:, 2 * hd_p:]
        s = jax.lax.dot_general(q.astype(jnp.bfloat16), k.astype(jnp.bfloat16),
                                (((1,), (1,)), ((), ())),
                                preferred_element_type=jnp.float32) * inv_sqrt_d
        s = s - jnp.max(s, axis=-1, keepdims=True)                # stable softmax
        p = jnp.exp(s)
        p = p * pl.reciprocal(jnp.sum(p, axis=-1, keepdims=True), approx=True)
        ctx_ref[:, h * hd_p:(h + 1) * hd_p] = jnp.dot(
            p.astype(jnp.bfloat16), v.astype(jnp.bfloat16),
            preferred_element_type=jnp.float32).astype(jnp.bfloat16)

    # Output projection for all heads at once (padded rows of wo are zero).
    attn = jnp.dot(ctx_ref[...], wo_ref[...],
                   preferred_element_type=jnp.float32) + bo_ref[...]

    # Dropout = identity (inference).  Add & LayerNorm 1 (biased variance).
    y = attn + x_ref[...]
    mu = jnp.mean(y, axis=-1, keepdims=True)
    var = jnp.mean((y - mu) ** 2, axis=-1, keepdims=True)
    y = g1_ref[...] * ((y - mu) * jax.lax.rsqrt(var + eps)) + be1_ref[...]

    # Feed-forward: Linear -> ReLU -> (dropout=id) -> Linear.
    # Hidden dim zero-padded to a multiple of 128 in the wrapper (exact).
    hid = jnp.maximum(
        jnp.dot(y.astype(jnp.bfloat16), w1_ref[...],
                preferred_element_type=jnp.float32) + bf1_ref[...], 0.0)
    f = jnp.dot(hid.astype(jnp.bfloat16), w2_ref[...],
                preferred_element_type=jnp.float32) + bf2_ref[...]

    # Add & LayerNorm 2.
    z = f + y
    mu2 = jnp.mean(z, axis=-1, keepdims=True)
    var2 = jnp.mean((z - mu2) ** 2, axis=-1, keepdims=True)
    o_ref[...] = (g2_ref[...] * ((z - mu2) * jax.lax.rsqrt(var2 + eps))
                  + be2_ref[...]).astype(o_ref.dtype)


# ----------------------------------------------------------------------------
# Wrapper
# ----------------------------------------------------------------------------

def encoder_layer(x, kp, *, H, hd, hd_p, eps=1e-5):
    """x: (B, S, E) f32.  kp: fused/padded kernel params (build_kernel_params)."""
    B, S, E = x.shape
    Ep = H * hd_p
    Fp = kp["w1"].shape[1]

    def rep(shape):  # replicated (weight) block: full array every grid step
        nd = len(shape)
        return pl.BlockSpec(shape, lambda b, _nd=nd: (0,) * _nd)

    kern = partial(_encoder_layer_kernel, H=H, hd=hd, hd_p=hd_p, eps=eps)
    return pl.pallas_call(
        kern,
        out_shape=jax.ShapeDtypeStruct((B, S, E), jnp.float32),
        grid=(B,),
        in_specs=[
            pl.BlockSpec((None, S, E), lambda b: (b, 0, 0)),
            rep((H, hd, 3 * hd_p)), rep((H, 1, 3 * hd_p)),
            rep((Ep, E)), rep((1, E)),
            rep((1, E)), rep((1, E)),
            rep((E, Fp)), rep((1, Fp)),
            rep((Fp, E)), rep((1, E)),
            rep((1, E)), rep((1, E)),
        ],
        out_specs=pl.BlockSpec((None, S, E), lambda b: (b, 0, 0)),
        scratch_shapes=[pltpu.VMEM((S, E), jnp.bfloat16),
                        pltpu.VMEM((S, Ep), jnp.bfloat16)],
        compiler_params=pltpu.CompilerParams(
            dimension_semantics=("parallel",)),
    )(x, kp["wqkv"], kp["bqkv"], kp["wo"], kp["bo"], kp["g1"], kp["be1"],
      kp["w1"], kp["bf1"], kp["w2"], kp["bf2"], kp["g2"], kp["be2"])


# ----------------------------------------------------------------------------
# Parameters: "raw" PyTorch-layout weights + fused/padded kernel weights.
# ----------------------------------------------------------------------------

def init_raw_params(key, E, H, F):
    hd = E // H
    keys = jax.random.split(key, 12)

    def lin(k, fan_in, shape):
        return (1.0 / math.sqrt(fan_in)) * jax.random.normal(k, shape, jnp.float32)

    return {
        "wq": lin(keys[0], hd, (H, hd, hd)), "bq": lin(keys[1], hd, (H, hd)),
        "wk": lin(keys[2], hd, (H, hd, hd)), "bk": lin(keys[3], hd, (H, hd)),
        "wv": lin(keys[4], hd, (H, hd, hd)), "bv": lin(keys[5], hd, (H, hd)),
        "wo": lin(keys[6], E, (E, E)),       "bo": lin(keys[7], E, (E,)),
        "g1": jnp.ones((E,), jnp.float32),   "be1": jnp.zeros((E,), jnp.float32),
        "w1": lin(keys[8], E, (F, E)),       "b1": lin(keys[9], E, (F,)),
        "w2": lin(keys[10], F, (E, F)),      "b2": lin(keys[11], F, (E,)),
        "g2": jnp.ones((E,), jnp.float32),   "be2": jnp.zeros((E,), jnp.float32),
    }


def build_kernel_params(raw, E, H, F):
    """Stack per-head Linear weights as (H, hd, 3*hd_p) [q|k|v] blocks with the
    head dim zero-padded to a multiple of 128; pad the FFN hidden dim to a
    multiple of 128; pre-cast matmul weights to bf16.  All zero padding is
    numerically exact (zero q/k/v cols, zero Wo rows, zero w1 cols / w2 rows)."""
    hd = E // H
    hd_p = _round_up(hd, 128)
    Ep = H * hd_p
    Fp = _round_up(F, 128)

    wqkv = np.zeros((H, hd, 3 * hd_p), np.float32)
    bqkv = np.zeros((H, 1, 3 * hd_p), np.float32)
    for j, (wn, bn) in enumerate((("wq", "bq"), ("wk", "bk"), ("wv", "bv"))):
        w = np.asarray(raw[wn]); b = np.asarray(raw[bn])
        for h in range(H):
            wqkv[h, :, j * hd_p:j * hd_p + hd] = w[h].T      # y = x @ W^T + b
            bqkv[h, 0, j * hd_p:j * hd_p + hd] = b[h]

    wo = np.zeros((Ep, E), np.float32)
    wo_t = np.asarray(raw["wo"]).T                           # values @ Wo^T
    for h in range(H):
        wo[h * hd_p:h * hd_p + hd, :] = wo_t[h * hd:(h + 1) * hd, :]

    w1 = np.zeros((E, Fp), np.float32)
    w1[:, :F] = np.asarray(raw["w1"]).T                      # (E, F) -> (E, Fp)
    bf1 = np.zeros((1, Fp), np.float32)
    bf1[0, :F] = np.asarray(raw["b1"])
    w2 = np.zeros((Fp, E), np.float32)
    w2[:F, :] = np.asarray(raw["w2"]).T                      # (F, E) -> (Fp, E)

    kp = {
        "wqkv": jnp.asarray(wqkv, jnp.bfloat16),
        "bqkv": jnp.asarray(bqkv),
        "wo":   jnp.asarray(wo, jnp.bfloat16),
        "bo":   jnp.asarray(np.asarray(raw["bo"])[None, :]),
        "g1":   raw["g1"][None, :], "be1": raw["be1"][None, :],
        "w1":   jnp.asarray(w1, jnp.bfloat16),
        "bf1":  jnp.asarray(bf1),
        "w2":   jnp.asarray(w2, jnp.bfloat16),
        "bf2":  jnp.asarray(np.asarray(raw["b2"])[None, :]),
        "g2":   raw["g2"][None, :], "be2": raw["be2"][None, :],
    }
    return kp, dict(H=H, hd=hd, hd_p=hd_p, Ep=Ep, Fp=Fp)


# ----------------------------------------------------------------------------
# Pure-JAX f32 reference (mirrors the PyTorch module exactly, eval mode).
# ----------------------------------------------------------------------------

def reference_encoder_layer(x, raw, *, H, eps=1e-5):
    B, S, E = x.shape
    hd = E // H

    def ln(v, g, b):
        mu = jnp.mean(v, axis=-1, keepdims=True)
        var = jnp.mean((v - mu) ** 2, axis=-1, keepdims=True)
        return g * ((v - mu) / jnp.sqrt(var + eps)) + b

    def proj(w, bias):
        return jnp.concatenate(
            [x[:, :, h * hd:(h + 1) * hd] @ w[h].T + bias[h] for h in range(H)],
            axis=-1)

    q = proj(raw["wq"], raw["bq"]).reshape(B, S, H, hd).transpose(0, 2, 1, 3)
    k = proj(raw["wk"], raw["bk"]).reshape(B, S, H, hd).transpose(0, 2, 1, 3)
    v = proj(raw["wv"], raw["bv"]).reshape(B, S, H, hd).transpose(0, 2, 1, 3)
    s = jnp.einsum("bhqd,bhkd->bhqk", q, k) / math.sqrt(hd)
    p = jax.nn.softmax(s, axis=-1)
    vals = jnp.einsum("bhqk,bhkd->bhqd", p, v).transpose(0, 2, 1, 3).reshape(B, S, E)
    attn = vals @ raw["wo"].T + raw["bo"]
    y = ln(attn + x, raw["g1"], raw["be1"])
    f = jnp.maximum(y @ raw["w1"].T + raw["b1"], 0.0) @ raw["w2"].T + raw["b2"]
    return ln(f + y, raw["g2"], raw["be2"])


# ----------------------------------------------------------------------------

if __name__ == "__main__":
    # Small, TPU-friendly shapes consistent with the module:
    # batch=2, seq_len=128, emb_dim=256, num_heads=2 (head_dim=128), ffn_hidden=64.
    B, S, E = 2, 128, 256
    H, F = 2, 64

    key = jax.random.PRNGKey(0)
    p_key, x_key = jax.random.split(key)
    raw = init_raw_params(p_key, E, H, F)
    kp, dims = build_kernel_params(raw, E, H, F)

    x = jax.random.normal(x_key, (B, S, E), dtype=jnp.float32)

    run = jax.jit(partial(encoder_layer, H=dims["H"], hd=dims["hd"],
                          hd_p=dims["hd_p"]))
    out = jax.block_until_ready(run(x, kp))

    ref = reference_encoder_layer(x, raw, H=H)
    assert out.shape == (B, S, E), out.shape
    assert bool(jnp.all(jnp.isfinite(out)))
    rel_l2 = float(jnp.linalg.norm(out - ref) / jnp.linalg.norm(ref))
    max_abs = float(jnp.max(jnp.abs(out - ref)))
    # bf16 MXU inputs (f32 accumulation) give ~1e-2-level deviations vs f32 ref.
    assert rel_l2 < 2e-2 and max_abs < 1e-1, (rel_l2, max_abs)
    print("KERNEL_OK")
</pallas_src>

<mosaic_0001>
module attributes {stable_mosaic.version = 11 : i64} {
  func.func @_encoder_layer_kernel(%arg0: i32, %arg1: memref<1x128x256xf32, #tpu.memory_space<vmem>>, %arg2: memref<2x128x384xbf16, #tpu.memory_space<vmem>>, %arg3: memref<2x1x384xf32, #tpu.memory_space<vmem>>, %arg4: memref<256x256xbf16, #tpu.memory_space<vmem>>, %arg5: memref<1x256xf32, #tpu.memory_space<vmem>>, %arg6: memref<1x256xf32, #tpu.memory_space<vmem>>, %arg7: memref<1x256xf32, #tpu.memory_space<vmem>>, %arg8: memref<256x128xbf16, #tpu.memory_space<vmem>>, %arg9: memref<1x128xf32, #tpu.memory_space<vmem>>, %arg10: memref<128x256xbf16, #tpu.memory_space<vmem>>, %arg11: memref<1x256xf32, #tpu.memory_space<vmem>>, %arg12: memref<1x256xf32, #tpu.memory_space<vmem>>, %arg13: memref<1x256xf32, #tpu.memory_space<vmem>>, %arg14: memref<1x128x256xf32, #tpu.memory_space<vmem>>, %arg15: memref<128x256xbf16, #tpu.memory_space<vmem>>, %arg16: memref<128x256xbf16, #tpu.memory_space<vmem>>) attributes {dimension_semantics = [#tpu.dimension_semantics<parallel>], iteration_bounds = array<i64: 2>, scalar_prefetch = 0 : i64, scratch_operands = 2 : i64, tpu.core_type = #tpu.core_type<tc>, window_params = [{transform_indices = @transform_0, window_bounds = array<i64: 1, 128, 256>}, {pipeline_mode = #tpu.pipeline_mode<synchronous>, transform_indices = @transform_1, window_bounds = array<i64: 2, 128, 384>}, {pipeline_mode = #tpu.pipeline_mode<synchronous>, transform_indices = @transform_2, window_bounds = array<i64: 2, 1, 384>}, {pipeline_mode = #tpu.pipeline_mode<synchronous>, transform_indices = @transform_3, window_bounds = array<i64: 256, 256>}, {pipeline_mode = #tpu.pipeline_mode<synchronous>, transform_indices = @transform_4, window_bounds = array<i64: 1, 256>}, {pipeline_mode = #tpu.pipeline_mode<synchronous>, transform_indices = @transform_5, window_bounds = array<i64: 1, 256>}, {pipeline_mode = #tpu.pipeline_mode<synchronous>, transform_indices = @transform_6, window_bounds = array<i64: 1, 256>}, {pipeline_mode = #tpu.pipeline_mode<synchronous>, transform_indices = @transform_7, window_bounds = array<i64: 256, 128>}, {pipeline_mode = #tpu.pipeline_mode<synchronous>, transform_indices = @transform_8, window_bounds = array<i64: 1, 128>}, {pipeline_mode = #tpu.pipeline_mode<synchronous>, transform_indices = @transform_9, window_bounds = array<i64: 128, 256>}, {pipeline_mode = #tpu.pipeline_mode<synchronous>, transform_indices = @transform_10, window_bounds = array<i64: 1, 256>}, {pipeline_mode = #tpu.pipeline_mode<synchronous>, transform_indices = @transform_11, window_bounds = array<i64: 1, 256>}, {pipeline_mode = #tpu.pipeline_mode<synchronous>, transform_indices = @transform_12, window_bounds = array<i64: 1, 256>}, {transform_indices = @transform_13, window_bounds = array<i64: 1, 128, 256>}]} {
    %c0 = arith.constant 0 : index
    %c0_0 = arith.constant 0 : index
    %c0_1 = arith.constant 0 : index
    %0 = vector.load %arg1[%c0, %c0_0, %c0_1] : memref<1x128x256xf32, #tpu.memory_space<vmem>>, vector<1x128x256xf32>
    %1 = vector.shape_cast %0 : vector<1x128x256xf32> to vector<128x256xf32>
    %2 = arith.truncf %1 : vector<128x256xf32> to vector<128x256xbf16>
    %c0_2 = arith.constant 0 : index
    %c0_3 = arith.constant 0 : index
    %3 = vector.load %arg15[%c0_2, %c0_3] : memref<128x256xbf16, #tpu.memory_space<vmem>>, vector<128x256xbf16>
    tpu.vector_store %arg15[%c0_2, %c0_3], %2 {strides = array<i32>} : memref<128x256xbf16, #tpu.memory_space<vmem>>, vector<128x256xbf16>,
    %c0_4 = arith.constant 0 : index
    %c0_5 = arith.constant 0 : index
    %4 = vector.load %arg15[%c0_4, %c0_5] : memref<128x256xbf16, #tpu.memory_space<vmem>>, vector<128x128xbf16>
    %c0_6 = arith.constant 0 : index
    %c0_7 = arith.constant 0 : index
    %c0_8 = arith.constant 0 : index
    %5 = vector.load %arg2[%c0_6, %c0_7, %c0_8] : memref<2x128x384xbf16, #tpu.memory_space<vmem>>, vector<1x128x384xbf16>
    %6 = vector.shape_cast %5 : vector<1x128x384xbf16> to vector<128x384xbf16>
    %cst = arith.constant dense<0.000000e+00> : vector<128x384xf32>
    %7 = tpu.matmul %4, %6, %cst {dimension_numbers = #tpu.dot_dimension_numbers<[1], [0], [0], [1], [0, 0, 1, 1], [], []>} : vector<128x128xbf16>, vector<128x384xbf16>, vector<128x384xf32> -> vector<128x384xf32>
    %c0_9 = arith.constant 0 : index
    %c0_10 = arith.constant 0 : index
    %c0_11 = arith.constant 0 : index
    %8 = vector.load %arg3[%c0_9, %c0_10, %c0_11] : memref<2x1x384xf32, #tpu.memory_space<vmem>>, vector<1x1x384xf32>
    %9 = vector.shape_cast %8 : vector<1x1x384xf32> to vector<1x384xf32>
    %10 = vector.broadcast %9 : vector<1x384xf32> to vector<128x384xf32>
    %11 = arith.addf %7, %10 : vector<128x384xf32>
    %12 = vector.extract_strided_slice %11 {offsets = [0, 0], sizes = [128, 128], strides = [1, 1]} : vector<128x384xf32> to vector<128x128xf32>
    %13 = vector.extract_strided_slice %11 {offsets = [0, 128], sizes = [128, 128], strides = [1, 1]} : vector<128x384xf32> to vector<128x128xf32>
    %14 = vector.extract_strided_slice %11 {offsets = [0, 256], sizes = [128, 128], strides = [1, 1]} : vector<128x384xf32> to vector<128x128xf32>
    %15 = arith.truncf %12 : vector<128x128xf32> to vector<128x128xbf16>
    %16 = arith.truncf %13 : vector<128x128xf32> to vector<128x128xbf16>
    %cst_12 = arith.constant dense<0.000000e+00> : vector<128x128xf32>
    %17 = tpu.matmul %15, %16, %cst_12 {dimension_numbers = #tpu.dot_dimension_numbers<[1], [1], [0], [0], [0, 0, 1, 0], [], []>} : vector<128x128xbf16>, vector<128x128xbf16>, vector<128x128xf32> -> vector<128x128xf32>
    %cst_13 = arith.constant 0.0883883461 : f32
    %18 = vector.broadcast %cst_13 : f32 to vector<128x128xf32>
    %19 = arith.mulf %17, %18 : vector<128x128xf32>
    %cst_14 = arith.constant dense<0xFF800000> : vector<128xf32>
    %20 = vector.multi_reduction <maximumf>, %19, %cst_14 [1] : vector<128x128xf32> to vector<128xf32>
    %21 = vector.shape_cast %20 : vector<128xf32> to vector<128x1xf32>
    %22 = vector.broadcast %21 : vector<128x1xf32> to vector<128x128xf32>
    %23 = arith.subf %19, %22 : vector<128x128xf32>
    %24 = math.exp %23 : vector<128x128xf32>
    %cst_15 = arith.constant dense<0.000000e+00> : vector<128xf32>
    %25 = vector.multi_reduction <add>, %24, %cst_15 [1] : vector<128x128xf32> to vector<128xf32>
    %26 = vector.shape_cast %25 : vector<128xf32> to vector<128x1xf32>
    %27 = tpu.reciprocal %26 {approx = true} : vector<128x1xf32> -> vector<128x1xf32>
    %28 = vector.broadcast %27 : vector<128x1xf32> to vector<128x128xf32>
    %29 = arith.mulf %24, %28 : vector<128x128xf32>
    %30 = arith.truncf %29 : vector<128x128xf32> to vector<128x128xbf16>
    %31 = arith.truncf %14 : vector<128x128xf32> to vector<128x128xbf16>
    %cst_16 = arith.constant dense<0.000000e+00> : vector<128x128xf32>
    %32 = tpu.matmul %30, %31, %cst_16 {dimension_numbers = #tpu.dot_dimension_numbers<[1], [0], [0], [1], [0, 0, 1, 1], [], []>} : vector<128x128xbf16>, vector<128x128xbf16>, vector<128x128xf32> -> vector<128x128xf32>
    %33 = arith.truncf %32 : vector<128x128xf32> to vector<128x128xbf16>
    %c0_17 = arith.constant 0 : index
    %c0_18 = arith.constant 0 : index
    %34 = vector.load %arg16[%c0_17, %c0_18] : memref<128x256xbf16, #tpu.memory_space<vmem>>, vector<128x128xbf16>
    tpu.vector_store %arg16[%c0_17, %c0_18], %33 {strides = array<i32>} : memref<128x256xbf16, #tpu.memory_space<vmem>>, vector<128x128xbf16>,
    %c0_19 = arith.constant 0 : index
    %c128 = arith.constant 128 : index
    %35 = vector.load %arg15[%c0_19, %c128] : memref<128x256xbf16, #tpu.memory_space<vmem>>, vector<128x128xbf16>
    %c1 = arith.constant 1 : index
    %c0_20 = arith.constant 0 : index
    %c0_21 = arith.constant 0 : index
    %36 = vector.load %arg2[%c1, %c0_20, %c0_21] : memref<2x128x384xbf16, #tpu.memory_space<vmem>>, vector<1x128x384xbf16>
    %37 = vector.shape_cast %36 : vector<1x128x384xbf16> to vector<128x384xbf16>
    %cst_22 = arith.constant dense<0.000000e+00> : vector<128x384xf32>
    %38 = tpu.matmul %35, %37, %cst_22 {dimension_numbers = #tpu.dot_dimension_numbers<[1], [0], [0], [1], [0, 0, 1, 1], [], []>} : vector<128x128xbf16>, vector<128x384xbf16>, vector<128x384xf32> -> vector<128x384xf32>
    %c1_23 = arith.constant 1 : index
    %c0_24 = arith.constant 0 : index
    %c0_25 = arith.constant 0 : index
    %39 = vector.load %arg3[%c1_23, %c0_24, %c0_25] : memref<2x1x384xf32, #tpu.memory_space<vmem>>, vector<1x1x384xf32>
    %40 = vector.shape_cast %39 : vector<1x1x384xf32> to vector<1x384xf32>
    %41 = vector.broadcast %40 : vector<1x384xf32> to vector<128x384xf32>
    %42 = arith.addf %38, %41 : vector<128x384xf32>
    %43 = vector.extract_strided_slice %42 {offsets = [0, 0], sizes = [128, 128], strides = [1, 1]} : vector<128x384xf32> to vector<128x128xf32>
    %44 = vector.extract_strided_slice %42 {offsets = [0, 128], sizes = [128, 128], strides = [1, 1]} : vector<128x384xf32> to vector<128x128xf32>
    %45 = vector.extract_strided_slice %42 {offsets = [0, 256], sizes = [128, 128], strides = [1, 1]} : vector<128x384xf32> to vector<128x128xf32>
    %46 = arith.truncf %43 : vector<128x128xf32> to vector<128x128xbf16>
    %47 = arith.truncf %44 : vector<128x128xf32> to vector<128x128xbf16>
    %cst_26 = arith.constant dense<0.000000e+00> : vector<128x128xf32>
    %48 = tpu.matmul %46, %47, %cst_26 {dimension_numbers = #tpu.dot_dimension_numbers<[1], [1], [0], [0], [0, 0, 1, 0], [], []>} : vector<128x128xbf16>, vector<128x128xbf16>, vector<128x128xf32> -> vector<128x128xf32>
    %cst_27 = arith.constant 0.0883883461 : f32
    %49 = vector.broadcast %cst_27 : f32 to vector<128x128xf32>
    %50 = arith.mulf %48, %49 : vector<128x128xf32>
    %cst_28 = arith.constant dense<0xFF800000> : vector<128xf32>
    %51 = vector.multi_reduction <maximumf>, %50, %cst_28 [1] : vector<128x128xf32> to vector<128xf32>
    %52 = vector.shape_cast %51 : vector<128xf32> to vector<128x1xf32>
    %53 = vector.broadcast %52 : vector<128x1xf32> to vector<128x128xf32>
    %54 = arith.subf %50, %53 : vector<128x128xf32>
    %55 = math.exp %54 : vector<128x128xf32>
    %cst_29 = arith.constant dense<0.000000e+00> : vector<128xf32>
    %56 = vector.multi_reduction <add>, %55, %cst_29 [1] : vector<128x128xf32> to vector<128xf32>
    %57 = vector.shape_cast %56 : vector<128xf32> to vector<128x1xf32>
    %58 = tpu.reciprocal %57 {approx = true} : vector<128x1xf32> -> vector<128x1xf32>
    %59 = vector.broadcast %58 : vector<128x1xf32> to vector<128x128xf32>
    %60 = arith.mulf %55, %59 : vector<128x128xf32>
    %61 = arith.truncf %60 : vector<128x128xf32> to vector<128x128xbf16>
    %62 = arith.truncf %45 : vector<128x128xf32> to vector<128x128xbf16>
    %cst_30 = arith.constant dense<0.000000e+00> : vector<128x128xf32>
    %63 = tpu.matmul %61, %62, %cst_30 {dimension_numbers = #tpu.dot_dimension_numbers<[1], [0], [0], [1], [0, 0, 1, 1], [], []>} : vector<128x128xbf16>, vector<128x128xbf16>, vector<128x128xf32> -> vector<128x128xf32>
    %64 = arith.truncf %63 : vector<128x128xf32> to vector<128x128xbf16>
    %c0_31 = arith.constant 0 : index
    %c128_32 = arith.constant 128 : index
    %65 = vector.load %arg16[%c0_31, %c128_32] : memref<128x256xbf16, #tpu.memory_space<vmem>>, vector<128x128xbf16>
    tpu.vector_store %arg16[%c0_31, %c128_32], %64 {strides = array<i32>} : memref<128x256xbf16, #tpu.memory_space<vmem>>, vector<128x128xbf16>,
    %c0_33 = arith.constant 0 : index
    %c0_34 = arith.constant 0 : index
    %66 = vector.load %arg16[%c0_33, %c0_34] : memref<128x256xbf16, #tpu.memory_space<vmem>>, vector<128x256xbf16>
    %c0_35 = arith.constant 0 : index
    %c0_36 = arith.constant 0 : index
    %67 = vector.load %arg4[%c0_35, %c0_36] : memref<256x256xbf16, #tpu.memory_space<vmem>>, vector<256x256xbf16>
    %cst_37 = arith.constant dense<0.000000e+00> : vector<128x256xf32>
    %68 = tpu.matmul %66, %67, %cst_37 {dimension_numbers = #tpu.dot_dimension_numbers<[1], [0], [0], [1], [0, 0, 1, 1], [], []>} : vector<128x256xbf16>, vector<256x256xbf16>, vector<128x256xf32> -> vector<128x256xf32>
    %c0_38 = arith.constant 0 : index
    %c0_39 = arith.constant 0 : index
    %69 = vector.load %arg5[%c0_38, %c0_39] : memref<1x256xf32, #tpu.memory_space<vmem>>, vector<1x256xf32>
    %70 = vector.broadcast %69 : vector<1x256xf32> to vector<128x256xf32>
    %71 = arith.addf %68, %70 : vector<128x256xf32>
    %c0_40 = arith.constant 0 : index
    %c0_41 = arith.constant 0 : index
    %c0_42 = arith.constant 0 : index
    %72 = vector.load %arg1[%c0_40, %c0_41, %c0_42] : memref<1x128x256xf32, #tpu.memory_space<vmem>>, vector<1x128x256xf32>
    %73 = vector.shape_cast %72 : vector<1x128x256xf32> to vector<128x256xf32>
    %74 = arith.addf %71, %73 : vector<128x256xf32>
    %cst_43 = arith.constant dense<0.000000e+00> : vector<128xf32>
    %75 = vector.multi_reduction <add>, %74, %cst_43 [1] : vector<128x256xf32> to vector<128xf32>
    %76 = vector.shape_cast %75 : vector<128xf32> to vector<128x1xf32>
    %cst_44 = arith.constant 2.560000e+02 : f32
    %77 = vector.broadcast %cst_44 : f32 to vector<128x1xf32>
    %78 = arith.divf %76, %77 : vector<128x1xf32>
    %79 = vector.broadcast %78 : vector<128x1xf32> to vector<128x256xf32>
    %80 = arith.subf %74, %79 : vector<128x256xf32>
    %81 = arith.mulf %80, %80 : vector<128x256xf32>
    %cst_45 = arith.constant dense<0.000000e+00> : vector<128xf32>
    %82 = vector.multi_reduction <add>, %81, %cst_45 [1] : vector<128x256xf32> to vector<128xf32>
    %83 = vector.shape_cast %82 : vector<128xf32> to vector<128x1xf32>
    %cst_46 = arith.constant 2.560000e+02 : f32
    %84 = vector.broadcast %cst_46 : f32 to vector<128x1xf32>
    %85 = arith.divf %83, %84 : vector<128x1xf32>
    %c0_47 = arith.constant 0 : index
    %c0_48 = arith.constant 0 : index
    %86 = vector.load %arg6[%c0_47, %c0_48] : memref<1x256xf32, #tpu.memory_space<vmem>>, vector<1x256xf32>
    %87 = vector.broadcast %78 : vector<128x1xf32> to vector<128x256xf32>
    %88 = arith.subf %74, %87 : vector<128x256xf32>
    %cst_49 = arith.constant 9.99999974E-6 : f32
    %89 = vector.broadcast %cst_49 : f32 to vector<128x1xf32>
    %90 = arith.addf %85, %89 : vector<128x1xf32>
    %91 = math.rsqrt %90 : vector<128x1xf32>
    %92 = vector.broadcast %91 : vector<128x1xf32> to vector<128x256xf32>
    %93 = arith.mulf %88, %92 : vector<128x256xf32>
    %94 = vector.broadcast %86 : vector<1x256xf32> to vector<128x256xf32>
    %95 = arith.mulf %94, %93 : vector<128x256xf32>
    %c0_50 = arith.constant 0 : index
    %c0_51 = arith.constant 0 : index
    %96 = vector.load %arg7[%c0_50, %c0_51] : memref<1x256xf32, #tpu.memory_space<vmem>>, vector<1x256xf32>
    %97 = vector.broadcast %96 : vector<1x256xf32> to vector<128x256xf32>
    %98 = arith.addf %95, %97 : vector<128x256xf32>
    %99 = arith.truncf %98 : vector<128x256xf32> to vector<128x256xbf16>
    %c0_52 = arith.constant 0 : index
    %c0_53 = arith.constant 0 : index
    %100 = vector.load %arg8[%c0_52, %c0_53] : memref<256x128xbf16, #tpu.memory_space<vmem>>, vector<256x128xbf16>
    %cst_54 = arith.constant dense<0.000000e+00> : vector<128x128xf32>
    %101 = tpu.matmul %99, %100, %cst_54 {dimension_numbers = #tpu.dot_dimension_numbers<[1], [0], [0], [1], [0, 0, 1, 1], [], []>} : vector<128x256xbf16>, vector<256x128xbf16>, vector<128x128xf32> -> vector<128x128xf32>
    %c0_55 = arith.constant 0 : index
    %c0_56 = arith.constant 0 : index
    %102 = vector.load %arg9[%c0_55, %c0_56] : memref<1x128xf32, #tpu.memory_space<vmem>>, vector<1x128xf32>
    %103 = vector.broadcast %102 : vector<1x128xf32> to vector<128x128xf32>
    %104 = arith.addf %101, %103 : vector<128x128xf32>
    %cst_57 = arith.constant 0.000000e+00 : f32
    %105 = vector.broadcast %cst_57 : f32 to vector<128x128xf32>
    %106 = arith.maximumf %104, %105 : vector<128x128xf32>
    %107 = arith.truncf %106 : vector<128x128xf32> to vector<128x128xbf16>
    %c0_58 = arith.constant 0 : index
    %c0_59 = arith.constant 0 : index
    %108 = vector.load %arg10[%c0_58, %c0_59] : memref<128x256xbf16, #tpu.memory_space<vmem>>, vector<128x256xbf16>
    %cst_60 = arith.constant dense<0.000000e+00> : vector<128x256xf32>
    %109 = tpu.matmul %107, %108, %cst_60 {dimension_numbers = #tpu.dot_dimension_numbers<[1], [0], [0], [1], [0, 0, 1, 1], [], []>} : vector<128x128xbf16>, vector<128x256xbf16>, vector<128x256xf32> -> vector<128x256xf32>
    %c0_61 = arith.constant 0 : index
    %c0_62 = arith.constant 0 : index
    %110 = vector.load %arg11[%c0_61, %c0_62] : memref<1x256xf32, #tpu.memory_space<vmem>>, vector<1x256xf32>
    %111 = vector.broadcast %110 : vector<1x256xf32> to vector<128x256xf32>
    %112 = arith.addf %109, %111 : vector<128x256xf32>
    %113 = arith.addf %112, %98 : vector<128x256xf32>
    %cst_63 = arith.constant dense<0.000000e+00> : vector<128xf32>
    %114 = vector.multi_reduction <add>, %113, %cst_63 [1] : vector<128x256xf32> to vector<128xf32>
    %115 = vector.shape_cast %114 : vector<128xf32> to vector<128x1xf32>
    %cst_64 = arith.constant 2.560000e+02 : f32
    %116 = vector.broadcast %cst_64 : f32 to vector<128x1xf32>
    %117 = arith.divf %115, %116 : vector<128x1xf32>
    %118 = vector.broadcast %117 : vector<128x1xf32> to vector<128x256xf32>
    %119 = arith.subf %113, %118 : vector<128x256xf32>
    %120 = arith.mulf %119, %119 : vector<128x256xf32>
    %cst_65 = arith.constant dense<0.000000e+00> : vector<128xf32>
    %121 = vector.multi_reduction <add>, %120, %cst_65 [1] : vector<128x256xf32> to vector<128xf32>
    %122 = vector.shape_cast %121 : vector<128xf32> to vector<128x1xf32>
    %cst_66 = arith.constant 2.560000e+02 : f32
    %123 = vector.broadcast %cst_66 : f32 to vector<128x1xf32>
    %124 = arith.divf %122, %123 : vector<128x1xf32>
    %c0_67 = arith.constant 0 : index
    %c0_68 = arith.constant 0 : index
    %125 = vector.load %arg12[%c0_67, %c0_68] : memref<1x256xf32, #tpu.memory_space<vmem>>, vector<1x256xf32>
    %126 = vector.broadcast %117 : vector<128x1xf32> to vector<128x256xf32>
    %127 = arith.subf %113, %126 : vector<128x256xf32>
    %cst_69 = arith.constant 9.99999974E-6 : f32
    %128 = vector.broadcast %cst_69 : f32 to vector<128x1xf32>
    %129 = arith.addf %124, %128 : vector<128x1xf32>
    %130 = math.rsqrt %129 : vector<128x1xf32>
    %131 = vector.broadcast %130 : vector<128x1xf32> to vector<128x256xf32>
    %132 = arith.mulf %127, %131 : vector<128x256xf32>
    %133 = vector.broadcast %125 : vector<1x256xf32> to vector<128x256xf32>
    %134 = arith.mulf %133, %132 : vector<128x256xf32>
    %c0_70 = arith.constant 0 : index
    %c0_71 = arith.constant 0 : index
    %135 = vector.load %arg13[%c0_70, %c0_71] : memref<1x256xf32, #tpu.memory_space<vmem>>, vector<1x256xf32>
    %136 = vector.broadcast %135 : vector<1x256xf32> to vector<128x256xf32>
    %137 = arith.addf %134, %136 : vector<128x256xf32>
    %c0_72 = arith.constant 0 : index
    %c0_73 = arith.constant 0 : index
    %c0_74 = arith.constant 0 : index
    %138 = vector.load %arg14[%c0_72, %c0_73, %c0_74] : memref<1x128x256xf32, #tpu.memory_space<vmem>>, vector<1x128x256xf32>
    %139 = vector.shape_cast %138 : vector<1x128x256xf32> to vector<128x256xf32>
    %140 = vector.shape_cast %137 : vector<128x256xf32> to vector<1x128x256xf32>
    tpu.vector_store %arg14[%c0_72, %c0_73, %c0_74], %140 {strides = array<i32>} : memref<1x128x256xf32, #tpu.memory_space<vmem>>, vector<1x128x256xf32>,
    return
  }
  func.func @transform_0(%arg0: i32) -> (i32, i32, i32) {
    %c0_i32 = arith.constant 0 : i32
    %c0_i32_0 = arith.constant 0 : i32
    %c0_i32_1 = arith.constant 0 : i32
    return %arg0, %c0_i32, %c0_i32_0 : i32, i32, i32
  }
  func.func @transform_1(%arg0: i32) -> (i32, i32, i32) {
    %c0_i32 = arith.constant 0 : i32
    %c0_i32_0 = arith.constant 0 : i32
    %c0_i32_1 = arith.constant 0 : i32
    %c0_i32_2 = arith.constant 0 : i32
    return %c0_i32, %c0_i32_0, %c0_i32_1 : i32, i32, i32
  }
  func.func @transform_2(%arg0: i32) -> (i32, i32, i32) {
    %c0_i32 = arith.constant 0 : i32
    %c0_i32_0 = arith.constant 0 : i32
    %c0_i32_1 = arith.constant 0 : i32
    %c0_i32_2 = arith.constant 0 : i32
    return %c0_i32, %c0_i32_0, %c0_i32_1 : i32, i32, i32
  }
  func.func @transform_3(%arg0: i32) -> (i32, i32) {
    %c0_i32 = arith.constant 0 : i32
    %c0_i32_0 = arith.constant 0 : i32
    %c0_i32_1 = arith.constant 0 : i32
    return %c0_i32, %c0_i32_0 : i32, i32
  }
  func.func @transform_4(%arg0: i32) -> (i32, i32) {
    %c0_i32 = arith.constant 0 : i32
    %c0_i32_0 = arith.constant 0 : i32
    %c0_i32_1 = arith.constant 0 : i32
    return %c0_i32, %c0_i32_0 : i32, i32
  }
  func.func @transform_5(%arg0: i32) -> (i32, i32) {
    %c0_i32 = arith.constant 0 : i32
    %c0_i32_0 = arith.constant 0 : i32
    %c0_i32_1 = arith.constant 0 : i32
    return %c0_i32, %c0_i32_0 : i32, i32
  }
  func.func @transform_6(%arg0: i32) -> (i32, i32) {
    %c0_i32 = arith.constant 0 : i32
    %c0_i32_0 = arith.constant 0 : i32
    %c0_i32_1 = arith.constant 0 : i32
    return %c0_i32, %c0_i32_0 : i32, i32
  }
  func.func @transform_7(%arg0: i32) -> (i32, i32) {
    %c0_i32 = arith.constant 0 : i32
    %c0_i32_0 = arith.constant 0 : i32
    %c0_i32_1 = arith.constant 0 : i32
    return %c0_i32, %c0_i32_0 : i32, i32
  }
  func.func @transform_8(%arg0: i32) -> (i32, i32) {
    %c0_i32 = arith.constant 0 : i32
    %c0_i32_0 = arith.constant 0 : i32
    %c0_i32_1 = arith.constant 0 : i32
    return %c0_i32, %c0_i32_0 : i32, i32
  }
  func.func @transform_9(%arg0: i32) -> (i32, i32) {
    %c0_i32 = arith.constant 0 : i32
    %c0_i32_0 = arith.constant 0 : i32
    %c0_i32_1 = arith.constant 0 : i32
    return %c0_i32, %c0_i32_0 : i32, i32
  }
  func.func @transform_10(%arg0: i32) -> (i32, i32) {
    %c0_i32 = arith.constant 0 : i32
    %c0_i32_0 = arith.constant 0 : i32
    %c0_i32_1 = arith.constant 0 : i32
    return %c0_i32, %c0_i32_0 : i32, i32
  }
  func.func @transform_11(%arg0: i32) -> (i32, i32) {
    %c0_i32 = arith.constant 0 : i32
    %c0_i32_0 = arith.constant 0 : i32
    %c0_i32_1 = arith.constant 0 : i32
    return %c0_i32, %c0_i32_0 : i32, i32
  }
  func.func @transform_12(%arg0: i32) -> (i32, i32) {
    %c0_i32 = arith.constant 0 : i32
    %c0_i32_0 = arith.constant 0 : i32
    %c0_i32_1 = arith.constant 0 : i32
    return %c0_i32, %c0_i32_0 : i32, i32
  }
  func.func @transform_13(%arg0: i32) -> (i32, i32, i32) {
    %c0_i32 = arith.constant 0 : i32
    %c0_i32_0 = arith.constant 0 : i32
    %c0_i32_1 = arith.constant 0 : i32
    return %arg0, %c0_i32, %c0_i32_0 : i32, i32, i32
  }
}

</mosaic_0001>

<llo_original>
// kernel: encoder_layer.1
$region0: #{encoder_layer.1}
  #allocation0 [shape = 'u32[]', space=smem, size = 0x4, offset = 0x4, fixed_abs, tag = 'smem constant byte address 0x4 - core index']
  #allocation1 [shape = 'u32[144,128]{1,0:T(1,128)}', space=vmem, size = 0x12000, scoped, tag = 'internal scratch']
  #allocation2 [shape = 'bf16[128,256]{1,0:T(8,128)(2,1)}', space=vmem, size = 0x10000, scoped, tag = 'scratch operand']
  #allocation3 [shape = 'bf16[128,256]{1,0:T(8,128)(2,1)}', space=vmem, size = 0x10000, scoped, tag = 'scratch operand']
  %s0 = inlined_call_operand.hbm [shape: f32[2,128,256], index: 0, kind: input, shape index: {}]
  %s1 = inlined_call_operand.hbm [shape: bf16[2,128,384], index: 1, kind: input, shape index: {}]
  %s2 = inlined_call_operand.vmem [shape: f32[2,1,384], index: 2, kind: input, shape index: {}]
  %s3 = inlined_call_operand.hbm [shape: bf16[256,256], index: 3, kind: input, shape index: {}]
  %s4 = inlined_call_operand.vmem [shape: f32[1,256], index: 4, kind: input, shape index: {}]
  %s5 = inlined_call_operand.vmem [shape: f32[1,256], index: 5, kind: input, shape index: {}]
  %s6 = inlined_call_operand.hbm [shape: f32[1,256], index: 6, kind: input, shape index: {}]
  %s7 = inlined_call_operand.hbm [shape: bf16[256,128], index: 7, kind: input, shape index: {}]
  %s8 = inlined_call_operand.hbm [shape: f32[1,128], index: 8, kind: input, shape index: {}]
  %s9 = inlined_call_operand.hbm [shape: bf16[128,256], index: 9, kind: input, shape index: {}]
  %s10 = inlined_call_operand.hbm [shape: f32[1,256], index: 10, kind: input, shape index: {}]
  %s11 = inlined_call_operand.vmem [shape: f32[1,256], index: 11, kind: input, shape index: {}]
  %s12 = inlined_call_operand.hbm [shape: f32[1,256], index: 12, kind: input, shape index: {}]
  %s13 = inlined_call_operand.hbm [shape: f32[2,128,256], index: 13, kind: output, shape index: {}]
  %s14 = sld [smem:[#allocation0]]
  $region121: #{encoder_layer.1} parent=0
    _
  %s16 = ssub.s32 1, %s14
  %s17 = scalar_select 0, %s16, %s14
  $region1: #{encoder_layer.1} parent=0
    #allocation4 [shape = 'u8[262144]{0}', space=vmem, size = 0x40000, scoped, tag = 'input window, operand 0']
    #allocation5 [shape = 's32[2]{0}', space=sflag, size = 0x8, scoped, tag = 'scoped memory for encoder_layer.1']
    #allocation6 [shape = 's32[2]{0}', space=sflag, size = 0x8, scoped, tag = 'scoped memory for encoder_layer.1']
    #allocation7 [shape = 'u8[196608]{0}', space=vmem, size = 0x30000, scoped, tag = 'input window, operand 1, single buffered']
    #allocation8 [shape = 's32[1]{0}', space=sflag, size = 0x4, scoped, tag = 'scoped memory for encoder_layer.1']
    #allocation9 [shape = 'u8[131072]{0}', space=vmem, size = 0x20000, scoped, tag = 'input window, operand 3, single buffered']
    #allocation10 [shape = 'u8[1024]{0}', space=vmem, size = 0x400, scoped, tag = 'input window, operand 6, single buffered']
    #allocation11 [shape = 's32[1]{0}', space=sflag, size = 0x4, scoped, tag = 'scoped memory for encoder_layer.1']
    #allocation12 [shape = 'u8[65536]{0}', space=vmem, size = 0x10000, scoped, tag = 'input window, operand 7, single buffered']
    #allocation13 [shape = 'u8[512]{0}', space=vmem, size = 0x400, scoped, tag = 'input window, operand 8, single buffered']
    #allocation14 [shape = 's32[1]{0}', space=sflag, size = 0x4, scoped, tag = 'scoped memory for encoder_layer.1']
    #allocation15 [shape = 'u8[65536]{0}', space=vmem, size = 0x10000, scoped, tag = 'input window, operand 9, single buffered']
    #allocation16 [shape = 'u8[1024]{0}', space=vmem, size = 0x400, scoped, tag = 'input window, operand 10, single buffered']
    #allocation17 [shape = 's32[1]{0}', space=sflag, size = 0x4, scoped, tag = 'scoped memory for encoder_layer.1']
    #allocation18 [shape = 'u8[1024]{0}', space=vmem, size = 0x400, scoped, tag = 'input window, operand 12, single buffered']
    #allocation19 [shape = 'u8[262144]{0}', space=vmem, size = 0x40000, scoped, tag = 'output window, operand 0']
    %18 = vsyncpa [#allocation5], 0
    %s19 = scalar_lea.sflag [#allocation5], 1
    %20 = vsyncpa %s19, 0
    %21 = vsyncpa [#allocation8], 0
    %22 = vsyncpa [#allocation11], 0
    %23 = vsyncpa [#allocation14], 0
    %24 = vsyncpa [#allocation17], 0
    %25 = vsyncpa [#allocation6], 0
    %s26 = scalar_lea.sflag [#allocation6], 1
    %27 = vsyncpa %s26, 0
    loop: start=0, step=1, limit=4
    $region2: #{encoder_layer.1} parent=1 // loop_pre_header
      _
    $region3: #{encoder_layer.1} parent=1 // loop_header
      %s29 = sphi 0, %s33
      %p30 = scmp.ge.s32.totalorder %s29, 4
      %s39 = sphi 0, %s41
      %s42 = sphi 0, %s39
      %s43 = sphi 0, %s42
      %s59 = sphi 0, %s43
      %s63 = sphi 0, %s63
      %s65 = sphi 0, %s63
      %s66 = sphi 0, %s65
      %s80 = sphi 0, %s66
      %s84 = sphi 0, %s84
      %s86 = sphi 0, %s84
      %s87 = sphi 0, %s86
      %s101 = sphi 0, %s87
      %s105 = sphi 0, %s105
      %s107 = sphi 0, %s105
      %s108 = sphi 0, %s107
      %s122 = sphi 0, %s108
      %s126 = sphi 0, %s126
      %s128 = sphi 0, %s126
      %s129 = sphi 0, %s128
      %s143 = sphi 0, %s129
      %s147 = sphi 0, %s147
      %s149 = sphi 0, %s147
      %s150 = sphi 0, %s149
      %s164 = sphi 0, %s150
      %s168 = sphi 0, %s168
      %s170 = sphi 0, %s168
      %s171 = sphi 0, %s170
      %s185 = sphi 0, %s171
      %s189 = sphi 0, %s189
      %s191 = sphi 0, %s189
      %s192 = sphi 0, %s191
      %s206 = sphi 0, %s192
      %s210 = sphi 0, %s210
      %s212 = sphi 0, %s210
      %s213 = sphi 0, %s212
      %s227 = sphi 0, %s213
      %s231 = sphi 0, %s231
      %s233 = sphi 0, %s231
      %s234 = sphi 0, %s233
      %s248 = sphi 0, %s234
      %s252 = sphi 0, %s252
      %s254 = sphi 0, %s252
      %s255 = sphi 0, %s254
      %s269 = sphi 0, %s255
      %s273 = sphi 0, %s273
      %s275 = sphi 0, %s273
      %s276 = sphi 0, %s275
      %s290 = sphi 0, %s276
      %s294 = sphi 0, %s294
      %s296 = sphi 0, %s294
      %s297 = sphi 0, %s296
      %s311 = sphi 0, %s297
      %s317 = sphi 0, %s319
      %s320 = sphi 0, %s317
      %s321 = sphi 0, %s320
      %s337 = sphi 0, %s321
    $region4: #{encoder_layer.1} parent=1 // loop_header_branch
      %32 = sbr.rel (%p30) target = $region8
    $region5: #{encoder_layer.1} parent=1 // loop_body
      %s34 = ssub.s32 %s29, 1
      %s35 = ssub.s32 %s29, 2
      %s36 = sadd.s32 %s29, 1
      %s37 = ssub.s32 %s29, %s36
      %p38 = scmp.eq.s32.totalorder %s37, 0
      %s40 = sadd.s32 %s39, 1
      %s41 = scalar_select %p38, %s39, %s40
      %p44 = pneg %p38
      %p45 = scmp.eq.s32.totalorder %s29, 1
      %p46 = por %p44, %p45
      %p47 = scmp.ne.s32.totalorder %s39, %s42
      %p48 = scmp.eq.s32.totalorder %s29, 0
      %p49 = por %p47, %p48
      %p50 = scmp.ne.s32.totalorder %s39, %s42
      %p51 = scmp.eq.s32.totalorder %s34, 1
      %p52 = por %p50, %p51
      %p53 = scmp.ne.s32.totalorder %s42, %s43
      %p54 = scmp.eq.s32.totalorder %s34, 0
      %p55 = por %p53, %p54
      %p56 = scmp.ne.s32.totalorder %s42, %s43
      %p57 = scmp.eq.s32.totalorder %s35, 1
      %p58 = por %p56, %p57
      %p60 = scmp.ne.s32.totalorder %s43, %s59
      %p61 = scmp.eq.s32.totalorder %s35, 0
      %p62 = por %p60, %p61
      %s64 = sadd.s32 %s63, 1
      %p67 = scmp.eq.s32.totalorder %s29, 1
      %p68 = scmp.ne.s32.totalorder %s63, %s65
      %p69 = scmp.eq.s32.totalorder %s29, 0
      %p70 = por %p68, %p69
      %p71 = scmp.ne.s32.totalorder %s63, %s65
      %p72 = scmp.eq.s32.totalorder %s34, 1
      %p73 = por %p71, %p72
      %p74 = scmp.ne.s32.totalorder %s65, %s66
      %p75 = scmp.eq.s32.totalorder %s34, 0
      %p76 = por %p74, %p75
      %p77 = scmp.ne.s32.totalorder %s65, %s66
      %p78 = scmp.eq.s32.totalorder %s35, 1
      %p79 = por %p77, %p78
      %p81 = scmp.ne.s32.totalorder %s66, %s80
      %p82 = scmp.eq.s32.totalorder %s35, 0
      %p83 = por %p81, %p82
      %s85 = sadd.s32 %s84, 1
      %p88 = scmp.eq.s32.totalorder %s29, 1
      %p89 = scmp.ne.s32.totalorder %s84, %s86
      %p90 = scmp.eq.s32.totalorder %s29, 0
      %p91 = por %p89, %p90
      %p92 = scmp.ne.s32.totalorder %s84, %s86
      %p93 = scmp.eq.s32.totalorder %s34, 1
      %p94 = por %p92, %p93
      %p95 = scmp.ne.s32.totalorder %s86, %s87
      %p96 = scmp.eq.s32.totalorder %s34, 0
      %p97 = por %p95, %p96
      %p98 = scmp.ne.s32.totalorder %s86, %s87
      %p99 = scmp.eq.s32.totalorder %s35, 1
      %p100 = por %p98, %p99
      %p102 = scmp.ne.s32.totalorder %s87, %s101
      %p103 = scmp.eq.s32.totalorder %s35, 0
      %p104 = por %p102, %p103
      %s106 = sadd.s32 %s105, 1
      %p109 = scmp.eq.s32.totalorder %s29, 1
      %p110 = scmp.ne.s32.totalorder %s105, %s107
      %p111 = scmp.eq.s32.totalorder %s29, 0
      %p112 = por %p110, %p111
      %p113 = scmp.ne.s32.totalorder %s105, %s107
      %p114 = scmp.eq.s32.totalorder %s34, 1
      %p115 = por %p113, %p114
      %p116 = scmp.ne.s32.totalorder %s107, %s108
      %p117 = scmp.eq.s32.totalorder %s34, 0
      %p118 = por %p116, %p117
      %p119 = scmp.ne.s32.totalorder %s107, %s108
      %p120 = scmp.eq.s32.totalorder %s35, 1
      %p121 = por %p119, %p120
      %p123 = scmp.ne.s32.totalorder %s108, %s122
      %p124 = scmp.eq.s32.totalorder %s35, 0
      %p125 = por %p123, %p124
      %s127 = sadd.s32 %s126, 1
      %p130 = scmp.eq.s32.totalorder %s29, 1
      %p131 = scmp.ne.s32.totalorder %s126, %s128
      %p132 = scmp.eq.s32.totalorder %s29, 0
      %p133 = por %p131, %p132
      %p134 = scmp.ne.s32.totalorder %s126, %s128
      %p135 = scmp.eq.s32.totalorder %s34, 1
      %p136 = por %p134, %p135
      %p137 = scmp.ne.s32.totalorder %s128, %s129
      %p138 = scmp.eq.s32.totalorder %s34, 0
      %p139 = por %p137, %p138
      %p140 = scmp.ne.s32.totalorder %s128, %s129
      %p141 = scmp.eq.s32.totalorder %s35, 1
      %p142 = por %p140, %p141
      %p144 = scmp.ne.s32.totalorder %s129, %s143
      %p145 = scmp.eq.s32.totalorder %s35, 0
      %p146 = por %p144, %p145
      %s148 = sadd.s32 %s147, 1
      %p151 = scmp.eq.s32.totalorder %s29, 1
      %p152 = scmp.ne.s32.totalorder %s147, %s149
      %p153 = scmp.eq.s32.totalorder %s29, 0
      %p154 = por %p152, %p153
      %p155 = scmp.ne.s32.totalorder %s147, %s149
      %p156 = scmp.eq.s32.totalorder %s34, 1
      %p157 = por %p155, %p156
      %p158 = scmp.ne.s32.totalorder %s149, %s150
      %p159 = scmp.eq.s32.totalorder %s34, 0
      %p160 = por %p158, %p159
      %p161 = scmp.ne.s32.totalorder %s149, %s150
      %p162 = scmp.eq.s32.totalorder %s35, 1
      %p163 = por %p161, %p162
      %p165 = scmp.ne.s32.totalorder %s150, %s164
      %p166 = scmp.eq.s32.totalorder %s35, 0
      %p167 = por %p165, %p166
      %s169 = sadd.s32 %s168, 1
      %p172 = scmp.eq.s32.totalorder %s29, 1
      %p173 = scmp.ne.s32.totalorder %s168, %s170
      %p174 = scmp.eq.s32.totalorder %s29, 0
      %p175 = por %p173, %p174
      %p176 = scmp.ne.s32.totalorder %s168, %s170
      %p177 = scmp.eq.s32.totalorder %s34, 1
      %p178 = por %p176, %p177
      %p179 = scmp.ne.s32.totalorder %s170, %s171
      %p180 = scmp.eq.s32.totalorder %s34, 0
      %p181 = por %p179, %p180
      %p182 = scmp.ne.s32.totalorder %s170, %s171
      %p183 = scmp.eq.s32.totalorder %s35, 1
      %p184 = por %p182, %p183
      %p186 = scmp.ne.s32.totalorder %s171, %s185
      %p187 = scmp.eq.s32.totalorder %s35, 0
      %p188 = por %p186, %p187
      %s190 = sadd.s32 %s189, 1
      %p193 = scmp.eq.s32.totalorder %s29, 1
      %p194 = scmp.ne.s32.totalorder %s189, %s191
      %p195 = scmp.eq.s32.totalorder %s29, 0
      %p196 = por %p194, %p195
      %p197 = scmp.ne.s32.totalorder %s189, %s191
      %p198 = scmp.eq.s32.totalorder %s34, 1
      %p199 = por %p197, %p198
      %p200 = scmp.ne.s32.totalorder %s191, %s192
      %p201 = scmp.eq.s32.totalorder %s34, 0
      %p202 = por %p200, %p201
      %p203 = scmp.ne.s32.totalorder %s191, %s192
      %p204 = scmp.eq.s32.totalorder %s35, 1
      %p205 = por %p203, %p204
      %p207 = scmp.ne.s32.totalorder %s192, %s206
      %p208 = scmp.eq.s32.totalorder %s35, 0
      %p209 = por %p207, %p208
      %s211 = sadd.s32 %s210, 1
      %p214 = scmp.eq.s32.totalorder %s29, 1
      %p215 = scmp.ne.s32.totalorder %s210, %s212
      %p216 = scmp.eq.s32.totalorder %s29, 0
      %p217 = por %p215, %p216
      %p218 = scmp.ne.s32.totalorder %s210, %s212
      %p219 = scmp.eq.s32.totalorder %s34, 1
      %p220 = por %p218, %p219
      %p221 = scmp.ne.s32.totalorder %s212, %s213
      %p222 = scmp.eq.s32.totalorder %s34, 0
      %p223 = por %p221, %p222
      %p224 = scmp.ne.s32.totalorder %s212, %s213
      %p225 = scmp.eq.s32.totalorder %s35, 1
      %p226 = por %p224, %p225
      %p228 = scmp.ne.s32.totalorder %s213, %s227
      %p229 = scmp.eq.s32.totalorder %s35, 0
      %p230 = por %p228, %p229
      %s232 = sadd.s32 %s231, 1
      %p235 = scmp.eq.s32.totalorder %s29, 1
      %p236 = scmp.ne.s32.totalorder %s231, %s233
      %p237 = scmp.eq.s32.totalorder %s29, 0
      %p238 = por %p236, %p237
      %p239 = scmp.ne.s32.totalorder %s231, %s233
      %p240 = scmp.eq.s32.totalorder %s34, 1
      %p241 = por %p239, %p240
      %p242 = scmp.ne.s32.totalorder %s233, %s234
      %p243 = scmp.eq.s32.totalorder %s34, 0
      %p244 = por %p242, %p243
      %p245 = scmp.ne.s32.totalorder %s233, %s234
      %p246 = scmp.eq.s32.totalorder %s35, 1
      %p247 = por %p245, %p246
      %p249 = scmp.ne.s32.totalorder %s234, %s248
      %p250 = scmp.eq.s32.totalorder %s35, 0
      %p251 = por %p249, %p250
      %s253 = sadd.s32 %s252, 1
      %p256 = scmp.eq.s32.totalorder %s29, 1
      %p257 = scmp.ne.s32.totalorder %s252, %s254
      %p258 = scmp.eq.s32.totalorder %s29, 0
      %p259 = por %p257, %p258
      %p260 = scmp.ne.s32.totalorder %s252, %s254
      %p261 = scmp.eq.s32.totalorder %s34, 1
      %p262 = por %p260, %p261
      %p263 = scmp.ne.s32.totalorder %s254, %s255
      %p264 = scmp.eq.s32.totalorder %s34, 0
      %p265 = por %p263, %p264
      %p266 = scmp.ne.s32.totalorder %s254, %s255
      %p267 = scmp.eq.s32.totalorder %s35, 1
      %p268 = por %p266, %p267
      %p270 = scmp.ne.s32.totalorder %s255, %s269
      %p271 = scmp.eq.s32.totalorder %s35, 0
      %p272 = por %p270, %p271
      %s274 = sadd.s32 %s273, 1
      %p277 = scmp.eq.s32.totalorder %s29, 1
      %p278 = scmp.ne.s32.totalorder %s273, %s275
      %p279 = scmp.eq.s32.totalorder %s29, 0
      %p280 = por %p278, %p279
      %p281 = scmp.ne.s32.totalorder %s273, %s275
      %p282 = scmp.eq.s32.totalorder %s34, 1
      %p283 = por %p281, %p282
      %p284 = scmp.ne.s32.totalorder %s275, %s276
      %p285 = scmp.eq.s32.totalorder %s34, 0
      %p286 = por %p284, %p285
      %p287 = scmp.ne.s32.totalorder %s275, %s276
      %p288 = scmp.eq.s32.totalorder %s35, 1
      %p289 = por %p287, %p288
      %p291 = scmp.ne.s32.totalorder %s276, %s290
      %p292 = scmp.eq.s32.totalorder %s35, 0
      %p293 = por %p291, %p292
      %s295 = sadd.s32 %s294, 1
      %p298 = scmp.eq.s32.totalorder %s29, 1
      %p299 = scmp.ne.s32.totalorder %s294, %s296
      %p300 = scmp.eq.s32.totalorder %s29, 0
      %p301 = por %p299, %p300
      %p302 = scmp.ne.s32.totalorder %s294, %s296
      %p303 = scmp.eq.s32.totalorder %s34, 1
      %p304 = por %p302, %p303
      %p305 = scmp.ne.s32.totalorder %s296, %s297
      %p306 = scmp.eq.s32.totalorder %s34, 0
      %p307 = por %p305, %p306
      %p308 = scmp.ne.s32.totalorder %s296, %s297
      %p309 = scmp.eq.s32.totalorder %s35, 1
      %p310 = por %p308, %p309
      %p312 = scmp.ne.s32.totalorder %s297, %s311
      %p313 = scmp.eq.s32.totalorder %s35, 0
      %p314 = por %p312, %p313
      %s315 = ssub.s32 %s29, %s36
      %p316 = scmp.eq.s32.totalorder %s315, 0
      %s318 = sadd.s32 %s317, 1
      %s319 = scalar_select %p316, %s317, %s318
      %p322 = pneg %p316
      %p323 = scmp.eq.s32.totalorder %s29, 1
      %p324 = por %p322, %p323
      %p325 = scmp.ne.s32.totalorder %s317, %s320
      %p326 = scmp.eq.s32.totalorder %s29, 0
      %p327 = por %p325, %p326
      %p328 = scmp.ne.s32.totalorder %s317, %s320
      %p329 = scmp.eq.s32.totalorder %s34, 1
      %p330 = por %p328, %p329
      %p331 = scmp.ne.s32.totalorder %s320, %s321
      %p332 = scmp.eq.s32.totalorder %s34, 0
      %p333 = por %p331, %p332
      %p334 = scmp.ne.s32.totalorder %s320, %s321
      %p335 = scmp.eq.s32.totalorder %s35, 1
      %p336 = por %p334, %p335
      %p338 = scmp.ne.s32.totalorder %s321, %s337
      %p339 = scmp.eq.s32.totalorder %s35, 0
      %p340 = por %p338, %p339
      %p341 = scmp.le.s32.totalorder 1, %s29
      %p342 = scmp.lt.s32.totalorder %s29, 3
      %p343 = pnand %p341, %p342
      %p344 = pneg %p343
      // Predicated region
      $region9: #{encoder_layer.1} parent=5 // pred_check
        _
      $region10: #{encoder_layer.1} parent=5 // pred_check_branch
        %346 = sbr.rel (%p343) target = $region12
      $region11: #{encoder_layer.1} parent=5 // pred_region
        %s347 = ssub.s32 %s29, 1
        // Predicated region
        $region13: #{encoder_layer.1} parent=11 // pred_check
          %p348 = pneg %p76
        $region14: #{encoder_layer.1} parent=11 // pred_check_branch
          %350 = sbr.rel (%p348) target = $region16
        $region15: #{encoder_layer.1} parent=11 // pred_region
          %s352 = ssub.s32 6144, 6144
          %353 = vsyncadd [#allocation8], %s352
          %s354 = sshll.u32 [#allocation7], 4
          %s355 = int_to_ptr.vmem [resolvable:$true] %s354
          %360 = dma.hbm_to_vmem [thread:$0]  %s1, 6144, %s355, [#allocation8], 192, 192, 12
        $region16: #{encoder_layer.1} parent=11 // pred_fallthru
          _
        // Predicated region
        $region17: #{encoder_layer.1} parent=11 // pred_check
          %p361 = pneg %p97
        $region18: #{encoder_layer.1} parent=11 // pred_check_branch
          %363 = sbr.rel (%p361) target = $region20
        $region19: #{encoder_layer.1} parent=11 // pred_region
          _
        $region20: #{encoder_layer.1} parent=11 // pred_fallthru
          _
        // Predicated region
        $region21: #{encoder_layer.1} parent=11 // pred_check
          %p364 = pneg %p118
        $region22: #{encoder_layer.1} parent=11 // pred_check_branch
          %366 = sbr.rel (%p364) target = $region24
        $region23: #{encoder_layer.1} parent=11 // pred_region
          %s368 = ssub.s32 4096, 4096
          %369 = vsyncadd [#allocation8], %s368
          %s370 = sshll.u32 [#allocation9], 4
          %s371 = int_to_ptr.vmem [resolvable:$true] %s370
          %376 = dma.hbm_to_vmem [thread:$0]  %s3, 4096, %s371, [#allocation8], 128, 128, 8
        $region24: #{encoder_layer.1} parent=11 // pred_fallthru
          _
        // Predicated region
        $region25: #{encoder_layer.1} parent=11 // pred_check
          %p377 = pneg %p139
        $region26: #{encoder_layer.1} parent=11 // pred_check_branch
          %379 = sbr.rel (%p377) target = $region28
        $region27: #{encoder_layer.1} parent=11 // pred_region
          _
        $region28: #{encoder_layer.1} parent=11 // pred_fallthru
          _
        // Predicated region
        $region29: #{encoder_layer.1} parent=11 // pred_check
          %p380 = pneg %p160
        $region30: #{encoder_layer.1} parent=11 // pred_check_branch
          %382 = sbr.rel (%p380) target = $region32
        $region31: #{encoder_layer.1} parent=11 // pred_region
          _
        $region32: #{encoder_layer.1} parent=11 // pred_fallthru
          _
        // Predicated region
        $region33: #{encoder_layer.1} parent=11 // pred_check
          %p383 = pneg %p181
        $region34: #{encoder_layer.1} parent=11 // pred_check_branch
          %385 = sbr.rel (%p383) target = $region36
        $region35: #{encoder_layer.1} parent=11 // pred_region
          %s387 = ssub.s32 32, 32
          %388 = vsyncadd [#allocation11], %s387
          %s390 = sshll.u32 [#allocation10], 4
          %s391 = int_to_ptr.vmem [resolvable:$true] %s390
          %393 = dma.hbm_to_vmem [thread:$0]  %s6, 32, %s391, [#allocation11]
        $region36: #{encoder_layer.1} parent=11 // pred_fallthru
          _
        // Predicated region
        $region37: #{encoder_layer.1} parent=11 // pred_check
          %p394 = pneg %p202
        $region38: #{encoder_layer.1} parent=11 // pred_check_branch
          %396 = sbr.rel (%p394) target = $region40
        $region39: #{encoder_layer.1} parent=11 // pred_region
          %s398 = ssub.s32 2048, 2048
          %399 = vsyncadd [#allocation11], %s398
          %s400 = sshll.u32 [#allocation12], 4
          %s401 = int_to_ptr.vmem [resolvable:$true] %s400
          %406 = dma.hbm_to_vmem [thread:$0]  %s7, 2048, %s401, [#allocation11], 64, 64, 4
        $region40: #{encoder_layer.1} parent=11 // pred_fallthru
          _
        // Predicated region
        $region41: #{encoder_layer.1} parent=11 // pred_check
          %p407 = pneg %p223
        $region42: #{encoder_layer.1} parent=11 // pred_check_branch
          %409 = sbr.rel (%p407) target = $region44
        $region43: #{encoder_layer.1} parent=11 // pred_region
          %s411 = ssub.s32 16, 16
          %412 = vsyncadd [#allocation14], %s411
          %s414 = sshll.u32 [#allocation13], 4
          %s415 = int_to_ptr.vmem [resolvable:$true] %s414
          %417 = dma.hbm_to_vmem [thread:$0]  %s8, 16, %s415, [#allocation14]
        $region44: #{encoder_layer.1} parent=11 // pred_fallthru
          _
        // Predicated region
        $region45: #{encoder_layer.1} parent=11 // pred_check
          %p418 = pneg %p244
        $region46: #{encoder_layer.1} parent=11 // pred_check_branch
          %420 = sbr.rel (%p418) target = $region48
        $region47: #{encoder_layer.1} parent=11 // pred_region
          %s422 = ssub.s32 2048, 2048
          %423 = vsyncadd [#allocation14], %s422
          %s424 = sshll.u32 [#allocation15], 4
          %s425 = int_to_ptr.vmem [resolvable:$true] %s424
          %430 = dma.hbm_to_vmem [thread:$0]  %s9, 2048, %s425, [#allocation14], 128, 128, 8
        $region48: #{encoder_layer.1} parent=11 // pred_fallthru
          _
        // Predicated region
        $region49: #{encoder_layer.1} parent=11 // pred_check
          %p431 = pneg %p265
        $region50: #{encoder_layer.1} parent=11 // pred_check_branch
          %433 = sbr.rel (%p431) target = $region52
        $region51: #{encoder_layer.1} parent=11 // pred_region
          %s435 = ssub.s32 32, 32
          %436 = vsyncadd [#allocation17], %s435
          %s438 = sshll.u32 [#allocation16], 4
          %s439 = int_to_ptr.vmem [resolvable:$true] %s438
          %441 = dma.hbm_to_vmem [thread:$0]  %s10, 32, %s439, [#allocation17]
        $region52: #{encoder_layer.1} parent=11 // pred_fallthru
          _
        // Predicated region
        $region53: #{encoder_layer.1} parent=11 // pred_check
          %p442 = pneg %p286
        $region54: #{encoder_layer.1} parent=11 // pred_check_branch
          %444 = sbr.rel (%p442) target = $region56
        $region55: #{encoder_layer.1} parent=11 // pred_region
          _
        $region56: #{encoder_layer.1} parent=11 // pred_fallthru
          _
        // Predicated region
        $region57: #{encoder_layer.1} parent=11 // pred_check
          %p445 = pneg %p307
        $region58: #{encoder_layer.1} parent=11 // pred_check_branch
          %447 = sbr.rel (%p445) target = $region60
        $region59: #{encoder_layer.1} parent=11 // pred_region
          %s449 = ssub.s32 32, 32
          %450 = vsyncadd [#allocation17], %s449
          %s452 = sshll.u32 [#allocation18], 4
          %s453 = int_to_ptr.vmem [resolvable:$true] %s452
          %455 = dma.hbm_to_vmem [thread:$0]  %s12, 32, %s453, [#allocation17]
        $region60: #{encoder_layer.1} parent=11 // pred_fallthru
          _
      $region12: #{encoder_layer.1} parent=5 // pred_fallthru
        _
      %p456 = scmp.lt.s32.totalorder %s29, 2
      // Predicated region
      $region61: #{encoder_layer.1} parent=5 // pred_check
        %p457 = pneg %p456
      $region62: #{encoder_layer.1} parent=5 // pred_check_branch
        %459 = sbr.rel (%p457) target = $region64
      $region63: #{encoder_layer.1} parent=5 // pred_region
        // Predicated region
        $region65: #{encoder_layer.1} parent=63 // pred_check
          %p460 = pneg %p49
        $region66: #{encoder_layer.1} parent=63 // pred_check_branch
          %462 = sbr.rel (%p460) target = $region68
        $region67: #{encoder_layer.1} parent=63 // pred_region
          %s463 = sand.u32 %s39, 1
          %s464 = scalar_lea.sflag [#allocation5], %s463
          %s465 = sand.u32 %s39, 1
          %s466 = smul.addr %s465, 256
          %s467 = scalar_lea.vmem [#allocation4], %s466
          %s469 = ssub.s32 4096, 4096
          %470 = vsyncadd %s464, %s469
          %s471 = smul.addr %s29, 32
          %s472 = smul.addr %s471, 128
          %s473 = scalar_lea.hbm %s0, %s472
          %s474 = sshll.u32 %s467, 4
          %s475 = int_to_ptr.vmem [resolvable:$true] %s474
          %480 = dma.hbm_to_vmem [thread:$0]  %s473, 4096, %s475, %s464, 256, 256, 16
        $region68: #{encoder_layer.1} parent=63 // pred_fallthru
          _
      $region64: #{encoder_layer.1} parent=5 // pred_fallthru
        _
      %p481 = scmp.le.s32.totalorder 1, %s29
      %p482 = scmp.lt.s32.totalorder %s29, 3
      %p483 = pnand %p481, %p482
      %p484 = pneg %p483
      // Predicated region
      $region69: #{encoder_layer.1} parent=5 // pred_check
        _
      $region70: #{encoder_layer.1} parent=5 // pred_check_branch
        %486 = sbr.rel (%p483) target = $region72
      $region71: #{encoder_layer.1} parent=5 // pred_region
        %s487 = ssub.s32 %s29, 1
        %s488 = sand.u32 %s42, 1
        %s489 = scalar_lea.sflag [#allocation5], %s488
        %s490 = sand.u32 %s42, 1
        %s491 = smul.addr %s490, 256
        %s492 = scalar_lea.vmem [#allocation4], %s491
        // Predicated region
        $region73: #{encoder_layer.1} parent=71 // pred_check
          %p493 = pneg %p55
        $region74: #{encoder_layer.1} parent=71 // pred_check_branch
          %495 = sbr.rel (%p493) target = $region76
        $region75: #{encoder_layer.1} parent=71 // pred_region
          %496 = dma.done %s489, 4096
        $region76: #{encoder_layer.1} parent=71 // pred_fallthru
          _
        // Predicated region
        $region77: #{encoder_layer.1} parent=71 // pred_check
          %p497 = pneg %p76
        $region78: #{encoder_layer.1} parent=71 // pred_check_branch
          %499 = sbr.rel (%p497) target = $region80
        $region79: #{encoder_layer.1} parent=71 // pred_region
          %500 = dma.done [#allocation8], 6144
        $region80: #{encoder_layer.1} parent=71 // pred_fallthru
          _
        // Predicated region
        $region81: #{encoder_layer.1} parent=71 // pred_check
          %p501 = pneg %p118
        $region82: #{encoder_layer.1} parent=71 // pred_check_branch
          %503 = sbr.rel (%p501) target = $region84
        $region83: #{encoder_layer.1} parent=71 // pred_region
          %504 = dma.done [#allocation8], 4096
        $region84: #{encoder_layer.1} parent=71 // pred_fallthru
          _
        // Predicated region
        $region85: #{encoder_layer.1} parent=71 // pred_check
          %p505 = pneg %p181
        $region86: #{encoder_layer.1} parent=71 // pred_check_branch
          %507 = sbr.rel (%p505) target = $region88
        $region87: #{encoder_layer.1} parent=71 // pred_region
          %508 = dma.done [#allocation11], 32
        $region88: #{encoder_layer.1} parent=71 // pred_fallthru
          _
        // Predicated region
        $region89: #{encoder_layer.1} parent=71 // pred_check
          %p509 = pneg %p202
        $region90: #{encoder_layer.1} parent=71 // pred_check_branch
          %511 = sbr.rel (%p509) target = $region92
        $region91: #{encoder_layer.1} parent=71 // pred_region
          %512 = dma.done [#allocation11], 2048
        $region92: #{encoder_layer.1} parent=71 // pred_fallthru
          _
        // Predicated region
        $region93: #{encoder_layer.1} parent=71 // pred_check
          %p513 = pneg %p223
        $region94: #{encoder_layer.1} parent=71 // pred_check_branch
          %515 = sbr.rel (%p513) target = $region96
        $region95: #{encoder_layer.1} parent=71 // pred_region
          %516 = dma.done [#allocation14], 16
        $region96: #{encoder_layer.1} parent=71 // pred_fallthru
          _
        // Predicated region
        $region97: #{encoder_layer.1} parent=71 // pred_check
          %p517 = pneg %p244
        $region98: #{encoder_layer.1} parent=71 // pred_check_branch
          %519 = sbr.rel (%p517) target = $region100
        $region99: #{encoder_layer.1} parent=71 // pred_region
          %520 = dma.done [#allocation14], 2048
        $region100: #{encoder_layer.1} parent=71 // pred_fallthru
          _
        // Predicated region
        $region101: #{encoder_layer.1} parent=71 // pred_check
          %p521 = pneg %p265
        $region102: #{encoder_layer.1} parent=71 // pred_check_branch
          %523 = sbr.rel (%p521) target = $region104
        $region103: #{encoder_layer.1} parent=71 // pred_region
          %524 = dma.done [#allocation17], 32
        $region104: #{encoder_layer.1} parent=71 // pred_fallthru
          _
        // Predicated region
        $region105: #{encoder_layer.1} parent=71 // pred_check
          %p525 = pneg %p307
        $region106: #{encoder_layer.1} parent=71 // pred_check_branch
          %527 = sbr.rel (%p525) target = $region108
        $region107: #{encoder_layer.1} parent=71 // pred_region
          %528 = dma.done [#allocation17], 32
        $region108: #{encoder_layer.1} parent=71 // pred_fallthru
          _
        %s529 = sand.u32 %s42, 1
        %s530 = scalar_lea.sflag [#allocation5], %s529
        %s531 = sand.u32 %s42, 1
        %s532 = smul.addr %s531, 256
        %s533 = scalar_lea.vmem [#allocation4], %s532
        %p534 = pneg %p55
        %p535 = pneg %p52
        %p536 = pneg %p76
        %p537 = pneg %p73
        %p538 = pneg %p97
        %p539 = pneg %p94
        %p540 = pneg %p118
        %p541 = pneg %p115
        %p542 = pneg %p139
        %p543 = pneg %p136
        %p544 = pneg %p160
        %p545 = pneg %p157
        %p546 = pneg %p181
        %p547 = pneg %p178
        %p548 = pneg %p202
        %p549 = pneg %p199
        %p550 = pneg %p223
        %p551 = pneg %p220
        %p552 = pneg %p244
        %p553 = pneg %p241
        %p554 = pneg %p265
        %p555 = pneg %p262
        %p556 = pneg %p286
        %p557 = pneg %p283
        %p558 = pneg %p307
        %p559 = pneg %p304
        %p560 = pneg %p333
        %p561 = pneg %p330
        %s562 = sand.u32 %s320, 1
        %s563 = scalar_lea.sflag [#allocation6], %s562
        %s564 = sand.u32 %s320, 1
        %s565 = smul.addr %s564, 256
        %s566 = scalar_lea.vmem [#allocation19], %s565
        %v568 = vld [vmem:[%s492] sm:$0xff]
        %v569 = vld [vmem:[%s492 + $0x8] sm:$0xff]
        %v570 = vld [vmem:[%s492 + $0x10] sm:$0xff]
        %v571 = vld [vmem:[%s492 + $0x18] sm:$0xff]
        %v572 = vld [vmem:[%s492 + $0x20] sm:$0xff]
        %v573 = vld [vmem:[%s492 + $0x28] sm:$0xff]
        %v574 = vld [vmem:[%s492 + $0x30] sm:$0xff]
        %v575 = vld [vmem:[%s492 + $0x38] sm:$0xff]
        %v576 = vld [vmem:[%s492 + $0x40] sm:$0xff]
        %v577 = vld [vmem:[%s492 + $0x48] sm:$0xff]
        %v578 = vld [vmem:[%s492 + $0x50] sm:$0xff]
        %v579 = vld [vmem:[%s492 + $0x58] sm:$0xff]
        %v580 = vld [vmem:[%s492 + $0x60] sm:$0xff]
        %v581 = vld [vmem:[%s492 + $0x68] sm:$0xff]
        %v582 = vld [vmem:[%s492 + $0x70] sm:$0xff]
        %v583 = vld [vmem:[%s492 + $0x78] sm:$0xff]
        %v584 = vld [vmem:[%s492 + $0x80] sm:$0xff]
        %v585 = vld [vmem:[%s492 + $0x88] sm:$0xff]
        %v586 = vld [vmem:[%s492 + $0x90] sm:$0xff]
        %v587 = vld [vmem:[%s492 + $0x98] sm:$0xff]
        %v588 = vld [vmem:[%s492 + $0xa0] sm:$0xff]
        %v589 = vld [vmem:[%s492 + $0xa8] sm:$0xff]
        %v590 = vld [vmem:[%s492 + $0xb0] sm:$0xff]
        %v591 = vld [vmem:[%s492 + $0xb8] sm:$0xff]
        %v592 = vld [vmem:[%s492 + $0xc0] sm:$0xff]
        %v593 = vld [vmem:[%s492 + $0xc8] sm:$0xff]
        %v594 = vld [vmem:[%s492 + $0xd0] sm:$0xff]
        %v595 = vld [vmem:[%s492 + $0xd8] sm:$0xff]
        %v596 = vld [vmem:[%s492 + $0xe0] sm:$0xff]
        %v597 = vld [vmem:[%s492 + $0xe8] sm:$0xff]
        %v598 = vld [vmem:[%s492 + $0xf0] sm:$0xff]
        %v599 = vld [vmem:[%s492 + $0xf8] sm:$0xff]
        %v600 = vpack.c.bf16 %v570, %v568
        %v601 = vpack.c.bf16 %v571, %v569
        %v602 = vpack.c.bf16 %v574, %v572
        %v603 = vpack.c.bf16 %v575, %v573
        %v604 = vpack.c.bf16 %v578, %v576
        %v605 = vpack.c.bf16 %v579, %v577
        %v606 = vpack.c.bf16 %v582, %v580
        %v607 = vpack.c.bf16 %v583, %v581
        %v608 = vpack.c.bf16 %v586, %v584
        %v609 = vpack.c.bf16 %v587, %v585
        %v610 = vpack.c.bf16 %v590, %v588
        %v611 = vpack.c.bf16 %v591, %v589
        %v612 = vpack.c.bf16 %v594, %v592
        %v613 = vpack.c.bf16 %v595, %v593
        %v614 = vpack.c.bf16 %v598, %v596
        %v615 = vpack.c.bf16 %v599, %v597
        %v632 = vunpack.c.l.b16 %v600
        %v633 = vunpack.c.l.b16 %v601
        %v634 = vunpack.c.h.b16 %v600
        %v635 = vunpack.c.h.b16 %v601
        %v636 = vunpack.c.l.b16 %v602
        %v637 = vunpack.c.l.b16 %v603
        %v638 = vunpack.c.h.b16 %v602
        %v639 = vunpack.c.h.b16 %v603
        %v640 = vunpack.c.l.b16 %v604
        %v641 = vunpack.c.l.b16 %v605
        %v642 = vunpack.c.h.b16 %v604
        %v643 = vunpack.c.h.b16 %v605
        %v644 = vunpack.c.l.b16 %v606
        %v645 = vunpack.c.l.b16 %v607
        %v646 = vunpack.c.h.b16 %v606
        %v647 = vunpack.c.h.b16 %v607
        %v648 = vunpack.c.l.b16 %v608
        %v649 = vunpack.c.l.b16 %v609
        %v650 = vunpack.c.h.b16 %v608
        %v651 = vunpack.c.h.b16 %v609
        %v652 = vunpack.c.l.b16 %v610
        %v653 = vunpack.c.l.b16 %v611
        %v654 = vunpack.c.h.b16 %v610
        %v655 = vunpack.c.h.b16 %v611
        %v656 = vunpack.c.l.b16 %v612
        %v657 = vunpack.c.l.b16 %v613
        %v658 = vunpack.c.h.b16 %v612
        %v659 = vunpack.c.h.b16 %v613
        %v660 = vunpack.c.l.b16 %v614
        %v661 = vunpack.c.l.b16 %v615
        %v662 = vunpack.c.h.b16 %v614
        %v663 = vunpack.c.h.b16 %v615
        %v664 = vpack.c.b16 %v633, %v632
        %v665 = vpack.c.b16 %v635, %v634
        %v666 = vpack.c.b16 %v637, %v636
        %v667 = vpack.c.b16 %v639, %v638
        %v668 = vpack.c.b16 %v641, %v640
        %v669 = vpack.c.b16 %v643, %v642
        %v670 = vpack.c.b16 %v645, %v644
        %v671 = vpack.c.b16 %v647, %v646
        %v672 = vpack.c.b16 %v649, %v648
        %v673 = vpack.c.b16 %v651, %v650
        %v674 = vpack.c.b16 %v653, %v652
        %v675 = vpack.c.b16 %v655, %v654
        %v676 = vpack.c.b16 %v657, %v656
        %v677 = vpack.c.b16 %v659, %v658
        %v678 = vpack.c.b16 %v661, %v660
        %v679 = vpack.c.b16 %v663, %v662
        %696 = vst [vmem:[#allocation2] sm:$0xff] %v664
        %697 = vst [vmem:[#allocation2 + $0x8] sm:$0xff] %v665
        %698 = vst [vmem:[#allocation2 + $0x10] sm:$0xff] %v666
        %699 = vst [vmem:[#allocation2 + $0x18] sm:$0xff] %v667
        %700 = vst [vmem:[#allocation2 + $0x20] sm:$0xff] %v668
        %701 = vst [vmem:[#allocation2 + $0x28] sm:$0xff] %v669
        %702 = vst [vmem:[#allocation2 + $0x30] sm:$0xff] %v670
        %703 = vst [vmem:[#allocation2 + $0x38] sm:$0xff] %v671
        %704 = vst [vmem:[#allocation2 + $0x40] sm:$0xff] %v672
        %705 = vst [vmem:[#allocation2 + $0x48] sm:$0xff] %v673
        %706 = vst [vmem:[#allocation2 + $0x50] sm:$0xff] %v674
        %707 = vst [vmem:[#allocation2 + $0x58] sm:$0xff] %v675
        %708 = vst [vmem:[#allocation2 + $0x60] sm:$0xff] %v676
        %709 = vst [vmem:[#allocation2 + $0x68] sm:$0xff] %v677
        %710 = vst [vmem:[#allocation2 + $0x70] sm:$0xff] %v678
        %711 = vst [vmem:[#allocation2 + $0x78] sm:$0xff] %v679
        %v712 = vld [vmem:[#allocation2] sm:$0xf]
        %v713 = vld [vmem:[#allocation2 + $0x8] sm:$0xf]
        %v714 = vld [vmem:[#allocation2 + $0x10] sm:$0xf]
        %v715 = vld [vmem:[#allocation2 + $0x18] sm:$0xf]
        %v716 = vld [vmem:[#allocation2 + $0x20] sm:$0xf]
        %v717 = vld [vmem:[#allocation2 + $0x28] sm:$0xf]
        %v718 = vld [vmem:[#allocation2 + $0x30] sm:$0xf]
        %v719 = vld [vmem:[#allocation2 + $0x38] sm:$0xf]
        %v720 = vld [vmem:[#allocation2 + $0x40] sm:$0xf]
        %v721 = vld [vmem:[#allocation2 + $0x48] sm:$0xf]
        %v722 = vld [vmem:[#allocation2 + $0x50] sm:$0xf]
        %v723 = vld [vmem:[#allocation2 + $0x58] sm:$0xf]
        %v724 = vld [vmem:[#allocation2 + $0x60] sm:$0xf]
        %v725 = vld [vmem:[#allocation2 + $0x68] sm:$0xf]
        %v726 = vld [vmem:[#allocation2 + $0x70] sm:$0xf]
        %v727 = vld [vmem:[#allocation2 + $0x78] sm:$0xf]
        %v728 = vld [vmem:[#allocation7] sm:$0xff]
        %v729 = vld [vmem:[#allocation7 + $0x8] sm:$0xf]
        %v730 = vld [vmem:[#allocation7 + $0xc] sm:$0xff]
        %v731 = vld [vmem:[#allocation7 + $0x14] sm:$0xf]
        %v732 = vld [vmem:[#allocation7 + $0x18] sm:$0xff]
        %v733 = vld [vmem:[#allocation7 + $0x20] sm:$0xf]
        %v734 = vld [vmem:[#allocation7 + $0x24] sm:$0xff]
        %v735 = vld [vmem:[#allocation7 + $0x2c] sm:$0xf]
        %v736 = vld [vmem:[#allocation7 + $0x30] sm:$0xff]
        %v737 = vld [vmem:[#allocation7 + $0x38] sm:$0xf]
        %v738 = vld [vmem:[#allocation7 + $0x3c] sm:$0xff]
        %v739 = vld [vmem:[#allocation7 + $0x44] sm:$0xf]
        %v740 = vld [vmem:[#allocation7 + $0x48] sm:$0xff]
        %v741 = vld [vmem:[#allocation7 + $0x50] sm:$0xf]
        %v742 = vld [vmem:[#allocation7 + $0x54] sm:$0xff]
        %v743 = vld [vmem:[#allocation7 + $0x5c] sm:$0xf]
        %v744 = vld [vmem:[#allocation7 + $0x60] sm:$0xff]
        %v745 = vld [vmem:[#allocation7 + $0x68] sm:$0xf]
        %v746 = vld [vmem:[#allocation7 + $0x6c] sm:$0xff]
        %v747 = vld [vmem:[#allocation7 + $0x74] sm:$0xf]
        %v748 = vld [vmem:[#allocation7 + $0x78] sm:$0xff]
        %v749 = vld [vmem:[#allocation7 + $0x80] sm:$0xf]
        %v750 = vld [vmem:[#allocation7 + $0x84] sm:$0xff]
        %v751 = vld [vmem:[#allocation7 + $0x8c] sm:$0xf]
        %v752 = vld [vmem:[#allocation7 + $0x90] sm:$0xff]
        %v753 = vld [vmem:[#allocation7 + $0x98] sm:$0xf]
        %v754 = vld [vmem:[#allocation7 + $0x9c] sm:$0xff]
        %v755 = vld [vmem:[#allocation7 + $0xa4] sm:$0xf]
        %v756 = vld [vmem:[#allocation7 + $0xa8] sm:$0xff]
        %v757 = vld [vmem:[#allocation7 + $0xb0] sm:$0xf]
        %v758 = vld [vmem:[#allocation7 + $0xb4] sm:$0xff]
        %v759 = vld [vmem:[#allocation7 + $0xbc] sm:$0xf]
        %v760 = vld [vmem:[%s2] sm:$0x7]
        %v762 = vlaneseq
        %v763 = vshrl.u32 %v762, 7
        %v764 = vsub.s32 0, %v763
        %v765 = vrot.slane %v760, %v764
        %v766 = vlaneseq
        %v767 = vshrl.u32 %v766, 7
        %v768 = vsub.s32 1, %v767
        %v769 = vrot.slane %v760, %v768
        %v770 = vlaneseq
        %v771 = vshrl.u32 %v770, 7
        %v772 = vsub.s32 2, %v771
        %v773 = vrot.slane %v760, %v772
        %v793 = vunpack.c.l.b16 %v712
        %v794 = vunpack.c.l.b16 %v713
        %v795 = vunpack.c.l.b16 %v714
        %v796 = vunpack.c.l.b16 %v715
        %v797 = vunpack.c.l.b16 %v716
        %v798 = vunpack.c.l.b16 %v717
        %v799 = vunpack.c.l.b16 %v718
        %v800 = vunpack.c.l.b16 %v719
        %v801 = vunpack.c.l.b16 %v720
        %v802 = vunpack.c.l.b16 %v721
        %v803 = vunpack.c.l.b16 %v722
        %v804 = vunpack.c.l.b16 %v723
        %v805 = vunpack.c.l.b16 %v724
        %v806 = vunpack.c.l.b16 %v725
        %v807 = vunpack.c.l.b16 %v726
        %v808 = vunpack.c.l.b16 %v727
        %v809 = vpack.c.b16 %v794, %v793
        %v810 = vpack.c.b16 %v796, %v795
        %v811 = vpack.c.b16 %v798, %v797
        %v812 = vpack.c.b16 %v800, %v799
        %v813 = vpack.c.b16 %v802, %v801
        %v814 = vpack.c.b16 %v804, %v803
        %v815 = vpack.c.b16 %v806, %v805
        %v816 = vpack.c.b16 %v808, %v807
        %v857 = vunpack.c.l.b16 %v728
        %v858 = vunpack.c.h.b16 %v728
        %v859 = vunpack.c.l.b16 %v729
        %v860 = vunpack.c.l.b16 %v730
        %v861 = vunpack.c.h.b16 %v730
        %v862 = vunpack.c.l.b16 %v731
        %v863 = vunpack.c.l.b16 %v732
        %v864 = vunpack.c.h.b16 %v732
        %v865 = vunpack.c.l.b16 %v733
        %v866 = vunpack.c.l.b16 %v734
        %v867 = vunpack.c.h.b16 %v734
        %v868 = vunpack.c.l.b16 %v735
        %v869 = vunpack.c.l.b16 %v736
        %v870 = vunpack.c.h.b16 %v736
        %v871 = vunpack.c.l.b16 %v737
        %v872 = vunpack.c.l.b16 %v738
        %v873 = vunpack.c.h.b16 %v738
        %v874 = vunpack.c.l.b16 %v739
        %v875 = vunpack.c.l.b16 %v740
        %v876 = vunpack.c.h.b16 %v740
        %v877 = vunpack.c.l.b16 %v741
        %v878 = vunpack.c.l.b16 %v742
        %v879 = vunpack.c.h.b16 %v742
        %v880 = vunpack.c.l.b16 %v743
        %v881 = vunpack.c.l.b16 %v744
        %v882 = vunpack.c.h.b16 %v744
        %v883 = vunpack.c.l.b16 %v745
        %v884 = vunpack.c.l.b16 %v746
        %v885 = vunpack.c.h.b16 %v746
        %v886 = vunpack.c.l.b16 %v747
        %v887 = vunpack.c.l.b16 %v748
        %v888 = vunpack.c.h.b16 %v748
        %v889 = vunpack.c.l.b16 %v749
        %v890 = vunpack.c.l.b16 %v750
        %v891 = vunpack.c.h.b16 %v750
        %v892 = vunpack.c.l.b16 %v751
        %v893 = vunpack.c.l.b16 %v752
        %v894 = vunpack.c.h.b16 %v752
        %v895 = vunpack.c.l.b16 %v753
        %v896 = vunpack.c.l.b16 %v754
        %v897 = vunpack.c.h.b16 %v754
        %v898 = vunpack.c.l.b16 %v755
        %v899 = vunpack.c.l.b16 %v756
        %v900 = vunpack.c.h.b16 %v756
        %v901 = vunpack.c.l.b16 %v757
        %v902 = vunpack.c.l.b16 %v758
        %v903 = vunpack.c.h.b16 %v758
        %v904 = vunpack.c.l.b16 %v759
        %v905 = vpack.c.b16 %v860, %v857
        %v906 = vpack.c.b16 %v861, %v858
        %v907 = vpack.c.b16 %v862, %v859
        %v908 = vpack.c.b16 %v866, %v863
        %v909 = vpack.c.b16 %v867, %v864
        %v910 = vpack.c.b16 %v868, %v865
        %v911 = vpack.c.b16 %v872, %v869
        %v912 = vpack.c.b16 %v873, %v870
        %v913 = vpack.c.b16 %v874, %v871
        %v914 = vpack.c.b16 %v878, %v875
        %v915 = vpack.c.b16 %v879, %v876
        %v916 = vpack.c.b16 %v880, %v877
        %v917 = vpack.c.b16 %v884, %v881
        %v918 = vpack.c.b16 %v885, %v882
        %v919 = vpack.c.b16 %v886, %v883
        %v920 = vpack.c.b16 %v890, %v887
        %v921 = vpack.c.b16 %v891, %v888
        %v922 = vpack.c.b16 %v892, %v889
        %v923 = vpack.c.b16 %v896, %v893
        %v924 = vpack.c.b16 %v897, %v894
        %v925 = vpack.c.b16 %v898, %v895
        %v926 = vpack.c.b16 %v902, %v899
        %v927 = vpack.c.b16 %v903, %v900
        %v928 = vpack.c.b16 %v904, %v901
        %953 = vmatprep.subr.bf16.mxu0 %v927
        %954 = vmatpush1.bf16.msra.mxu0 %v926
        %955 = vmatprep.subr.bf16.mxu0 %v924
        %956 = vmatpush1.bf16.msra.mxu0 %v923
        %957 = vmatprep.subr.bf16.mxu0 %v921
        %958 = vmatpush1.bf16.msra.mxu0 %v920
        %959 = vmatprep.subr.bf16.mxu0 %v918
        %960 = vmatpush1.bf16.msra.mxu0 %v917
        %961 = vmatprep.subr.bf16.mxu0 %v915
        %962 = vmatpush1.bf16.msra.mxu0 %v914
        %963 = vmatprep.subr.bf16.mxu0 %v912
        %964 = vmatpush1.bf16.msra.mxu0 %v911
        %965 = vmatprep.subr.bf16.mxu0 %v909
        %966 = vmatpush1.bf16.msra.mxu0 %v908
        %967 = vmatprep.subr.bf16.mxu0 %v906
        %968 = vmatpush1.bf16.msra.mxu0 %v905
        %969 = vmatprep.subr.bf16.mxu0 0
        %970 = vmatpush2.bf16.msra.mxu0 0
        %971 = vmatprep.subr.bf16.mxu0 0
        %972 = vmatpush2.bf16.msra.mxu0 0
        %973 = vmatprep.subr.bf16.mxu0 0
        %974 = vmatpush2.bf16.msra.mxu0 0
        %975 = vmatprep.subr.bf16.mxu0 0
        %976 = vmatpush2.bf16.msra.mxu0 0
        %977 = vmatprep.subr.bf16.mxu0 0
        %978 = vmatpush2.bf16.msra.mxu0 0
        %979 = vmatprep.subr.bf16.mxu0 0
        %980 = vmatpush2.bf16.msra.mxu0 0
        %981 = vmatprep.subr.bf16.mxu0 0
        %982 = vmatpush2.bf16.msra.mxu0 0
        %983 = vmatprep.subr.bf16.mxu0 0
        %984 = vmatpush2.bf16.msra.mxu0 0
        %985 = vmatprep.mubr.bf16.mxu0 0
        %986 = vmatmul.mubr.bf16.gmra.mxu0 %v809
        %v987 = vpop.f32.mrf.mxu0
        %v988 = vadd.f32 %v765, %v987
        %v989 = vpop.f32.mrf.mxu0
        %v990 = vadd.f32 %v769, %v989
        %v991 = vpop.f32.mrf.mxu0
        %v992 = vadd.f32 %v765, %v991
        %v993 = vpop.f32.mrf.mxu0
        %v994 = vadd.f32 %v769, %v993
        %995 = vmatprep.mubr.bf16.mxu0 0
        %996 = vmatmul.mubr.bf16.gmra.mxu0 %v810
        %v997 = vpop.f32.mrf.mxu0
        %v998 = vadd.f32 %v765, %v997
        %v999 = vpop.f32.mrf.mxu0
        %v1000 = vadd.f32 %v769, %v999
        %v1001 = vpop.f32.mrf.mxu0
        %v1002 = vadd.f32 %v765, %v1001
        %v1003 = vpop.f32.mrf.mxu0
        %v1004 = vadd.f32 %v769, %v1003
        %1005 = vmatprep.mubr.bf16.mxu0 0
        %1006 = vmatmul.mubr.bf16.gmra.mxu0 %v811
        %v1007 = vpop.f32.mrf.mxu0
        %v1008 = vadd.f32 %v765, %v1007
        %v1009 = vpop.f32.mrf.mxu0
        %v1010 = vadd.f32 %v769, %v1009
        %v1011 = vpop.f32.mrf.mxu0
        %v1012 = vadd.f32 %v765, %v1011
        %v1013 = vpop.f32.mrf.mxu0
        %v1014 = vadd.f32 %v769, %v1013
        %1015 = vmatprep.mubr.bf16.mxu0 0
        %1016 = vmatmul.mubr.bf16.gmra.mxu0 %v812
        %v1017 = vpop.f32.mrf.mxu0
        %v1018 = vadd.f32 %v765, %v1017
        %v1019 = vpop.f32.mrf.mxu0
        %v1020 = vadd.f32 %v769, %v1019
        %v1021 = vpop.f32.mrf.mxu0
        %v1022 = vadd.f32 %v765, %v1021
        %v1023 = vpop.f32.mrf.mxu0
        %v1024 = vadd.f32 %v769, %v1023
        %1025 = vmatprep.mubr.bf16.mxu0 0
        %1026 = vmatmul.mubr.bf16.gmra.mxu0 %v813
        %v1027 = vpop.f32.mrf.mxu0
        %v1028 = vadd.f32 %v765, %v1027
        %v1029 = vpop.f32.mrf.mxu0
        %v1030 = vadd.f32 %v769, %v1029
        %v1031 = vpop.f32.mrf.mxu0
        %v1032 = vadd.f32 %v765, %v1031
        %v1033 = vpop.f32.mrf.mxu0
        %v1034 = vadd.f32 %v769, %v1033
        %1035 = vmatprep.mubr.bf16.mxu0 0
        %1036 = vmatmul.mubr.bf16.gmra.mxu0 %v814
        %v1037 = vpop.f32.mrf.mxu0
        %v1038 = vadd.f32 %v765, %v1037
        %v1039 = vpop.f32.mrf.mxu0
        %v1040 = vadd.f32 %v769, %v1039
        %v1041 = vpop.f32.mrf.mxu0
        %v1042 = vadd.f32 %v765, %v1041
        %v1043 = vpop.f32.mrf.mxu0
        %v1044 = vadd.f32 %v769, %v1043
        %1045 = vmatprep.mubr.bf16.mxu0 0
        %1046 = vmatmul.mubr.bf16.gmra.mxu0 %v815
        %v1047 = vpop.f32.mrf.mxu0
        %v1048 = vadd.f32 %v765, %v1047
        %v1049 = vpop.f32.mrf.mxu0
        %v1050 = vadd.f32 %v769, %v1049
        %v1051 = vpop.f32.mrf.mxu0
        %v1052 = vadd.f32 %v765, %v1051
        %v1053 = vpop.f32.mrf.mxu0
        %v1054 = vadd.f32 %v769, %v1053
        %1055 = vmatprep.mubr.bf16.mxu0 0
        %1056 = vmatmul.mubr.bf16.gmra.mxu0 %v816
        %v1057 = vpop.f32.mrf.mxu0
        %v1058 = vadd.f32 %v765, %v1057
        %v1059 = vpop.f32.mrf.mxu0
        %v1060 = vadd.f32 %v769, %v1059
        %v1061 = vpop.f32.mrf.mxu0
        %v1062 = vadd.f32 %v765, %v1061
        %v1063 = vpop.f32.mrf.mxu0
        %v1064 = vadd.f32 %v769, %v1063
        %1065 = vdwg.mxu0
        %1066 = vmatprep.subr.bf16.mxu0 0
        %1067 = vmatpush1.bf16.msra.mxu0 %v928
        %1068 = vmatprep.subr.bf16.mxu0 0
        %1069 = vmatpush1.bf16.msra.mxu0 %v925
        %1070 = vmatprep.subr.bf16.mxu0 0
        %1071 = vmatpush1.bf16.msra.mxu0 %v922
        %1072 = vmatprep.subr.bf16.mxu0 0
        %1073 = vmatpush1.bf16.msra.mxu0 %v919
        %1074 = vmatprep.subr.bf16.mxu0 0
        %1075 = vmatpush1.bf16.msra.mxu0 %v916
        %1076 = vmatprep.subr.bf16.mxu0 0
        %1077 = vmatpush1.bf16.msra.mxu0 %v913
        %1078 = vmatprep.subr.bf16.mxu0 0
        %1079 = vmatpush1.bf16.msra.mxu0 %v910
        %1080 = vmatprep.subr.bf16.mxu0 0
        %1081 = vmatpush1.bf16.msra.mxu0 %v907
        %1082 = vmatprep.subr.bf16.mxu0 0
        %1083 = vmatpush2.bf16.msra.mxu0 0
        %1084 = vmatprep.subr.bf16.mxu0 0
        %1085 = vmatpush2.bf16.msra.mxu0 0
        %1086 = vmatprep.subr.bf16.mxu0 0
        %1087 = vmatpush2.bf16.msra.mxu0 0
        %1088 = vmatprep.subr.bf16.mxu0 0
        %1089 = vmatpush2.bf16.msra.mxu0 0
        %1090 = vmatprep.subr.bf16.mxu0 0
        %1091 = vmatpush2.bf16.msra.mxu0 0
        %1092 = vmatprep.subr.bf16.mxu0 0
        %1093 = vmatpush2.bf16.msra.mxu0 0
        %1094 = vmatprep.subr.bf16.mxu0 0
        %1095 = vmatpush2.bf16.msra.mxu0 0
        %1096 = vmatprep.subr.bf16.mxu0 0
        %1097 = vmatpush2.bf16.msra.mxu0 0
        %1098 = vmatprep.mubr.bf16.mxu0 0
        %1099 = vmatmul.mubr.bf16.gmra.mxu0 %v809
        %v1100 = vpop.f32.mrf.mxu0
        %v1101 = vadd.f32 %v773, %v1100
        %v1102 = vpop.f32.mrf.mxu0
        %v1103 = vpop.f32.mrf.mxu0
        %v1104 = vadd.f32 %v773, %v1103
        %v1105 = vpop.f32.mrf.mxu0
        %1106 = vmatprep.mubr.bf16.mxu0 0
        %1107 = vmatmul.mubr.bf16.gmra.mxu0 %v810
        %v1108 = vpop.f32.mrf.mxu0
        %v1109 = vadd.f32 %v773, %v1108
        %v1110 = vpop.f32.mrf.mxu0
        %v1111 = vpop.f32.mrf.mxu0
        %v1112 = vadd.f32 %v773, %v1111
        %v1113 = vpop.f32.mrf.mxu0
        %1114 = vmatprep.mubr.bf16.mxu0 0
        %1115 = vmatmul.mubr.bf16.gmra.mxu0 %v811
        %v1116 = vpop.f32.mrf.mxu0
        %v1117 = vadd.f32 %v773, %v1116
        %v1118 = vpop.f32.mrf.mxu0
        %v1119 = vpop.f32.mrf.mxu0
        %v1120 = vadd.f32 %v773, %v1119
        %v1121 = vpop.f32.mrf.mxu0
        %1122 = vmatprep.mubr.bf16.mxu0 0
        %1123 = vmatmul.mubr.bf16.gmra.mxu0 %v812
        %v1124 = vpop.f32.mrf.mxu0
        %v1125 = vadd.f32 %v773, %v1124
        %v1126 = vpop.f32.mrf.mxu0
        %v1127 = vpop.f32.mrf.mxu0
        %v1128 = vadd.f32 %v773, %v1127
        %v1129 = vpop.f32.mrf.mxu0
        %1130 = vmatprep.mubr.bf16.mxu0 0
        %1131 = vmatmul.mubr.bf16.gmra.mxu0 %v813
        %v1132 = vpop.f32.mrf.mxu0
        %v1133 = vadd.f32 %v773, %v1132
        %v1134 = vpop.f32.mrf.mxu0
        %v1135 = vpop.f32.mrf.mxu0
        %v1136 = vadd.f32 %v773, %v1135
        %v1137 = vpop.f32.mrf.mxu0
        %1138 = vmatprep.mubr.bf16.mxu0 0
        %1139 = vmatmul.mubr.bf16.gmra.mxu0 %v814
        %v1140 = vpop.f32.mrf.mxu0
        %v1141 = vadd.f32 %v773, %v1140
        %v1142 = vpop.f32.mrf.mxu0
        %v1143 = vpop.f32.mrf.mxu0
        %v1144 = vadd.f32 %v773, %v1143
        %v1145 = vpop.f32.mrf.mxu0
        %1146 = vmatprep.mubr.bf16.mxu0 0
        %1147 = vmatmul.mubr.bf16.gmra.mxu0 %v815
        %v1148 = vpop.f32.mrf.mxu0
        %v1149 = vadd.f32 %v773, %v1148
        %v1150 = vpop.f32.mrf.mxu0
        %v1151 = vpop.f32.mrf.mxu0
        %v1152 = vadd.f32 %v773, %v1151
        %v1153 = vpop.f32.mrf.mxu0
        %1154 = vmatprep.mubr.bf16.mxu0 0
        %1155 = vmatmul.mubr.bf16.gmra.mxu0 %v816
        %v1156 = vpop.f32.mrf.mxu0
        %v1157 = vadd.f32 %v773, %v1156
        %v1158 = vpop.f32.mrf.mxu0
        %v1159 = vpop.f32.mrf.mxu0
        %v1160 = vadd.f32 %v773, %v1159
        %v1161 = vpop.f32.mrf.mxu0
        %1162 = vdwg.mxu0
        %v1163 = vpack.c.bf16 %v992, %v988
        %v1164 = vpack.c.bf16 %v1002, %v998
        %v1165 = vpack.c.bf16 %v1012, %v1008
        %v1166 = vpack.c.bf16 %v1022, %v1018
        %v1167 = vpack.c.bf16 %v1032, %v1028
        %v1168 = vpack.c.bf16 %v1042, %v1038
        %v1169 = vpack.c.bf16 %v1052, %v1048
        %v1170 = vpack.c.bf16 %v1062, %v1058
        %v1171 = vpack.c.bf16 %v994, %v990
        %v1172 = vpack.c.bf16 %v1004, %v1000
        %v1173 = vpack.c.bf16 %v1014, %v1010
        %v1174 = vpack.c.bf16 %v1024, %v1020
        %v1175 = vpack.c.bf16 %v1034, %v1030
        %v1176 = vpack.c.bf16 %v1044, %v1040
        %v1177 = vpack.c.bf16 %v1054, %v1050
        %v1178 = vpack.c.bf16 %v1064, %v1060
        %1179 = vmatprep.subr.bf16.mxu0 0
        %1180 = vmatpush1.bf16.xpose.msra.mxu0 %v1178
        %1181 = vmatprep.subr.bf16.mxu0 0
        %1182 = vmatpush1.bf16.xpose.msra.mxu0 %v1177
        %1183 = vmatprep.subr.bf16.mxu0 0
        %1184 = vmatpush1.bf16.xpose.msra.mxu0 %v1176
        %1185 = vmatprep.subr.bf16.mxu0 0
        %1186 = vmatpush1.bf16.xpose.msra.mxu0 %v1175
        %1187 = vmatprep.subr.bf16.mxu0 0
        %1188 = vmatpush1.bf16.xpose.msra.mxu0 %v1174
        %1189 = vmatprep.subr.bf16.mxu0 0
        %1190 = vmatpush1.bf16.xpose.msra.mxu0 %v1173
        %1191 = vmatprep.subr.bf16.mxu0 0
        %1192 = vmatpush1.bf16.xpose.msra.mxu0 %v1172
        %1193 = vmatprep.subr.bf16.mxu0 0
        %1194 = vmatpush1.bf16.xpose.msra.mxu0 %v1171
        %1195 = vmatprep.subr.bf16.mxu0 0
        %1196 = vmatpush2.bf16.xpose.msra.mxu0 0
        %1197 = vmatprep.subr.bf16.mxu0 0
        %1198 = vmatpush2.bf16.xpose.msra.mxu0 0
        %1199 = vmatprep.subr.bf16.mxu0 0
        %1200 = vmatpush2.bf16.xpose.msra.mxu0 0
        %1201 = vmatprep.subr.bf16.mxu0 0
        %1202 = vmatpush2.bf16.xpose.msra.mxu0 0
        %1203 = vmatprep.subr.bf16.mxu0 0
        %1204 = vmatpush2.bf16.xpose.msra.mxu0 0
        %1205 = vmatprep.subr.bf16.mxu0 0
        %1206 = vmatpush2.bf16.xpose.msra.mxu0 0
        %1207 = vmatprep.subr.bf16.mxu0 0
        %1208 = vmatpush2.bf16.xpose.msra.mxu0 0
        %1209 = vmatprep.subr.bf16.mxu0 0
        %1210 = vmatpush2.bf16.xpose.msra.mxu0 0
        %1211 = vmatprep.mubr.bf16.mxu0 0
        %1212 = vmatmul.mubr.bf16.gmra.mxu0 %v1163
        %v1213 = vpop.f32.mrf.mxu0
        %v1214 = vadd.f32 0.0, %v1213
        %v1215 = vpop.f32.mrf.mxu0
        %v1216 = vpop.f32.mrf.mxu0
        %v1217 = vadd.f32 0.0, %v1216
        %v1218 = vpop.f32.mrf.mxu0
        %1219 = vmatprep.mubr.bf16.mxu0 0
        %1220 = vmatmul.mubr.bf16.gmra.mxu0 %v1164
        %v1221 = vpop.f32.mrf.mxu0
        %v1222 = vadd.f32 0.0, %v1221
        %v1223 = vpop.f32.mrf.mxu0
        %v1224 = vpop.f32.mrf.mxu0
        %v1225 = vadd.f32 0.0, %v1224
        %v1226 = vpop.f32.mrf.mxu0
        %1227 = vmatprep.mubr.bf16.mxu0 0
        %1228 = vmatmul.mubr.bf16.gmra.mxu0 %v1165
        %v1229 = vpop.f32.mrf.mxu0
        %v1230 = vadd.f32 0.0, %v1229
        %v1231 = vpop.f32.mrf.mxu0
        %v1232 = vpop.f32.mrf.mxu0
        %v1233 = vadd.f32 0.0, %v1232
        %v1234 = vpop.f32.mrf.mxu0
        %1235 = vmatprep.mubr.bf16.mxu0 0
        %1236 = vmatmul.mubr.bf16.gmra.mxu0 %v1166
        %v1237 = vpop.f32.mrf.mxu0
        %v1238 = vadd.f32 0.0, %v1237
        %v1239 = vpop.f32.mrf.mxu0
        %v1240 = vpop.f32.mrf.mxu0
        %v1241 = vadd.f32 0.0, %v1240
        %v1242 = vpop.f32.mrf.mxu0
        %1243 = vmatprep.mubr.bf16.mxu0 0
        %1244 = vmatmul.mubr.bf16.gmra.mxu0 %v1167
        %v1245 = vpop.f32.mrf.mxu0
        %v1246 = vadd.f32 0.0, %v1245
        %v1247 = vpop.f32.mrf.mxu0
        %v1248 = vpop.f32.mrf.mxu0
        %v1249 = vadd.f32 0.0, %v1248
        %v1250 = vpop.f32.mrf.mxu0
        %1251 = vmatprep.mubr.bf16.mxu0 0
        %1252 = vmatmul.mubr.bf16.gmra.mxu0 %v1168
        %v1253 = vpop.f32.mrf.mxu0
        %v1254 = vadd.f32 0.0, %v1253
        %v1255 = vpop.f32.mrf.mxu0
        %v1256 = vpop.f32.mrf.mxu0
        %v1257 = vadd.f32 0.0, %v1256
        %v1258 = vpop.f32.mrf.mxu0
        %1259 = vmatprep.mubr.bf16.mxu0 0
        %1260 = vmatmul.mubr.bf16.gmra.mxu0 %v1169
        %v1261 = vpop.f32.mrf.mxu0
        %v1262 = vadd.f32 0.0, %v1261
        %v1263 = vpop.f32.mrf.mxu0
        %v1264 = vpop.f32.mrf.mxu0
        %v1265 = vadd.f32 0.0, %v1264
        %v1266 = vpop.f32.mrf.mxu0
        %1267 = vmatprep.mubr.bf16.mxu0 0
        %1268 = vmatmul.mubr.bf16.gmra.mxu0 %v1170
        %v1269 = vpop.f32.mrf.mxu0
        %v1270 = vadd.f32 0.0, %v1269
        %v1271 = vpop.f32.mrf.mxu0
        %v1272 = vpop.f32.mrf.mxu0
        %v1273 = vadd.f32 0.0, %v1272
        %v1274 = vpop.f32.mrf.mxu0
        %1275 = vdwg.mxu0
        %v1276 = vmul.f32 %v1214, 0.088388346
        %v1277 = vmul.f32 %v1217, 0.088388346
        %v1278 = vmul.f32 %v1222, 0.088388346
        %v1279 = vmul.f32 %v1225, 0.088388346
        %v1280 = vmul.f32 %v1230, 0.088388346
        %v1281 = vmul.f32 %v1233, 0.088388346
        %v1282 = vmul.f32 %v1238, 0.088388346
        %v1283 = vmul.f32 %v1241, 0.088388346
        %v1284 = vmul.f32 %v1246, 0.088388346
        %v1285 = vmul.f32 %v1249, 0.088388346
        %v1286 = vmul.f32 %v1254, 0.088388346
        %v1287 = vmul.f32 %v1257, 0.088388346
        %v1288 = vmul.f32 %v1262, 0.088388346
        %v1289 = vmul.f32 %v1265, 0.088388346
        %v1290 = vmul.f32 %v1270, 0.088388346
        %v1291 = vmul.f32 %v1273, 0.088388346
        %1292 = vmax.xlane.f32.xlu0 %v1276
        %v1293 = vpop.xlane.xlu0 %1292
        %1294 = vmax.xlane.f32.xlu0 %v1277
        %v1295 = vpop.xlane.xlu0 %1294
        %1296 = vmax.xlane.f32.xlu0 %v1278
        %v1297 = vpop.xlane.xlu0 %1296
        %1298 = vmax.xlane.f32.xlu0 %v1279
        %v1299 = vpop.xlane.xlu0 %1298
        %1300 = vmax.xlane.f32.xlu0 %v1280
        %v1301 = vpop.xlane.xlu0 %1300
        %1302 = vmax.xlane.f32.xlu0 %v1281
        %v1303 = vpop.xlane.xlu0 %1302
        %1304 = vmax.xlane.f32.xlu0 %v1282
        %v1305 = vpop.xlane.xlu0 %1304
        %1306 = vmax.xlane.f32.xlu0 %v1283
        %v1307 = vpop.xlane.xlu0 %1306
        %1308 = vmax.xlane.f32.xlu0 %v1284
        %v1309 = vpop.xlane.xlu0 %1308
        %1310 = vmax.xlane.f32.xlu0 %v1285
        %v1311 = vpop.xlane.xlu0 %1310
        %1312 = vmax.xlane.f32.xlu0 %v1286
        %v1313 = vpop.xlane.xlu0 %1312
        %1314 = vmax.xlane.f32.xlu0 %v1287
        %v1315 = vpop.xlane.xlu0 %1314
        %1316 = vmax.xlane.f32.xlu0 %v1288
        %v1317 = vpop.xlane.xlu0 %1316
        %1318 = vmax.xlane.f32.xlu0 %v1289
        %v1319 = vpop.xlane.xlu0 %1318
        %1320 = vmax.xlane.f32.xlu0 %v1290
        %v1321 = vpop.xlane.xlu0 %1320
        %1322 = vmax.xlane.f32.xlu0 %v1291
        %v1323 = vpop.xlane.xlu0 %1322
        %v1324 = vsub.f32 %v1276, %v1293
        %v1325 = vsub.f32 %v1277, %v1295
        %v1326 = vsub.f32 %v1278, %v1297
        %v1327 = vsub.f32 %v1279, %v1299
        %v1328 = vsub.f32 %v1280, %v1301
        %v1329 = vsub.f32 %v1281, %v1303
        %v1330 = vsub.f32 %v1282, %v1305
        %v1331 = vsub.f32 %v1283, %v1307
        %v1332 = vsub.f32 %v1284, %v1309
        %v1333 = vsub.f32 %v1285, %v1311
        %v1334 = vsub.f32 %v1286, %v1313
        %v1335 = vsub.f32 %v1287, %v1315
        %v1336 = vsub.f32 %v1288, %v1317
        %v1337 = vsub.f32 %v1289, %v1319
        %v1338 = vsub.f32 %v1290, %v1321
        %v1339 = vsub.f32 %v1291, %v1323
        %v1340 = vmul.f32 %v1324, 1.442695
        %v1341 = vpow.pop %v1340
        %v1342 = vmul.f32 %v1325, 1.442695
        %v1343 = vpow.pop %v1342
        %v1344 = vmul.f32 %v1326, 1.442695
        %v1345 = vpow.pop %v1344
        %v1346 = vmul.f32 %v1327, 1.442695
        %v1347 = vpow.pop %v1346
        %v1348 = vmul.f32 %v1328, 1.442695
        %v1349 = vpow.pop %v1348
        %v1350 = vmul.f32 %v1329, 1.442695
        %v1351 = vpow.pop %v1350
        %v1352 = vmul.f32 %v1330, 1.442695
        %v1353 = vpow.pop %v1352
        %v1354 = vmul.f32 %v1331, 1.442695
        %v1355 = vpow.pop %v1354
        %v1356 = vmul.f32 %v1332, 1.442695
        %v1357 = vpow.pop %v1356
        %v1358 = vmul.f32 %v1333, 1.442695
        %v1359 = vpow.pop %v1358
        %v1360 = vmul.f32 %v1334, 1.442695
        %v1361 = vpow.pop %v1360
        %v1362 = vmul.f32 %v1335, 1.442695
        %v1363 = vpow.pop %v1362
        %v1364 = vmul.f32 %v1336, 1.442695
        %v1365 = vpow.pop %v1364
        %v1366 = vmul.f32 %v1337, 1.442695
        %v1367 = vpow.pop %v1366
        %v1368 = vmul.f32 %v1338, 1.442695
        %v1369 = vpow.pop %v1368
        %v1370 = vmul.f32 %v1339, 1.442695
        %v1371 = vpow.pop %v1370
        %1372 = vadd.xlane.f32.xlu0 %v1341
        %v1373 = vpop.xlane.xlu0 %1372
        %1374 = vadd.xlane.f32.xlu0 %v1343
        %v1375 = vpop.xlane.xlu0 %1374
        %1376 = vadd.xlane.f32.xlu0 %v1345
        %v1377 = vpop.xlane.xlu0 %1376
        %1378 = vadd.xlane.f32.xlu0 %v1347
        %v1379 = vpop.xlane.xlu0 %1378
        %1380 = vadd.xlane.f32.xlu0 %v1349
        %v1381 = vpop.xlane.xlu0 %1380
        %1382 = vadd.xlane.f32.xlu0 %v1351
        %v1383 = vpop.xlane.xlu0 %1382
        %1384 = vadd.xlane.f32.xlu0 %v1353
        %v1385 = vpop.xlane.xlu0 %1384
        %1386 = vadd.xlane.f32.xlu0 %v1355
        %v1387 = vpop.xlane.xlu0 %1386
        %1388 = vadd.xlane.f32.xlu0 %v1357
        %v1389 = vpop.xlane.xlu0 %1388
        %1390 = vadd.xlane.f32.xlu0 %v1359
        %v1391 = vpop.xlane.xlu0 %1390
        %1392 = vadd.xlane.f32.xlu0 %v1361
        %v1393 = vpop.xlane.xlu0 %1392
        %1394 = vadd.xlane.f32.xlu0 %v1363
        %v1395 = vpop.xlane.xlu0 %1394
        %1396 = vadd.xlane.f32.xlu0 %v1365
        %v1397 = vpop.xlane.xlu0 %1396
        %1398 = vadd.xlane.f32.xlu0 %v1367
        %v1399 = vpop.xlane.xlu0 %1398
        %1400 = vadd.xlane.f32.xlu0 %v1369
        %v1401 = vpop.xlane.xlu0 %1400
        %1402 = vadd.xlane.f32.xlu0 %v1371
        %v1403 = vpop.xlane.xlu0 %1402
        %v1404 = vrcp.pop %v1373
        %v1405 = vrcp.pop %v1375
        %v1406 = vrcp.pop %v1377
        %v1407 = vrcp.pop %v1379
        %v1408 = vrcp.pop %v1381
        %v1409 = vrcp.pop %v1383
        %v1410 = vrcp.pop %v1385
        %v1411 = vrcp.pop %v1387
        %v1412 = vrcp.pop %v1389
        %v1413 = vrcp.pop %v1391
        %v1414 = vrcp.pop %v1393
        %v1415 = vrcp.pop %v1395
        %v1416 = vrcp.pop %v1397
        %v1417 = vrcp.pop %v1399
        %v1418 = vrcp.pop %v1401
        %v1419 = vrcp.pop %v1403
        %v1420 = vmul.f32 %v1341, %v1404
        %v1421 = vmul.f32 %v1343, %v1405
        %v1422 = vmul.f32 %v1345, %v1406
        %v1423 = vmul.f32 %v1347, %v1407
        %v1424 = vmul.f32 %v1349, %v1408
        %v1425 = vmul.f32 %v1351, %v1409
        %v1426 = vmul.f32 %v1353, %v1410
        %v1427 = vmul.f32 %v1355, %v1411
        %v1428 = vmul.f32 %v1357, %v1412
        %v1429 = vmul.f32 %v1359, %v1413
        %v1430 = vmul.f32 %v1361, %v1414
        %v1431 = vmul.f32 %v1363, %v1415
        %v1432 = vmul.f32 %v1365, %v1416
        %v1433 = vmul.f32 %v1367, %v1417
        %v1434 = vmul.f32 %v1369, %v1418
        %v1435 = vmul.f32 %v1371, %v1419
        %v1436 = vpack.c.bf16 %v1421, %v1420
        %v1437 = vpack.c.bf16 %v1423, %v1422
        %v1438 = vpack.c.bf16 %v1425, %v1424
        %v1439 = vpack.c.bf16 %v1427, %v1426
        %v1440 = vpack.c.bf16 %v1429, %v1428
        %v1441 = vpack.c.bf16 %v1431, %v1430
        %v1442 = vpack.c.bf16 %v1433, %v1432
        %v1443 = vpack.c.bf16 %v1435, %v1434
        %v1444 = vpack.c.bf16 %v1104, %v1101
        %v1445 = vpack.c.bf16 %v1112, %v1109
        %v1446 = vpack.c.bf16 %v1120, %v1117
        %v1447 = vpack.c.bf16 %v1128, %v1125
        %v1448 = vpack.c.bf16 %v1136, %v1133
        %v1449 = vpack.c.bf16 %v1144, %v1141
        %v1450 = vpack.c.bf16 %v1152, %v1149
        %v1451 = vpack.c.bf16 %v1160, %v1157
        %1452 = vmatprep.subr.bf16.mxu0 0
        %1453 = vmatpush1.bf16.msra.mxu0 %v1451
        %1454 = vmatprep.subr.bf16.mxu0 0
        %1455 = vmatpush1.bf16.msra.mxu0 %v1450
        %1456 = vmatprep.subr.bf16.mxu0 0
        %1457 = vmatpush1.bf16.msra.mxu0 %v1449
        %1458 = vmatprep.subr.bf16.mxu0 0
        %1459 = vmatpush1.bf16.msra.mxu0 %v1448
        %1460 = vmatprep.subr.bf16.mxu0 0
        %1461 = vmatpush1.bf16.msra.mxu0 %v1447
        %1462 = vmatprep.subr.bf16.mxu0 0
        %1463 = vmatpush1.bf16.msra.mxu0 %v1446
        %1464 = vmatprep.subr.bf16.mxu0 0
        %1465 = vmatpush1.bf16.msra.mxu0 %v1445
        %1466 = vmatprep.subr.bf16.mxu0 0
        %1467 = vmatpush1.bf16.msra.mxu0 %v1444
        %1468 = vmatprep.subr.bf16.mxu0 0
        %1469 = vmatpush2.bf16.msra.mxu0 0
        %1470 = vmatprep.subr.bf16.mxu0 0
        %1471 = vmatpush2.bf16.msra.mxu0 0
        %1472 = vmatprep.subr.bf16.mxu0 0
        %1473 = vmatpush2.bf16.msra.mxu0 0
        %1474 = vmatprep.subr.bf16.mxu0 0
        %1475 = vmatpush2.bf16.msra.mxu0 0
        %1476 = vmatprep.subr.bf16.mxu0 0
        %1477 = vmatpush2.bf16.msra.mxu0 0
        %1478 = vmatprep.subr.bf16.mxu0 0
        %1479 = vmatpush2.bf16.msra.mxu0 0
        %1480 = vmatprep.subr.bf16.mxu0 0
        %1481 = vmatpush2.bf16.msra.mxu0 0
        %1482 = vmatprep.subr.bf16.mxu0 0
        %1483 = vmatpush2.bf16.msra.mxu0 0
        %1484 = vmatprep.mubr.bf16.mxu0 0
        %1485 = vmatmul.mubr.bf16.gmra.mxu0 %v1436
        %v1486 = vpop.f32.mrf.mxu0
        %v1487 = vadd.f32 0.0, %v1486
        %v1488 = vpop.f32.mrf.mxu0
        %v1489 = vpop.f32.mrf.mxu0
        %v1490 = vadd.f32 0.0, %v1489
        %v1491 = vpop.f32.mrf.mxu0
        %1492 = vmatprep.mubr.bf16.mxu0 0
        %1493 = vmatmul.mubr.bf16.gmra.mxu0 %v1437
        %v1494 = vpop.f32.mrf.mxu0
        %v1495 = vadd.f32 0.0, %v1494
        %v1496 = vpop.f32.mrf.mxu0
        %v1497 = vpop.f32.mrf.mxu0
        %v1498 = vadd.f32 0.0, %v1497
        %v1499 = vpop.f32.mrf.mxu0
        %1500 = vmatprep.mubr.bf16.mxu0 0
        %1501 = vmatmul.mubr.bf16.gmra.mxu0 %v1438
        %v1502 = vpop.f32.mrf.mxu0
        %v1503 = vadd.f32 0.0, %v1502
        %v1504 = vpop.f32.mrf.mxu0
        %v1505 = vpop.f32.mrf.mxu0
        %v1506 = vadd.f32 0.0, %v1505
        %v1507 = vpop.f32.mrf.mxu0
        %1508 = vmatprep.mubr.bf16.mxu0 0
        %1509 = vmatmul.mubr.bf16.gmra.mxu0 %v1439
        %v1510 = vpop.f32.mrf.mxu0
        %v1511 = vadd.f32 0.0, %v1510
        %v1512 = vpop.f32.mrf.mxu0
        %v1513 = vpop.f32.mrf.mxu0
        %v1514 = vadd.f32 0.0, %v1513
        %v1515 = vpop.f32.mrf.mxu0
        %1516 = vmatprep.mubr.bf16.mxu0 0
        %1517 = vmatmul.mubr.bf16.gmra.mxu0 %v1440
        %v1518 = vpop.f32.mrf.mxu0
        %v1519 = vadd.f32 0.0, %v1518
        %v1520 = vpop.f32.mrf.mxu0
        %v1521 = vpop.f32.mrf.mxu0
        %v1522 = vadd.f32 0.0, %v1521
        %v1523 = vpop.f32.mrf.mxu0
        %1524 = vmatprep.mubr.bf16.mxu0 0
        %1525 = vmatmul.mubr.bf16.gmra.mxu0 %v1441
        %v1526 = vpop.f32.mrf.mxu0
        %v1527 = vadd.f32 0.0, %v1526
        %v1528 = vpop.f32.mrf.mxu0
        %v1529 = vpop.f32.mrf.mxu0
        %v1530 = vadd.f32 0.0, %v1529
        %v1531 = vpop.f32.mrf.mxu0
        %1532 = vmatprep.mubr.bf16.mxu0 0
        %1533 = vmatmul.mubr.bf16.gmra.mxu0 %v1442
        %v1534 = vpop.f32.mrf.mxu0
        %v1535 = vadd.f32 0.0, %v1534
        %v1536 = vpop.f32.mrf.mxu0
        %v1537 = vpop.f32.mrf.mxu0
        %v1538 = vadd.f32 0.0, %v1537
        %v1539 = vpop.f32.mrf.mxu0
        %1540 = vmatprep.mubr.bf16.mxu0 0
        %1541 = vmatmul.mubr.bf16.gmra.mxu0 %v1443
        %v1542 = vpop.f32.mrf.mxu0
        %v1543 = vadd.f32 0.0, %v1542
        %v1544 = vpop.f32.mrf.mxu0
        %v1545 = vpop.f32.mrf.mxu0
        %v1546 = vadd.f32 0.0, %v1545
        %v1547 = vpop.f32.mrf.mxu0
        %1548 = vdwg.mxu0
        %v1549 = vpack.c.bf16 %v1490, %v1487
        %v1550 = vpack.c.bf16 %v1498, %v1495
        %v1551 = vpack.c.bf16 %v1506, %v1503
        %v1552 = vpack.c.bf16 %v1514, %v1511
        %v1553 = vpack.c.bf16 %v1522, %v1519
        %v1554 = vpack.c.bf16 %v1530, %v1527
        %v1555 = vpack.c.bf16 %v1538, %v1535
        %v1556 = vpack.c.bf16 %v1546, %v1543
        %v1565 = vunpack.c.l.b16 %v1549
        %v1566 = vunpack.c.h.b16 %v1549
        %v1567 = vunpack.c.l.b16 %v1550
        %v1568 = vunpack.c.h.b16 %v1550
        %v1569 = vunpack.c.l.b16 %v1551
        %v1570 = vunpack.c.h.b16 %v1551
        %v1571 = vunpack.c.l.b16 %v1552
        %v1572 = vunpack.c.h.b16 %v1552
        %v1573 = vunpack.c.l.b16 %v1553
        %v1574 = vunpack.c.h.b16 %v1553
        %v1575 = vunpack.c.l.b16 %v1554
        %v1576 = vunpack.c.h.b16 %v1554
        %v1577 = vunpack.c.l.b16 %v1555
        %v1578 = vunpack.c.h.b16 %v1555
        %v1579 = vunpack.c.l.b16 %v1556
        %v1580 = vunpack.c.h.b16 %v1556
        %v1581 = vpack.c.b16 %v1565, %v1565
        %v1582 = vpack.c.b16 %v1566, %v1566
        %v1583 = vpack.c.b16 %v1567, %v1567
        %v1584 = vpack.c.b16 %v1568, %v1568
        %v1585 = vpack.c.b16 %v1569, %v1569
        %v1586 = vpack.c.b16 %v1570, %v1570
        %v1587 = vpack.c.b16 %v1571, %v1571
        %v1588 = vpack.c.b16 %v1572, %v1572
        %v1589 = vpack.c.b16 %v1573, %v1573
        %v1590 = vpack.c.b16 %v1574, %v1574
        %v1591 = vpack.c.b16 %v1575, %v1575
        %v1592 = vpack.c.b16 %v1576, %v1576
        %v1593 = vpack.c.b16 %v1577, %v1577
        %v1594 = vpack.c.b16 %v1578, %v1578
        %v1595 = vpack.c.b16 %v1579, %v1579
        %v1596 = vpack.c.b16 %v1580, %v1580
        %1613 = vst [vmem:[#allocation3] sm:$0xf] %v1581
        %1614 = vst [vmem:[#allocation3 + $0x8] sm:$0xf] %v1582
        %1615 = vst [vmem:[#allocation3 + $0x10] sm:$0xf] %v1583
        %1616 = vst [vmem:[#allocation3 + $0x18] sm:$0xf] %v1584
        %1617 = vst [vmem:[#allocation3 + $0x20] sm:$0xf] %v1585
        %1618 = vst [vmem:[#allocation3 + $0x28] sm:$0xf] %v1586
        %1619 = vst [vmem:[#allocation3 + $0x30] sm:$0xf] %v1587
        %1620 = vst [vmem:[#allocation3 + $0x38] sm:$0xf] %v1588
        %1621 = vst [vmem:[#allocation3 + $0x40] sm:$0xf] %v1589
        %1622 = vst [vmem:[#allocation3 + $0x48] sm:$0xf] %v1590
        %1623 = vst [vmem:[#allocation3 + $0x50] sm:$0xf] %v1591
        %1624 = vst [vmem:[#allocation3 + $0x58] sm:$0xf] %v1592
        %1625 = vst [vmem:[#allocation3 + $0x60] sm:$0xf] %v1593
        %1626 = vst [vmem:[#allocation3 + $0x68] sm:$0xf] %v1594
        %1627 = vst [vmem:[#allocation3 + $0x70] sm:$0xf] %v1595
        %1628 = vst [vmem:[#allocation3 + $0x78] sm:$0xf] %v1596
        %v1629 = vld [vmem:[#allocation2 + $0x4] sm:$0xf]
        %v1630 = vld [vmem:[#allocation2 + $0xc] sm:$0xf]
        %v1631 = vld [vmem:[#allocation2 + $0x14] sm:$0xf]
        %v1632 = vld [vmem:[#allocation2 + $0x1c] sm:$0xf]
        %v1633 = vld [vmem:[#allocation2 + $0x24] sm:$0xf]
        %v1634 = vld [vmem:[#allocation2 + $0x2c] sm:$0xf]
        %v1635 = vld [vmem:[#allocation2 + $0x34] sm:$0xf]
        %v1636 = vld [vmem:[#allocation2 + $0x3c] sm:$0xf]
        %v1637 = vld [vmem:[#allocation2 + $0x44] sm:$0xf]
        %v1638 = vld [vmem:[#allocation2 + $0x4c] sm:$0xf]
        %v1639 = vld [vmem:[#allocation2 + $0x54] sm:$0xf]
        %v1640 = vld [vmem:[#allocation2 + $0x5c] sm:$0xf]
        %v1641 = vld [vmem:[#allocation2 + $0x64] sm:$0xf]
        %v1642 = vld [vmem:[#allocation2 + $0x6c] sm:$0xf]
        %v1643 = vld [vmem:[#allocation2 + $0x74] sm:$0xf]
        %v1644 = vld [vmem:[#allocation2 + $0x7c] sm:$0xf]
        %s1645 = scalar_lea.vmem [#allocation7], 192
        %v1646 = vld [vmem:[%s1645] sm:$0xff]
        %v1647 = vld [vmem:[%s1645 + $0x8] sm:$0xf]
        %v1648 = vld [vmem:[%s1645 + $0xc] sm:$0xff]
        %v1649 = vld [vmem:[%s1645 + $0x14] sm:$0xf]
        %v1650 = vld [vmem:[%s1645 + $0x18] sm:$0xff]
        %v1651 = vld [vmem:[%s1645 + $0x20] sm:$0xf]
        %v1652 = vld [vmem:[%s1645 + $0x24] sm:$0xff]
        %v1653 = vld [vmem:[%s1645 + $0x2c] sm:$0xf]
        %v1654 = vld [vmem:[%s1645 + $0x30] sm:$0xff]
        %v1655 = vld [vmem:[%s1645 + $0x38] sm:$0xf]
        %v1656 = vld [vmem:[%s1645 + $0x3c] sm:$0xff]
        %v1657 = vld [vmem:[%s1645 + $0x44] sm:$0xf]
        %v1658 = vld [vmem:[%s1645 + $0x48] sm:$0xff]
        %v1659 = vld [vmem:[%s1645 + $0x50] sm:$0xf]
        %v1660 = vld [vmem:[%s1645 + $0x54] sm:$0xff]
        %v1661 = vld [vmem:[%s1645 + $0x5c] sm:$0xf]
        %v1662 = vld [vmem:[%s1645 + $0x60] sm:$0xff]
        %v1663 = vld [vmem:[%s1645 + $0x68] sm:$0xf]
        %v1664 = vld [vmem:[%s1645 + $0x6c] sm:$0xff]
        %v1665 = vld [vmem:[%s1645 + $0x74] sm:$0xf]
        %v1666 = vld [vmem:[%s1645 + $0x78] sm:$0xff]
        %v1667 = vld [vmem:[%s1645 + $0x80] sm:$0xf]
        %v1668 = vld [vmem:[%s1645 + $0x84] sm:$0xff]
        %v1669 = vld [vmem:[%s1645 + $0x8c] sm:$0xf]
        %v1670 = vld [vmem:[%s1645 + $0x90] sm:$0xff]
        %v1671 = vld [vmem:[%s1645 + $0x98] sm:$0xf]
        %v1672 = vld [vmem:[%s1645 + $0x9c] sm:$0xff]
        %v1673 = vld [vmem:[%s1645 + $0xa4] sm:$0xf]
        %v1674 = vld [vmem:[%s1645 + $0xa8] sm:$0xff]
        %v1675 = vld [vmem:[%s1645 + $0xb0] sm:$0xf]
        %v1676 = vld [vmem:[%s1645 + $0xb4] sm:$0xff]
        %v1677 = vld [vmem:[%s1645 + $0xbc] sm:$0xf]
        %s1678 = scalar_lea.vmem %s2, 3
        %v1679 = vld [vmem:[%s1678] sm:$0x7]
        %v1681 = vlaneseq
        %v1682 = vshrl.u32 %v1681, 7
        %v1683 = vsub.s32 0, %v1682
        %v1684 = vrot.slane %v1679, %v1683
        %v1685 = vlaneseq
        %v1686 = vshrl.u32 %v1685, 7
        %v1687 = vsub.s32 1, %v1686
        %v1688 = vrot.slane %v1679, %v1687
        %v1689 = vlaneseq
        %v1690 = vshrl.u32 %v1689, 7
        %v1691 = vsub.s32 2, %v1690
        %v1692 = vrot.slane %v1679, %v1691
        %v1712 = vunpack.c.l.b16 %v1629
        %v1713 = vunpack.c.l.b16 %v1630
        %v1714 = vunpack.c.l.b16 %v1631
        %v1715 = vunpack.c.l.b16 %v1632
        %v1716 = vunpack.c.l.b16 %v1633
        %v1717 = vunpack.c.l.b16 %v1634
        %v1718 = vunpack.c.l.b16 %v1635
        %v1719 = vunpack.c.l.b16 %v1636
        %v1720 = vunpack.c.l.b16 %v1637
        %v1721 = vunpack.c.l.b16 %v1638
        %v1722 = vunpack.c.l.b16 %v1639
        %v1723 = vunpack.c.l.b16 %v1640
        %v1724 = vunpack.c.l.b16 %v1641
        %v1725 = vunpack.c.l.b16 %v1642
        %v1726 = vunpack.c.l.b16 %v1643
        %v1727 = vunpack.c.l.b16 %v1644
        %v1728 = vpack.c.b16 %v1713, %v1712
        %v1729 = vpack.c.b16 %v1715, %v1714
        %v1730 = vpack.c.b16 %v1717, %v1716
        %v1731 = vpack.c.b16 %v1719, %v1718
        %v1732 = vpack.c.b16 %v1721, %v1720
        %v1733 = vpack.c.b16 %v1723, %v1722
        %v1734 = vpack.c.b16 %v1725, %v1724
        %v1735 = vpack.c.b16 %v1727, %v1726
        %v1776 = vunpack.c.l.b16 %v1646
        %v1777 = vunpack.c.h.b16 %v1646
        %v1778 = vunpack.c.l.b16 %v1647
        %v1779 = vunpack.c.l.b16 %v1648
        %v1780 = vunpack.c.h.b16 %v1648
        %v1781 = vunpack.c.l.b16 %v1649
        %v1782 = vunpack.c.l.b16 %v1650
        %v1783 = vunpack.c.h.b16 %v1650
        %v1784 = vunpack.c.l.b16 %v1651
        %v1785 = vunpack.c.l.b16 %v1652
        %v1786 = vunpack.c.h.b16 %v1652
        %v1787 = vunpack.c.l.b16 %v1653
        %v1788 = vunpack.c.l.b16 %v1654
        %v1789 = vunpack.c.h.b16 %v1654
        %v1790 = vunpack.c.l.b16 %v1655
        %v1791 = vunpack.c.l.b16 %v1656
        %v1792 = vunpack.c.h.b16 %v1656
        %v1793 = vunpack.c.l.b16 %v1657
        %v1794 = vunpack.c.l.b16 %v1658
        %v1795 = vunpack.c.h.b16 %v1658
        %v1796 = vunpack.c.l.b16 %v1659
        %v1797 = vunpack.c.l.b16 %v1660
        %v1798 = vunpack.c.h.b16 %v1660
        %v1799 = vunpack.c.l.b16 %v1661
        %v1800 = vunpack.c.l.b16 %v1662
        %v1801 = vunpack.c.h.b16 %v1662
        %v1802 = vunpack.c.l.b16 %v1663
        %v1803 = vunpack.c.l.b16 %v1664
        %v1804 = vunpack.c.h.b16 %v1664
        %v1805 = vunpack.c.l.b16 %v1665
        %v1806 = vunpack.c.l.b16 %v1666
        %v1807 = vunpack.c.h.b16 %v1666
        %v1808 = vunpack.c.l.b16 %v1667
        %v1809 = vunpack.c.l.b16 %v1668
        %v1810 = vunpack.c.h.b16 %v1668
        %v1811 = vunpack.c.l.b16 %v1669
        %v1812 = vunpack.c.l.b16 %v1670
        %v1813 = vunpack.c.h.b16 %v1670
        %v1814 = vunpack.c.l.b16 %v1671
        %v1815 = vunpack.c.l.b16 %v1672
        %v1816 = vunpack.c.h.b16 %v1672
        %v1817 = vunpack.c.l.b16 %v1673
        %v1818 = vunpack.c.l.b16 %v1674
        %v1819 = vunpack.c.h.b16 %v1674
        %v1820 = vunpack.c.l.b16 %v1675
        %v1821 = vunpack.c.l.b16 %v1676
        %v1822 = vunpack.c.h.b16 %v1676
        %v1823 = vunpack.c.l.b16 %v1677
        %v1824 = vpack.c.b16 %v1779, %v1776
        %v1825 = vpack.c.b16 %v1780, %v1777
        %v1826 = vpack.c.b16 %v1781, %v1778
        %v1827 = vpack.c.b16 %v1785, %v1782
        %v1828 = vpack.c.b16 %v1786, %v1783
        %v1829 = vpack.c.b16 %v1787, %v1784
        %v1830 = vpack.c.b16 %v1791, %v1788
        %v1831 = vpack.c.b16 %v1792, %v1789
        %v1832 = vpack.c.b16 %v1793, %v1790
        %v1833 = vpack.c.b16 %v1797, %v1794
        %v1834 = vpack.c.b16 %v1798, %v1795
        %v1835 = vpack.c.b16 %v1799, %v1796
        %v1836 = vpack.c.b16 %v1803, %v1800
        %v1837 = vpack.c.b16 %v1804, %v1801
        %v1838 = vpack.c.b16 %v1805, %v1802
        %v1839 = vpack.c.b16 %v1809, %v1806
        %v1840 = vpack.c.b16 %v1810, %v1807
        %v1841 = vpack.c.b16 %v1811, %v1808
        %v1842 = vpack.c.b16 %v1815, %v1812
        %v1843 = vpack.c.b16 %v1816, %v1813
        %v1844 = vpack.c.b16 %v1817, %v1814
        %v1845 = vpack.c.b16 %v1821, %v1818
        %v1846 = vpack.c.b16 %v1822, %v1819
        %v1847 = vpack.c.b16 %v1823, %v1820
        %1872 = vmatprep.subr.bf16.mxu0 %v1846
        %1873 = vmatpush1.bf16.msra.mxu0 %v1845
        %1874 = vmatprep.subr.bf16.mxu0 %v1843
        %1875 = vmatpush1.bf16.msra.mxu0 %v1842
        %1876 = vmatprep.subr.bf16.mxu0 %v1840
        %1877 = vmatpush1.bf16.msra.mxu0 %v1839
        %1878 = vmatprep.subr.bf16.mxu0 %v1837
        %1879 = vmatpush1.bf16.msra.mxu0 %v1836
        %1880 = vmatprep.subr.bf16.mxu0 %v1834
        %1881 = vmatpush1.bf16.msra.mxu0 %v1833
        %1882 = vmatprep.subr.bf16.mxu0 %v1831
        %1883 = vmatpush1.bf16.msra.mxu0 %v1830
        %1884 = vmatprep.subr.bf16.mxu0 %v1828
        %1885 = vmatpush1.bf16.msra.mxu0 %v1827
        %1886 = vmatprep.subr.bf16.mxu0 %v1825
        %1887 = vmatpush1.bf16.msra.mxu0 %v1824
        %1888 = vmatprep.subr.bf16.mxu0 0
        %1889 = vmatpush2.bf16.msra.mxu0 0
        %1890 = vmatprep.subr.bf16.mxu0 0
        %1891 = vmatpush2.bf16.msra.mxu0 0
        %1892 = vmatprep.subr.bf16.mxu0 0
        %1893 = vmatpush2.bf16.msra.mxu0 0
        %1894 = vmatprep.subr.bf16.mxu0 0
        %1895 = vmatpush2.bf16.msra.mxu0 0
        %1896 = vmatprep.subr.bf16.mxu0 0
        %1897 = vmatpush2.bf16.msra.mxu0 0
        %1898 = vmatprep.subr.bf16.mxu0 0
        %1899 = vmatpush2.bf16.msra.mxu0 0
        %1900 = vmatprep.subr.bf16.mxu0 0
        %1901 = vmatpush2.bf16.msra.mxu0 0
        %1902 = vmatprep.subr.bf16.mxu0 0
        %1903 = vmatpush2.bf16.msra.mxu0 0
        %1904 = vmatprep.mubr.bf16.mxu0 0
        %1905 = vmatmul.mubr.bf16.gmra.mxu0 %v1728
        %v1906 = vpop.f32.mrf.mxu0
        %v1907 = vadd.f32 %v1684, %v1906
        %v1908 = vpop.f32.mrf.mxu0
        %v1909 = vadd.f32 %v1688, %v1908
        %v1910 = vpop.f32.mrf.mxu0
        %v1911 = vadd.f32 %v1684, %v1910
        %v1912 = vpop.f32.mrf.mxu0
        %v1913 = vadd.f32 %v1688, %v1912
        %1914 = vmatprep.mubr.bf16.mxu0 0
        %1915 = vmatmul.mubr.bf16.gmra.mxu0 %v1729
        %v1916 = vpop.f32.mrf.mxu0
        %v1917 = vadd.f32 %v1684, %v1916
        %v1918 = vpop.f32.mrf.mxu0
        %v1919 = vadd.f32 %v1688, %v1918
        %v1920 = vpop.f32.mrf.mxu0
        %v1921 = vadd.f32 %v1684, %v1920
        %v1922 = vpop.f32.mrf.mxu0
        %v1923 = vadd.f32 %v1688, %v1922
        %1924 = vmatprep.mubr.bf16.mxu0 0
        %1925 = vmatmul.mubr.bf16.gmra.mxu0 %v1730
        %v1926 = vpop.f32.mrf.mxu0
        %v1927 = vadd.f32 %v1684, %v1926
        %v1928 = vpop.f32.mrf.mxu0
        %v1929 = vadd.f32 %v1688, %v1928
        %v1930 = vpop.f32.mrf.mxu0
        %v1931 = vadd.f32 %v1684, %v1930
        %v1932 = vpop.f32.mrf.mxu0
        %v1933 = vadd.f32 %v1688, %v1932
        %1934 = vmatprep.mubr.bf16.mxu0 0
        %1935 = vmatmul.mubr.bf16.gmra.mxu0 %v1731
        %v1936 = vpop.f32.mrf.mxu0
        %v1937 = vadd.f32 %v1684, %v1936
        %v1938 = vpop.f32.mrf.mxu0
        %v1939 = vadd.f32 %v1688, %v1938
        %v1940 = vpop.f32.mrf.mxu0
        %v1941 = vadd.f32 %v1684, %v1940
        %v1942 = vpop.f32.mrf.mxu0
        %v1943 = vadd.f32 %v1688, %v1942
        %1944 = vmatprep.mubr.bf16.mxu0 0
        %1945 = vmatmul.mubr.bf16.gmra.mxu0 %v1732
        %v1946 = vpop.f32.mrf.mxu0
        %v1947 = vadd.f32 %v1684, %v1946
        %v1948 = vpop.f32.mrf.mxu0
        %v1949 = vadd.f32 %v1688, %v1948
        %v1950 = vpop.f32.mrf.mxu0
        %v1951 = vadd.f32 %v1684, %v1950
        %v1952 = vpop.f32.mrf.mxu0
        %v1953 = vadd.f32 %v1688, %v1952
        %1954 = vmatprep.mubr.bf16.mxu0 0
        %1955 = vmatmul.mubr.bf16.gmra.mxu0 %v1733
        %v1956 = vpop.f32.mrf.mxu0
        %v1957 = vadd.f32 %v1684, %v1956
        %v1958 = vpop.f32.mrf.mxu0
        %v1959 = vadd.f32 %v1688, %v1958
        %v1960 = vpop.f32.mrf.mxu0
        %v1961 = vadd.f32 %v1684, %v1960
        %v1962 = vpop.f32.mrf.mxu0
        %v1963 = vadd.f32 %v1688, %v1962
        %1964 = vmatprep.mubr.bf16.mxu0 0
        %1965 = vmatmul.mubr.bf16.gmra.mxu0 %v1734
        %v1966 = vpop.f32.mrf.mxu0
        %v1967 = vadd.f32 %v1684, %v1966
        %v1968 = vpop.f32.mrf.mxu0
        %v1969 = vadd.f32 %v1688, %v1968
        %v1970 = vpop.f32.mrf.mxu0
        %v1971 = vadd.f32 %v1684, %v1970
        %v1972 = vpop.f32.mrf.mxu0
        %v1973 = vadd.f32 %v1688, %v1972
        %1974 = vmatprep.mubr.bf16.mxu0 0
        %1975 = vmatmul.mubr.bf16.gmra.mxu0 %v1735
        %v1976 = vpop.f32.mrf.mxu0
        %v1977 = vadd.f32 %v1684, %v1976
        %v1978 = vpop.f32.mrf.mxu0
        %v1979 = vadd.f32 %v1688, %v1978
        %v1980 = vpop.f32.mrf.mxu0
        %v1981 = vadd.f32 %v1684, %v1980
        %v1982 = vpop.f32.mrf.mxu0
        %v1983 = vadd.f32 %v1688, %v1982
        %1984 = vdwg.mxu0
        %1985 = vmatprep.subr.bf16.mxu0 0
        %1986 = vmatpush1.bf16.msra.mxu0 %v1847
        %1987 = vmatprep.subr.bf16.mxu0 0
        %1988 = vmatpush1.bf16.msra.mxu0 %v1844
        %1989 = vmatprep.subr.bf16.mxu0 0
        %1990 = vmatpush1.bf16.msra.mxu0 %v1841
        %1991 = vmatprep.subr.bf16.mxu0 0
        %1992 = vmatpush1.bf16.msra.mxu0 %v1838
        %1993 = vmatprep.subr.bf16.mxu0 0
        %1994 = vmatpush1.bf16.msra.mxu0 %v1835
        %1995 = vmatprep.subr.bf16.mxu0 0
        %1996 = vmatpush1.bf16.msra.mxu0 %v1832
        %1997 = vmatprep.subr.bf16.mxu0 0
        %1998 = vmatpush1.bf16.msra.mxu0 %v1829
        %1999 = vmatprep.subr.bf16.mxu0 0
        %2000 = vmatpush1.bf16.msra.mxu0 %v1826
        %2001 = vmatprep.subr.bf16.mxu0 0
        %2002 = vmatpush2.bf16.msra.mxu0 0
        %2003 = vmatprep.subr.bf16.mxu0 0
        %2004 = vmatpush2.bf16.msra.mxu0 0
        %2005 = vmatprep.subr.bf16.mxu0 0
        %2006 = vmatpush2.bf16.msra.mxu0 0
        %2007 = vmatprep.subr.bf16.mxu0 0
        %2008 = vmatpush2.bf16.msra.mxu0 0
        %2009 = vmatprep.subr.bf16.mxu0 0
        %2010 = vmatpush2.bf16.msra.mxu0 0
        %2011 = vmatprep.subr.bf16.mxu0 0
        %2012 = vmatpush2.bf16.msra.mxu0 0
        %2013 = vmatprep.subr.bf16.mxu0 0
        %2014 = vmatpush2.bf16.msra.mxu0 0
        %2015 = vmatprep.subr.bf16.mxu0 0
        %2016 = vmatpush2.bf16.msra.mxu0 0
        %2017 = vmatprep.mubr.bf16.mxu0 0
        %2018 = vmatmul.mubr.bf16.gmra.mxu0 %v1728
        %v2019 = vpop.f32.mrf.mxu0
        %v2020 = vadd.f32 %v1692, %v2019
        %v2021 = vpop.f32.mrf.mxu0
        %v2022 = vpop.f32.mrf.mxu0
        %v2023 = vadd.f32 %v1692, %v2022
        %v2024 = vpop.f32.mrf.mxu0
        %2025 = vmatprep.mubr.bf16.mxu0 0
        %2026 = vmatmul.mubr.bf16.gmra.mxu0 %v1729
        %v2027 = vpop.f32.mrf.mxu0
        %v2028 = vadd.f32 %v1692, %v2027
        %v2029 = vpop.f32.mrf.mxu0
        %v2030 = vpop.f32.mrf.mxu0
        %v2031 = vadd.f32 %v1692, %v2030
        %v2032 = vpop.f32.mrf.mxu0
        %2033 = vmatprep.mubr.bf16.mxu0 0
        %2034 = vmatmul.mubr.bf16.gmra.mxu0 %v1730
        %v2035 = vpop.f32.mrf.mxu0
        %v2036 = vadd.f32 %v1692, %v2035
        %v2037 = vpop.f32.mrf.mxu0
        %v2038 = vpop.f32.mrf.mxu0
        %v2039 = vadd.f32 %v1692, %v2038
        %v2040 = vpop.f32.mrf.mxu0
        %2041 = vmatprep.mubr.bf16.mxu0 0
        %2042 = vmatmul.mubr.bf16.gmra.mxu0 %v1731
        %v2043 = vpop.f32.mrf.mxu0
        %v2044 = vadd.f32 %v1692, %v2043
        %v2045 = vpop.f32.mrf.mxu0
        %v2046 = vpop.f32.mrf.mxu0
        %v2047 = vadd.f32 %v1692, %v2046
        %v2048 = vpop.f32.mrf.mxu0
        %2049 = vmatprep.mubr.bf16.mxu0 0
        %2050 = vmatmul.mubr.bf16.gmra.mxu0 %v1732
        %v2051 = vpop.f32.mrf.mxu0
        %v2052 = vadd.f32 %v1692, %v2051
        %v2053 = vpop.f32.mrf.mxu0
        %v2054 = vpop.f32.mrf.mxu0
        %v2055 = vadd.f32 %v1692, %v2054
        %v2056 = vpop.f32.mrf.mxu0
        %2057 = vmatprep.mubr.bf16.mxu0 0
        %2058 = vmatmul.mubr.bf16.gmra.mxu0 %v1733
        %v2059 = vpop.f32.mrf.mxu0
        %v2060 = vadd.f32 %v1692, %v2059
        %v2061 = vpop.f32.mrf.mxu0
        %v2062 = vpop.f32.mrf.mxu0
        %v2063 = vadd.f32 %v1692, %v2062
        %v2064 = vpop.f32.mrf.mxu0
        %2065 = vmatprep.mubr.bf16.mxu0 0
        %2066 = vmatmul.mubr.bf16.gmra.mxu0 %v1734
        %v2067 = vpop.f32.mrf.mxu0
        %v2068 = vadd.f32 %v1692, %v2067
        %v2069 = vpop.f32.mrf.mxu0
        %v2070 = vpop.f32.mrf.mxu0
        %v2071 = vadd.f32 %v1692, %v2070
        %v2072 = vpop.f32.mrf.mxu0
        %2073 = vmatprep.mubr.bf16.mxu0 0
        %2074 = vmatmul.mubr.bf16.gmra.mxu0 %v1735
        %v2075 = vpop.f32.mrf.mxu0
        %v2076 = vadd.f32 %v1692, %v2075
        %v2077 = vpop.f32.mrf.mxu0
        %v2078 = vpop.f32.mrf.mxu0
        %v2079 = vadd.f32 %v1692, %v2078
        %v2080 = vpop.f32.mrf.mxu0
        %2081 = vdwg.mxu0
        %v2082 = vpack.c.bf16 %v1911, %v1907
        %v2083 = vpack.c.bf16 %v1921, %v1917
        %v2084 = vpack.c.bf16 %v1931, %v1927
        %v2085 = vpack.c.bf16 %v1941, %v1937
        %v2086 = vpack.c.bf16 %v1951, %v1947
        %v2087 = vpack.c.bf16 %v1961, %v1957
        %v2088 = vpack.c.bf16 %v1971, %v1967
        %v2089 = vpack.c.bf16 %v1981, %v1977
        %v2090 = vpack.c.bf16 %v1913, %v1909
        %v2091 = vpack.c.bf16 %v1923, %v1919
        %v2092 = vpack.c.bf16 %v1933, %v1929
        %v2093 = vpack.c.bf16 %v1943, %v1939
        %v2094 = vpack.c.bf16 %v1953, %v1949
        %v2095 = vpack.c.bf16 %v1963, %v1959
        %v2096 = vpack.c.bf16 %v1973, %v1969
        %v2097 = vpack.c.bf16 %v1983, %v1979
        %2098 = vmatprep.subr.bf16.mxu0 0
        %2099 = vmatpush1.bf16.xpose.msra.mxu0 %v2097
        %2100 = vmatprep.subr.bf16.mxu0 0
        %2101 = vmatpush1.bf16.xpose.msra.mxu0 %v2096
        %2102 = vmatprep.subr.bf16.mxu0 0
        %2103 = vmatpush1.bf16.xpose.msra.mxu0 %v2095
        %2104 = vmatprep.subr.bf16.mxu0 0
        %2105 = vmatpush1.bf16.xpose.msra.mxu0 %v2094
        %2106 = vmatprep.subr.bf16.mxu0 0
        %2107 = vmatpush1.bf16.xpose.msra.mxu0 %v2093
        %2108 = vmatprep.subr.bf16.mxu0 0
        %2109 = vmatpush1.bf16.xpose.msra.mxu0 %v2092
        %2110 = vmatprep.subr.bf16.mxu0 0
        %2111 = vmatpush1.bf16.xpose.msra.mxu0 %v2091
        %2112 = vmatprep.subr.bf16.mxu0 0
        %2113 = vmatpush1.bf16.xpose.msra.mxu0 %v2090
        %2114 = vmatprep.subr.bf16.mxu0 0
        %2115 = vmatpush2.bf16.xpose.msra.mxu0 0
        %2116 = vmatprep.subr.bf16.mxu0 0
        %2117 = vmatpush2.bf16.xpose.msra.mxu0 0
        %2118 = vmatprep.subr.bf16.mxu0 0
        %2119 = vmatpush2.bf16.xpose.msra.mxu0 0
        %2120 = vmatprep.subr.bf16.mxu0 0
        %2121 = vmatpush2.bf16.xpose.msra.mxu0 0
        %2122 = vmatprep.subr.bf16.mxu0 0
        %2123 = vmatpush2.bf16.xpose.msra.mxu0 0
        %2124 = vmatprep.subr.bf16.mxu0 0
        %2125 = vmatpush2.bf16.xpose.msra.mxu0 0
        %2126 = vmatprep.subr.bf16.mxu0 0
        %2127 = vmatpush2.bf16.xpose.msra.mxu0 0
        %2128 = vmatprep.subr.bf16.mxu0 0
        %2129 = vmatpush2.bf16.xpose.msra.mxu0 0
        %2130 = vmatprep.mubr.bf16.mxu0 0
        %2131 = vmatmul.mubr.bf16.gmra.mxu0 %v2082
        %v2132 = vpop.f32.mrf.mxu0
        %v2133 = vadd.f32 0.0, %v2132
        %v2134 = vpop.f32.mrf.mxu0
        %v2135 = vpop.f32.mrf.mxu0
        %v2136 = vadd.f32 0.0, %v2135
        %v2137 = vpop.f32.mrf.mxu0
        %2138 = vmatprep.mubr.bf16.mxu0 0
        %2139 = vmatmul.mubr.bf16.gmra.mxu0 %v2083
        %v2140 = vpop.f32.mrf.mxu0
        %v2141 = vadd.f32 0.0, %v2140
        %v2142 = vpop.f32.mrf.mxu0
        %v2143 = vpop.f32.mrf.mxu0
        %v2144 = vadd.f32 0.0, %v2143
        %v2145 = vpop.f32.mrf.mxu0
        %2146 = vmatprep.mubr.bf16.mxu0 0
        %2147 = vmatmul.mubr.bf16.gmra.mxu0 %v2084
        %v2148 = vpop.f32.mrf.mxu0
        %v2149 = vadd.f32 0.0, %v2148
        %v2150 = vpop.f32.mrf.mxu0
        %v2151 = vpop.f32.mrf.mxu0
        %v2152 = vadd.f32 0.0, %v2151
        %v2153 = vpop.f32.mrf.mxu0
        %2154 = vmatprep.mubr.bf16.mxu0 0
        %2155 = vmatmul.mubr.bf16.gmra.mxu0 %v2085
        %v2156 = vpop.f32.mrf.mxu0
        %v2157 = vadd.f32 0.0, %v2156
        %v2158 = vpop.f32.mrf.mxu0
        %v2159 = vpop.f32.mrf.mxu0
        %v2160 = vadd.f32 0.0, %v2159
        %v2161 = vpop.f32.mrf.mxu0
        %2162 = vmatprep.mubr.bf16.mxu0 0
        %2163 = vmatmul.mubr.bf16.gmra.mxu0 %v2086
        %v2164 = vpop.f32.mrf.mxu0
        %v2165 = vadd.f32 0.0, %v2164
        %v2166 = vpop.f32.mrf.mxu0
        %v2167 = vpop.f32.mrf.mxu0
        %v2168 = vadd.f32 0.0, %v2167
        %v2169 = vpop.f32.mrf.mxu0
        %2170 = vmatprep.mubr.bf16.mxu0 0
        %2171 = vmatmul.mubr.bf16.gmra.mxu0 %v2087
        %v2172 = vpop.f32.mrf.mxu0
        %v2173 = vadd.f32 0.0, %v2172
        %v2174 = vpop.f32.mrf.mxu0
        %v2175 = vpop.f32.mrf.mxu0
        %v2176 = vadd.f32 0.0, %v2175
        %v2177 = vpop.f32.mrf.mxu0
        %2178 = vmatprep.mubr.bf16.mxu0 0
        %2179 = vmatmul.mubr.bf16.gmra.mxu0 %v2088
        %v2180 = vpop.f32.mrf.mxu0
        %v2181 = vadd.f32 0.0, %v2180
        %v2182 = vpop.f32.mrf.mxu0
        %v2183 = vpop.f32.mrf.mxu0
        %v2184 = vadd.f32 0.0, %v2183
        %v2185 = vpop.f32.mrf.mxu0
        %2186 = vmatprep.mubr.bf16.mxu0 0
        %2187 = vmatmul.mubr.bf16.gmra.mxu0 %v2089
        %v2188 = vpop.f32.mrf.mxu0
        %v2189 = vadd.f32 0.0, %v2188
        %v2190 = vpop.f32.mrf.mxu0
        %v2191 = vpop.f32.mrf.mxu0
        %v2192 = vadd.f32 0.0, %v2191
        %v2193 = vpop.f32.mrf.mxu0
        %2194 = vdwg.mxu0
        %v2195 = vmul.f32 %v2133, 0.088388346
        %v2196 = vmul.f32 %v2136, 0.088388346
        %v2197 = vmul.f32 %v2141, 0.088388346
        %v2198 = vmul.f32 %v2144, 0.088388346
        %v2199 = vmul.f32 %v2149, 0.088388346
        %v2200 = vmul.f32 %v2152, 0.088388346
        %v2201 = vmul.f32 %v2157, 0.088388346
        %v2202 = vmul.f32 %v2160, 0.088388346
        %v2203 = vmul.f32 %v2165, 0.088388346
        %v2204 = vmul.f32 %v2168, 0.088388346
        %v2205 = vmul.f32 %v2173, 0.088388346
        %v2206 = vmul.f32 %v2176, 0.088388346
        %v2207 = vmul.f32 %v2181, 0.088388346
        %v2208 = vmul.f32 %v2184, 0.088388346
        %v2209 = vmul.f32 %v2189, 0.088388346
        %v2210 = vmul.f32 %v2192, 0.088388346
        %2211 = vmax.xlane.f32.xlu0 %v2195
        %v2212 = vpop.xlane.xlu0 %2211
        %2213 = vmax.xlane.f32.xlu0 %v2196
        %v2214 = vpop.xlane.xlu0 %2213
        %2215 = vmax.xlane.f32.xlu0 %v2197
        %v2216 = vpop.xlane.xlu0 %2215
        %2217 = vmax.xlane.f32.xlu0 %v2198
        %v2218 = vpop.xlane.xlu0 %2217
        %2219 = vmax.xlane.f32.xlu0 %v2199
        %v2220 = vpop.xlane.xlu0 %2219
        %2221 = vmax.xlane.f32.xlu0 %v2200
        %v2222 = vpop.xlane.xlu0 %2221
        %2223 = vmax.xlane.f32.xlu0 %v2201
        %v2224 = vpop.xlane.xlu0 %2223
        %2225 = vmax.xlane.f32.xlu0 %v2202
        %v2226 = vpop.xlane.xlu0 %2225
        %2227 = vmax.xlane.f32.xlu0 %v2203
        %v2228 = vpop.xlane.xlu0 %2227
        %2229 = vmax.xlane.f32.xlu0 %v2204
        %v2230 = vpop.xlane.xlu0 %2229
        %2231 = vmax.xlane.f32.xlu0 %v2205
        %v2232 = vpop.xlane.xlu0 %2231
        %2233 = vmax.xlane.f32.xlu0 %v2206
        %v2234 = vpop.xlane.xlu0 %2233
        %2235 = vmax.xlane.f32.xlu0 %v2207
        %v2236 = vpop.xlane.xlu0 %2235
        %2237 = vmax.xlane.f32.xlu0 %v2208
        %v2238 = vpop.xlane.xlu0 %2237
        %2239 = vmax.xlane.f32.xlu0 %v2209
        %v2240 = vpop.xlane.xlu0 %2239
        %2241 = vmax.xlane.f32.xlu0 %v2210
        %v2242 = vpop.xlane.xlu0 %2241
        %v2243 = vsub.f32 %v2195, %v2212
        %v2244 = vsub.f32 %v2196, %v2214
        %v2245 = vsub.f32 %v2197, %v2216
        %v2246 = vsub.f32 %v2198, %v2218
        %v2247 = vsub.f32 %v2199, %v2220
        %v2248 = vsub.f32 %v2200, %v2222
        %v2249 = vsub.f32 %v2201, %v2224
        %v2250 = vsub.f32 %v2202, %v2226
        %v2251 = vsub.f32 %v2203, %v2228
        %v2252 = vsub.f32 %v2204, %v2230
        %v2253 = vsub.f32 %v2205, %v2232
        %v2254 = vsub.f32 %v2206, %v2234
        %v2255 = vsub.f32 %v2207, %v2236
        %v2256 = vsub.f32 %v2208, %v2238
        %v2257 = vsub.f32 %v2209, %v2240
        %v2258 = vsub.f32 %v2210, %v2242
        %v2259 = vmul.f32 %v2243, 1.442695
        %v2260 = vpow.pop %v2259
        %v2261 = vmul.f32 %v2244, 1.442695
        %v2262 = vpow.pop %v2261
        %v2263 = vmul.f32 %v2245, 1.442695
        %v2264 = vpow.pop %v2263
        %v2265 = vmul.f32 %v2246, 1.442695
        %v2266 = vpow.pop %v2265
        %v2267 = vmul.f32 %v2247, 1.442695
        %v2268 = vpow.pop %v2267
        %v2269 = vmul.f32 %v2248, 1.442695
        %v2270 = vpow.pop %v2269
        %v2271 = vmul.f32 %v2249, 1.442695
        %v2272 = vpow.pop %v2271
        %v2273 = vmul.f32 %v2250, 1.442695
        %v2274 = vpow.pop %v2273
        %v2275 = vmul.f32 %v2251, 1.442695
        %v2276 = vpow.pop %v2275
        %v2277 = vmul.f32 %v2252, 1.442695
        %v2278 = vpow.pop %v2277
        %v2279 = vmul.f32 %v2253, 1.442695
        %v2280 = vpow.pop %v2279
        %v2281 = vmul.f32 %v2254, 1.442695
        %v2282 = vpow.pop %v2281
        %v2283 = vmul.f32 %v2255, 1.442695
        %v2284 = vpow.pop %v2283
        %v2285 = vmul.f32 %v2256, 1.442695
        %v2286 = vpow.pop %v2285
        %v2287 = vmul.f32 %v2257, 1.442695
        %v2288 = vpow.pop %v2287
        %v2289 = vmul.f32 %v2258, 1.442695
        %v2290 = vpow.pop %v2289
        %2291 = vadd.xlane.f32.xlu0 %v2260
        %v2292 = vpop.xlane.xlu0 %2291
        %2293 = vadd.xlane.f32.xlu0 %v2262
        %v2294 = vpop.xlane.xlu0 %2293
        %2295 = vadd.xlane.f32.xlu0 %v2264
        %v2296 = vpop.xlane.xlu0 %2295
        %2297 = vadd.xlane.f32.xlu0 %v2266
        %v2298 = vpop.xlane.xlu0 %2297
        %2299 = vadd.xlane.f32.xlu0 %v2268
        %v2300 = vpop.xlane.xlu0 %2299
        %2301 = vadd.xlane.f32.xlu0 %v2270
        %v2302 = vpop.xlane.xlu0 %2301
        %2303 = vadd.xlane.f32.xlu0 %v2272
        %v2304 = vpop.xlane.xlu0 %2303
        %2305 = vadd.xlane.f32.xlu0 %v2274
        %v2306 = vpop.xlane.xlu0 %2305
        %2307 = vadd.xlane.f32.xlu0 %v2276
        %v2308 = vpop.xlane.xlu0 %2307
        %2309 = vadd.xlane.f32.xlu0 %v2278
        %v2310 = vpop.xlane.xlu0 %2309
        %2311 = vadd.xlane.f32.xlu0 %v2280
        %v2312 = vpop.xlane.xlu0 %2311
        %2313 = vadd.xlane.f32.xlu0 %v2282
        %v2314 = vpop.xlane.xlu0 %2313
        %2315 = vadd.xlane.f32.xlu0 %v2284
        %v2316 = vpop.xlane.xlu0 %2315
        %2317 = vadd.xlane.f32.xlu0 %v2286
        %v2318 = vpop.xlane.xlu0 %2317
        %2319 = vadd.xlane.f32.xlu0 %v2288
        %v2320 = vpop.xlane.xlu0 %2319
        %2321 = vadd.xlane.f32.xlu0 %v2290
        %v2322 = vpop.xlane.xlu0 %2321
        %v2323 = vrcp.pop %v2292
        %v2324 = vrcp.pop %v2294
        %v2325 = vrcp.pop %v2296
        %v2326 = vrcp.pop %v2298
        %v2327 = vrcp.pop %v2300
        %v2328 = vrcp.pop %v2302
        %v2329 = vrcp.pop %v2304
        %v2330 = vrcp.pop %v2306
        %v2331 = vrcp.pop %v2308
        %v2332 = vrcp.pop %v2310
        %v2333 = vrcp.pop %v2312
        %v2334 = vrcp.pop %v2314
        %v2335 = vrcp.pop %v2316
        %v2336 = vrcp.pop %v2318
        %v2337 = vrcp.pop %v2320
        %v2338 = vrcp.pop %v2322
        %v2339 = vmul.f32 %v2260, %v2323
        %v2340 = vmul.f32 %v2262, %v2324
        %v2341 = vmul.f32 %v2264, %v2325
        %v2342 = vmul.f32 %v2266, %v2326
        %v2343 = vmul.f32 %v2268, %v2327
        %v2344 = vmul.f32 %v2270, %v2328
        %v2345 = vmul.f32 %v2272, %v2329
        %v2346 = vmul.f32 %v2274, %v2330
        %v2347 = vmul.f32 %v2276, %v2331
        %v2348 = vmul.f32 %v2278, %v2332
        %v2349 = vmul.f32 %v2280, %v2333
        %v2350 = vmul.f32 %v2282, %v2334
        %v2351 = vmul.f32 %v2284, %v2335
        %v2352 = vmul.f32 %v2286, %v2336
        %v2353 = vmul.f32 %v2288, %v2337
        %v2354 = vmul.f32 %v2290, %v2338
        %v2355 = vpack.c.bf16 %v2340, %v2339
        %v2356 = vpack.c.bf16 %v2342, %v2341
        %v2357 = vpack.c.bf16 %v2344, %v2343
        %v2358 = vpack.c.bf16 %v2346, %v2345
        %v2359 = vpack.c.bf16 %v2348, %v2347
        %v2360 = vpack.c.bf16 %v2350, %v2349
        %v2361 = vpack.c.bf16 %v2352, %v2351
        %v2362 = vpack.c.bf16 %v2354, %v2353
        %v2363 = vpack.c.bf16 %v2023, %v2020
        %v2364 = vpack.c.bf16 %v2031, %v2028
        %v2365 = vpack.c.bf16 %v2039, %v2036
        %v2366 = vpack.c.bf16 %v2047, %v2044
        %v2367 = vpack.c.bf16 %v2055, %v2052
        %v2368 = vpack.c.bf16 %v2063, %v2060
        %v2369 = vpack.c.bf16 %v2071, %v2068
        %v2370 = vpack.c.bf16 %v2079, %v2076
        %2371 = vmatprep.subr.bf16.mxu0 0
        %2372 = vmatpush1.bf16.msra.mxu0 %v2370
        %2373 = vmatprep.subr.bf16.mxu0 0
        %2374 = vmatpush1.bf16.msra.mxu0 %v2369
        %2375 = vmatprep.subr.bf16.mxu0 0
        %2376 = vmatpush1.bf16.msra.mxu0 %v2368
        %2377 = vmatprep.subr.bf16.mxu0 0
        %2378 = vmatpush1.bf16.msra.mxu0 %v2367
        %2379 = vmatprep.subr.bf16.mxu0 0
        %2380 = vmatpush1.bf16.msra.mxu0 %v2366
        %2381 = vmatprep.subr.bf16.mxu0 0
        %2382 = vmatpush1.bf16.msra.mxu0 %v2365
        %2383 = vmatprep.subr.bf16.mxu0 0
        %2384 = vmatpush1.bf16.msra.mxu0 %v2364
        %2385 = vmatprep.subr.bf16.mxu0 0
        %2386 = vmatpush1.bf16.msra.mxu0 %v2363
        %2387 = vmatprep.subr.bf16.mxu0 0
        %2388 = vmatpush2.bf16.msra.mxu0 0
        %2389 = vmatprep.subr.bf16.mxu0 0
        %2390 = vmatpush2.bf16.msra.mxu0 0
        %2391 = vmatprep.subr.bf16.mxu0 0
        %2392 = vmatpush2.bf16.msra.mxu0 0
        %2393 = vmatprep.subr.bf16.mxu0 0
        %2394 = vmatpush2.bf16.msra.mxu0 0
        %2395 = vmatprep.subr.bf16.mxu0 0
        %2396 = vmatpush2.bf16.msra.mxu0 0
        %2397 = vmatprep.subr.bf16.mxu0 0
        %2398 = vmatpush2.bf16.msra.mxu0 0
        %2399 = vmatprep.subr.bf16.mxu0 0
        %2400 = vmatpush2.bf16.msra.mxu0 0
        %2401 = vmatprep.subr.bf16.mxu0 0
        %2402 = vmatpush2.bf16.msra.mxu0 0
        %2403 = vmatprep.mubr.bf16.mxu0 0
        %2404 = vmatmul.mubr.bf16.gmra.mxu0 %v2355
        %v2405 = vpop.f32.mrf.mxu0
        %v2406 = vadd.f32 0.0, %v2405
        %v2407 = vpop.f32.mrf.mxu0
        %v2408 = vpop.f32.mrf.mxu0
        %v2409 = vadd.f32 0.0, %v2408
        %v2410 = vpop.f32.mrf.mxu0
        %2411 = vmatprep.mubr.bf16.mxu0 0
        %2412 = vmatmul.mubr.bf16.gmra.mxu0 %v2356
        %v2413 = vpop.f32.mrf.mxu0
        %v2414 = vadd.f32 0.0, %v2413
        %v2415 = vpop.f32.mrf.mxu0
        %v2416 = vpop.f32.mrf.mxu0
        %v2417 = vadd.f32 0.0, %v2416
        %v2418 = vpop.f32.mrf.mxu0
        %2419 = vmatprep.mubr.bf16.mxu0 0
        %2420 = vmatmul.mubr.bf16.gmra.mxu0 %v2357
        %v2421 = vpop.f32.mrf.mxu0
        %v2422 = vadd.f32 0.0, %v2421
        %v2423 = vpop.f32.mrf.mxu0
        %v2424 = vpop.f32.mrf.mxu0
        %v2425 = vadd.f32 0.0, %v2424
        %v2426 = vpop.f32.mrf.mxu0
        %2427 = vmatprep.mubr.bf16.mxu0 0
        %2428 = vmatmul.mubr.bf16.gmra.mxu0 %v2358
        %v2429 = vpop.f32.mrf.mxu0
        %v2430 = vadd.f32 0.0, %v2429
        %v2431 = vpop.f32.mrf.mxu0
        %v2432 = vpop.f32.mrf.mxu0
        %v2433 = vadd.f32 0.0, %v2432
        %v2434 = vpop.f32.mrf.mxu0
        %2435 = vmatprep.mubr.bf16.mxu0 0
        %2436 = vmatmul.mubr.bf16.gmra.mxu0 %v2359
        %v2437 = vpop.f32.mrf.mxu0
        %v2438 = vadd.f32 0.0, %v2437
        %v2439 = vpop.f32.mrf.mxu0
        %v2440 = vpop.f32.mrf.mxu0
        %v2441 = vadd.f32 0.0, %v2440
        %v2442 = vpop.f32.mrf.mxu0
        %2443 = vmatprep.mubr.bf16.mxu0 0
        %2444 = vmatmul.mubr.bf16.gmra.mxu0 %v2360
        %v2445 = vpop.f32.mrf.mxu0
        %v2446 = vadd.f32 0.0, %v2445
        %v2447 = vpop.f32.mrf.mxu0
        %v2448 = vpop.f32.mrf.mxu0
        %v2449 = vadd.f32 0.0, %v2448
        %v2450 = vpop.f32.mrf.mxu0
        %2451 = vmatprep.mubr.bf16.mxu0 0
        %2452 = vmatmul.mubr.bf16.gmra.mxu0 %v2361
        %v2453 = vpop.f32.mrf.mxu0
        %v2454 = vadd.f32 0.0, %v2453
        %v2455 = vpop.f32.mrf.mxu0
        %v2456 = vpop.f32.mrf.mxu0
        %v2457 = vadd.f32 0.0, %v2456
        %v2458 = vpop.f32.mrf.mxu0
        %2459 = vmatprep.mubr.bf16.mxu0 0
        %2460 = vmatmul.mubr.bf16.gmra.mxu0 %v2362
        %v2461 = vpop.f32.mrf.mxu0
        %v2462 = vadd.f32 0.0, %v2461
        %v2463 = vpop.f32.mrf.mxu0
        %v2464 = vpop.f32.mrf.mxu0
        %v2465 = vadd.f32 0.0, %v2464
        %v2466 = vpop.f32.mrf.mxu0
        %2467 = vdwg.mxu0
        %v2468 = vpack.c.bf16 %v2409, %v2406
        %v2469 = vpack.c.bf16 %v2417, %v2414
        %v2470 = vpack.c.bf16 %v2425, %v2422
        %v2471 = vpack.c.bf16 %v2433, %v2430
        %v2472 = vpack.c.bf16 %v2441, %v2438
        %v2473 = vpack.c.bf16 %v2449, %v2446
        %v2474 = vpack.c.bf16 %v2457, %v2454
        %v2475 = vpack.c.bf16 %v2465, %v2462
        %v2484 = vunpack.c.l.b16 %v2468
        %v2485 = vunpack.c.h.b16 %v2468
        %v2486 = vunpack.c.l.b16 %v2469
        %v2487 = vunpack.c.h.b16 %v2469
        %v2488 = vunpack.c.l.b16 %v2470
        %v2489 = vunpack.c.h.b16 %v2470
        %v2490 = vunpack.c.l.b16 %v2471
        %v2491 = vunpack.c.h.b16 %v2471
        %v2492 = vunpack.c.l.b16 %v2472
        %v2493 = vunpack.c.h.b16 %v2472
        %v2494 = vunpack.c.l.b16 %v2473
        %v2495 = vunpack.c.h.b16 %v2473
        %v2496 = vunpack.c.l.b16 %v2474
        %v2497 = vunpack.c.h.b16 %v2474
        %v2498 = vunpack.c.l.b16 %v2475
        %v2499 = vunpack.c.h.b16 %v2475
        %v2500 = vpack.c.b16 %v2484, %v2484
        %v2501 = vpack.c.b16 %v2485, %v2485
        %v2502 = vpack.c.b16 %v2486, %v2486
        %v2503 = vpack.c.b16 %v2487, %v2487
        %v2504 = vpack.c.b16 %v2488, %v2488
        %v2505 = vpack.c.b16 %v2489, %v2489
        %v2506 = vpack.c.b16 %v2490, %v2490
        %v2507 = vpack.c.b16 %v2491, %v2491
        %v2508 = vpack.c.b16 %v2492, %v2492
        %v2509 = vpack.c.b16 %v2493, %v2493
        %v2510 = vpack.c.b16 %v2494, %v2494
        %v2511 = vpack.c.b16 %v2495, %v2495
        %v2512 = vpack.c.b16 %v2496, %v2496
        %v2513 = vpack.c.b16 %v2497, %v2497
        %v2514 = vpack.c.b16 %v2498, %v2498
        %v2515 = vpack.c.b16 %v2499, %v2499
        %2532 = vst [vmem:[#allocation3 + $0x4] sm:$0xf] %v2500
        %2533 = vst [vmem:[#allocation3 + $0xc] sm:$0xf] %v2501
        %2534 = vst [vmem:[#allocation3 + $0x14] sm:$0xf] %v2502
        %2535 = vst [vmem:[#allocation3 + $0x1c] sm:$0xf] %v2503
        %2536 = vst [vmem:[#allocation3 + $0x24] sm:$0xf] %v2504
        %2537 = vst [vmem:[#allocation3 + $0x2c] sm:$0xf] %v2505
        %2538 = vst [vmem:[#allocation3 + $0x34] sm:$0xf] %v2506
        %2539 = vst [vmem:[#allocation3 + $0x3c] sm:$0xf] %v2507
        %2540 = vst [vmem:[#allocation3 + $0x44] sm:$0xf] %v2508
        %2541 = vst [vmem:[#allocation3 + $0x4c] sm:$0xf] %v2509
        %2542 = vst [vmem:[#allocation3 + $0x54] sm:$0xf] %v2510
        %2543 = vst [vmem:[#allocation3 + $0x5c] sm:$0xf] %v2511
        %2544 = vst [vmem:[#allocation3 + $0x64] sm:$0xf] %v2512
        %2545 = vst [vmem:[#allocation3 + $0x6c] sm:$0xf] %v2513
        %2546 = vst [vmem:[#allocation3 + $0x74] sm:$0xf] %v2514
        %2547 = vst [vmem:[#allocation3 + $0x7c] sm:$0xf] %v2515
        %v2548 = vld [vmem:[#allocation3] sm:$0xff]
        %v2549 = vld [vmem:[#allocation3 + $0x8] sm:$0xff]
        %v2550 = vld [vmem:[#allocation3 + $0x10] sm:$0xff]
        %v2551 = vld [vmem:[#allocation3 + $0x18] sm:$0xff]
        %v2552 = vld [vmem:[#allocation3 + $0x20] sm:$0xff]
        %v2553 = vld [vmem:[#allocation3 + $0x28] sm:$0xff]
        %v2554 = vld [vmem:[#allocation3 + $0x30] sm:$0xff]
        %v2555 = vld [vmem:[#allocation3 + $0x38] sm:$0xff]
        %v2556 = vld [vmem:[#allocation3 + $0x40] sm:$0xff]
        %v2557 = vld [vmem:[#allocation3 + $0x48] sm:$0xff]
        %v2558 = vld [vmem:[#allocation3 + $0x50] sm:$0xff]
        %v2559 = vld [vmem:[#allocation3 + $0x58] sm:$0xff]
        %v2560 = vld [vmem:[#allocation3 + $0x60] sm:$0xff]
        %v2561 = vld [vmem:[#allocation3 + $0x68] sm:$0xff]
        %v2562 = vld [vmem:[#allocation3 + $0x70] sm:$0xff]
        %v2563 = vld [vmem:[#allocation3 + $0x78] sm:$0xff]
        %v2564 = vld [vmem:[#allocation9] sm:$0xff]
        %v2565 = vld [vmem:[#allocation9 + $0x8] sm:$0xff]
        %v2566 = vld [vmem:[#allocation9 + $0x10] sm:$0xff]
        %v2567 = vld [vmem:[#allocation9 + $0x18] sm:$0xff]
        %v2568 = vld [vmem:[#allocation9 + $0x20] sm:$0xff]
        %v2569 = vld [vmem:[#allocation9 + $0x28] sm:$0xff]
        %v2570 = vld [vmem:[#allocation9 + $0x30] sm:$0xff]
        %v2571 = vld [vmem:[#allocation9 + $0x38] sm:$0xff]
        %v2572 = vld [vmem:[#allocation9 + $0x40] sm:$0xff]
        %v2573 = vld [vmem:[#allocation9 + $0x48] sm:$0xff]
        %v2574 = vld [vmem:[#allocation9 + $0x50] sm:$0xff]
        %v2575 = vld [vmem:[#allocation9 + $0x58] sm:$0xff]
        %v2576 = vld [vmem:[#allocation9 + $0x60] sm:$0xff]
        %v2577 = vld [vmem:[#allocation9 + $0x68] sm:$0xff]
        %v2578 = vld [vmem:[#allocation9 + $0x70] sm:$0xff]
        %v2579 = vld [vmem:[#allocation9 + $0x78] sm:$0xff]
        %v2580 = vld [vmem:[#allocation9 + $0x80] sm:$0xff]
        %v2581 = vld [vmem:[#allocation9 + $0x88] sm:$0xff]
        %v2582 = vld [vmem:[#allocation9 + $0x90] sm:$0xff]
        %v2583 = vld [vmem:[#allocation9 + $0x98] sm:$0xff]
        %v2584 = vld [vmem:[#allocation9 + $0xa0] sm:$0xff]
        %v2585 = vld [vmem:[#allocation9 + $0xa8] sm:$0xff]
        %v2586 = vld [vmem:[#allocation9 + $0xb0] sm:$0xff]
        %v2587 = vld [vmem:[#allocation9 + $0xb8] sm:$0xff]
        %v2588 = vld [vmem:[#allocation9 + $0xc0] sm:$0xff]
        %v2589 = vld [vmem:[#allocation9 + $0xc8] sm:$0xff]
        %v2590 = vld [vmem:[#allocation9 + $0xd0] sm:$0xff]
        %v2591 = vld [vmem:[#allocation9 + $0xd8] sm:$0xff]
        %v2592 = vld [vmem:[#allocation9 + $0xe0] sm:$0xff]
        %v2593 = vld [vmem:[#allocation9 + $0xe8] sm:$0xff]
        %v2594 = vld [vmem:[#allocation9 + $0xf0] sm:$0xff]
        %v2595 = vld [vmem:[#allocation9 + $0xf8] sm:$0xff]
        %v2596 = vld [vmem:[%s4] sm:$0x3]
        %v2598 = vlaneseq
        %v2599 = vshrl.u32 %v2598, 7
        %v2600 = vsub.s32 0, %v2599
        %v2601 = vrot.slane %v2596, %v2600
        %v2602 = vlaneseq
        %v2603 = vshrl.u32 %v2602, 7
        %v2604 = vsub.s32 1, %v2603
        %v2605 = vrot.slane %v2596, %v2604
        %v2624 = vunpack.c.l.b16 %v2548
        %v2625 = vunpack.c.h.b16 %v2548
        %v2626 = vunpack.c.l.b16 %v2549
        %v2627 = vunpack.c.h.b16 %v2549
        %v2628 = vunpack.c.l.b16 %v2550
        %v2629 = vunpack.c.h.b16 %v2550
        %v2630 = vunpack.c.l.b16 %v2551
        %v2631 = vunpack.c.h.b16 %v2551
        %v2632 = vunpack.c.l.b16 %v2552
        %v2633 = vunpack.c.h.b16 %v2552
        %v2634 = vunpack.c.l.b16 %v2553
        %v2635 = vunpack.c.h.b16 %v2553
        %v2636 = vunpack.c.l.b16 %v2554
        %v2637 = vunpack.c.h.b16 %v2554
        %v2638 = vunpack.c.l.b16 %v2555
        %v2639 = vunpack.c.h.b16 %v2555
        %v2640 = vunpack.c.l.b16 %v2556
        %v2641 = vunpack.c.h.b16 %v2556
        %v2642 = vunpack.c.l.b16 %v2557
        %v2643 = vunpack.c.h.b16 %v2557
        %v2644 = vunpack.c.l.b16 %v2558
        %v2645 = vunpack.c.h.b16 %v2558
        %v2646 = vunpack.c.l.b16 %v2559
        %v2647 = vunpack.c.h.b16 %v2559
        %v2648 = vunpack.c.l.b16 %v2560
        %v2649 = vunpack.c.h.b16 %v2560
        %v2650 = vunpack.c.l.b16 %v2561
        %v2651 = vunpack.c.h.b16 %v2561
        %v2652 = vunpack.c.l.b16 %v2562
        %v2653 = vunpack.c.h.b16 %v2562
        %v2654 = vunpack.c.l.b16 %v2563
        %v2655 = vunpack.c.h.b16 %v2563
        %v2656 = vpack.c.b16 %v2626, %v2624
        %v2657 = vpack.c.b16 %v2627, %v2625
        %v2658 = vpack.c.b16 %v2630, %v2628
        %v2659 = vpack.c.b16 %v2631, %v2629
        %v2660 = vpack.c.b16 %v2634, %v2632
        %v2661 = vpack.c.b16 %v2635, %v2633
        %v2662 = vpack.c.b16 %v2638, %v2636
        %v2663 = vpack.c.b16 %v2639, %v2637
        %v2664 = vpack.c.b16 %v2642, %v2640
        %v2665 = vpack.c.b16 %v2643, %v2641
        %v2666 = vpack.c.b16 %v2646, %v2644
        %v2667 = vpack.c.b16 %v2647, %v2645
        %v2668 = vpack.c.b16 %v2650, %v2648
        %v2669 = vpack.c.b16 %v2651, %v2649
        %v2670 = vpack.c.b16 %v2654, %v2652
        %v2671 = vpack.c.b16 %v2655, %v2653
        %v2720 = vunpack.c.l.b16 %v2564
        %v2721 = vunpack.c.h.b16 %v2564
        %v2722 = vunpack.c.l.b16 %v2565
        %v2723 = vunpack.c.h.b16 %v2565
        %v2724 = vunpack.c.l.b16 %v2566
        %v2725 = vunpack.c.h.b16 %v2566
        %v2726 = vunpack.c.l.b16 %v2567
        %v2727 = vunpack.c.h.b16 %v2567
        %v2728 = vunpack.c.l.b16 %v2568
        %v2729 = vunpack.c.h.b16 %v2568
        %v2730 = vunpack.c.l.b16 %v2569
        %v2731 = vunpack.c.h.b16 %v2569
        %v2732 = vunpack.c.l.b16 %v2570
        %v2733 = vunpack.c.h.b16 %v2570
        %v2734 = vunpack.c.l.b16 %v2571
        %v2735 = vunpack.c.h.b16 %v2571
        %v2736 = vunpack.c.l.b16 %v2572
        %v2737 = vunpack.c.h.b16 %v2572
        %v2738 = vunpack.c.l.b16 %v2573
        %v2739 = vunpack.c.h.b16 %v2573
        %v2740 = vunpack.c.l.b16 %v2574
        %v2741 = vunpack.c.h.b16 %v2574
        %v2742 = vunpack.c.l.b16 %v2575
        %v2743 = vunpack.c.h.b16 %v2575
        %v2744 = vunpack.c.l.b16 %v2576
        %v2745 = vunpack.c.h.b16 %v2576
        %v2746 = vunpack.c.l.b16 %v2577
        %v2747 = vunpack.c.h.b16 %v2577
        %v2748 = vunpack.c.l.b16 %v2578
        %v2749 = vunpack.c.h.b16 %v2578
        %v2750 = vunpack.c.l.b16 %v2579
        %v2751 = vunpack.c.h.b16 %v2579
        %v2752 = vunpack.c.l.b16 %v2580
        %v2753 = vunpack.c.h.b16 %v2580
        %v2754 = vunpack.c.l.b16 %v2581
        %v2755 = vunpack.c.h.b16 %v2581
        %v2756 = vunpack.c.l.b16 %v2582
        %v2757 = vunpack.c.h.b16 %v2582
        %v2758 = vunpack.c.l.b16 %v2583
        %v2759 = vunpack.c.h.b16 %v2583
        %v2760 = vunpack.c.l.b16 %v2584
        %v2761 = vunpack.c.h.b16 %v2584
        %v2762 = vunpack.c.l.b16 %v2585
        %v2763 = vunpack.c.h.b16 %v2585
        %v2764 = vunpack.c.l.b16 %v2586
        %v2765 = vunpack.c.h.b16 %v2586
        %v2766 = vunpack.c.l.b16 %v2587
        %v2767 = vunpack.c.h.b16 %v2587
        %v2768 = vunpack.c.l.b16 %v2588
        %v2769 = vunpack.c.h.b16 %v2588
        %v2770 = vunpack.c.l.b16 %v2589
        %v2771 = vunpack.c.h.b16 %v2589
        %v2772 = vunpack.c.l.b16 %v2590
        %v2773 = vunpack.c.h.b16 %v2590
        %v2774 = vunpack.c.l.b16 %v2591
        %v2775 = vunpack.c.h.b16 %v2591
        %v2776 = vunpack.c.l.b16 %v2592
        %v2777 = vunpack.c.h.b16 %v2592
        %v2778 = vunpack.c.l.b16 %v2593
        %v2779 = vunpack.c.h.b16 %v2593
        %v2780 = vunpack.c.l.b16 %v2594
        %v2781 = vunpack.c.h.b16 %v2594
        %v2782 = vunpack.c.l.b16 %v2595
        %v2783 = vunpack.c.h.b16 %v2595
        %v2784 = vpack.c.b16 %v2722, %v2720
        %v2785 = vpack.c.b16 %v2723, %v2721
        %v2786 = vpack.c.b16 %v2726, %v2724
        %v2787 = vpack.c.b16 %v2727, %v2725
        %v2788 = vpack.c.b16 %v2730, %v2728
        %v2789 = vpack.c.b16 %v2731, %v2729
        %v2790 = vpack.c.b16 %v2734, %v2732
        %v2791 = vpack.c.b16 %v2735, %v2733
        %v2792 = vpack.c.b16 %v2738, %v2736
        %v2793 = vpack.c.b16 %v2739, %v2737
        %v2794 = vpack.c.b16 %v2742, %v2740
        %v2795 = vpack.c.b16 %v2743, %v2741
        %v2796 = vpack.c.b16 %v2746, %v2744
        %v2797 = vpack.c.b16 %v2747, %v2745
        %v2798 = vpack.c.b16 %v2750, %v2748
        %v2799 = vpack.c.b16 %v2751, %v2749
        %v2800 = vpack.c.b16 %v2754, %v2752
        %v2801 = vpack.c.b16 %v2755, %v2753
        %v2802 = vpack.c.b16 %v2758, %v2756
        %v2803 = vpack.c.b16 %v2759, %v2757
        %v2804 = vpack.c.b16 %v2762, %v2760
        %v2805 = vpack.c.b16 %v2763, %v2761
        %v2806 = vpack.c.b16 %v2766, %v2764
        %v2807 = vpack.c.b16 %v2767, %v2765
        %v2808 = vpack.c.b16 %v2770, %v2768
        %v2809 = vpack.c.b16 %v2771, %v2769
        %v2810 = vpack.c.b16 %v2774, %v2772
        %v2811 = vpack.c.b16 %v2775, %v2773
        %v2812 = vpack.c.b16 %v2778, %v2776
        %v2813 = vpack.c.b16 %v2779, %v2777
        %v2814 = vpack.c.b16 %v2782, %v2780
        %v2815 = vpack.c.b16 %v2783, %v2781
        %2848 = vmatprep.subr.bf16.mxu0 %v2799
        %2849 = vmatpush1.bf16.msra.mxu0 %v2798
        %2850 = vmatprep.subr.bf16.mxu0 %v2797
        %2851 = vmatpush1.bf16.msra.mxu0 %v2796
        %2852 = vmatprep.subr.bf16.mxu0 %v2795
        %2853 = vmatpush1.bf16.msra.mxu0 %v2794
        %2854 = vmatprep.subr.bf16.mxu0 %v2793
        %2855 = vmatpush1.bf16.msra.mxu0 %v2792
        %2856 = vmatprep.subr.bf16.mxu0 %v2791
        %2857 = vmatpush1.bf16.msra.mxu0 %v2790
        %2858 = vmatprep.subr.bf16.mxu0 %v2789
        %2859 = vmatpush1.bf16.msra.mxu0 %v2788
        %2860 = vmatprep.subr.bf16.mxu0 %v2787
        %2861 = vmatpush1.bf16.msra.mxu0 %v2786
        %2862 = vmatprep.subr.bf16.mxu0 %v2785
        %2863 = vmatpush1.bf16.msra.mxu0 %v2784
        %2864 = vmatprep.subr.bf16.mxu0 %v2815
        %2865 = vmatpush2.bf16.msra.mxu0 %v2814
        %2866 = vmatprep.subr.bf16.mxu0 %v2813
        %2867 = vmatpush2.bf16.msra.mxu0 %v2812
        %2868 = vmatprep.subr.bf16.mxu0 %v2811
        %2869 = vmatpush2.bf16.msra.mxu0 %v2810
        %2870 = vmatprep.subr.bf16.mxu0 %v2809
        %2871 = vmatpush2.bf16.msra.mxu0 %v2808
        %2872 = vmatprep.subr.bf16.mxu0 %v2807
        %2873 = vmatpush2.bf16.msra.mxu0 %v2806
        %2874 = vmatprep.subr.bf16.mxu0 %v2805
        %2875 = vmatpush2.bf16.msra.mxu0 %v2804
        %2876 = vmatprep.subr.bf16.mxu0 %v2803
        %2877 = vmatpush2.bf16.msra.mxu0 %v2802
        %2878 = vmatprep.subr.bf16.mxu0 %v2801
        %2879 = vmatpush2.bf16.msra.mxu0 %v2800
        %2880 = vmatprep.mubr.bf16.mxu0 %v2657
        %2881 = vmatmul.mubr.bf16.gmra.mxu0 %v2656
        %v2882 = vpop.f32.mrf.mxu0
        %v2883 = vadd.f32 %v2601, %v2882
        %v2884 = vpop.f32.mrf.mxu0
        %v2885 = vadd.f32 %v2605, %v2884
        %v2886 = vpop.f32.mrf.mxu0
        %v2887 = vadd.f32 %v2601, %v2886
        %v2888 = vpop.f32.mrf.mxu0
        %v2889 = vadd.f32 %v2605, %v2888
        %2890 = vmatprep.mubr.bf16.mxu0 %v2659
        %2891 = vmatmul.mubr.bf16.gmra.mxu0 %v2658
        %v2892 = vpop.f32.mrf.mxu0
        %v2893 = vadd.f32 %v2601, %v2892
        %v2894 = vpop.f32.mrf.mxu0
        %v2895 = vadd.f32 %v2605, %v2894
        %v2896 = vpop.f32.mrf.mxu0
        %v2897 = vadd.f32 %v2601, %v2896
        %v2898 = vpop.f32.mrf.mxu0
        %v2899 = vadd.f32 %v2605, %v2898
        %2900 = vmatprep.mubr.bf16.mxu0 %v2661
        %2901 = vmatmul.mubr.bf16.gmra.mxu0 %v2660
        %v2902 = vpop.f32.mrf.mxu0
        %v2903 = vadd.f32 %v2601, %v2902
        %v2904 = vpop.f32.mrf.mxu0
        %v2905 = vadd.f32 %v2605, %v2904
        %v2906 = vpop.f32.mrf.mxu0
        %v2907 = vadd.f32 %v2601, %v2906
        %v2908 = vpop.f32.mrf.mxu0
        %v2909 = vadd.f32 %v2605, %v2908
        %2910 = vmatprep.mubr.bf16.mxu0 %v2663
        %2911 = vmatmul.mubr.bf16.gmra.mxu0 %v2662
        %v2912 = vpop.f32.mrf.mxu0
        %v2913 = vadd.f32 %v2601, %v2912
        %v2914 = vpop.f32.mrf.mxu0
        %v2915 = vadd.f32 %v2605, %v2914
        %v2916 = vpop.f32.mrf.mxu0
        %v2917 = vadd.f32 %v2601, %v2916
        %v2918 = vpop.f32.mrf.mxu0
        %v2919 = vadd.f32 %v2605, %v2918
        %2920 = vmatprep.mubr.bf16.mxu0 %v2665
        %2921 = vmatmul.mubr.bf16.gmra.mxu0 %v2664
        %v2922 = vpop.f32.mrf.mxu0
        %v2923 = vadd.f32 %v2601, %v2922
        %v2924 = vpop.f32.mrf.mxu0
        %v2925 = vadd.f32 %v2605, %v2924
        %v2926 = vpop.f32.mrf.mxu0
        %v2927 = vadd.f32 %v2601, %v2926
        %v2928 = vpop.f32.mrf.mxu0
        %v2929 = vadd.f32 %v2605, %v2928
        %2930 = vmatprep.mubr.bf16.mxu0 %v2667
        %2931 = vmatmul.mubr.bf16.gmra.mxu0 %v2666
        %v2932 = vpop.f32.mrf.mxu0
        %v2933 = vadd.f32 %v2601, %v2932
        %v2934 = vpop.f32.mrf.mxu0
        %v2935 = vadd.f32 %v2605, %v2934
        %v2936 = vpop.f32.mrf.mxu0
        %v2937 = vadd.f32 %v2601, %v2936
        %v2938 = vpop.f32.mrf.mxu0
        %v2939 = vadd.f32 %v2605, %v2938
        %2940 = vmatprep.mubr.bf16.mxu0 %v2669
        %2941 = vmatmul.mubr.bf16.gmra.mxu0 %v2668
        %v2942 = vpop.f32.mrf.mxu0
        %v2943 = vadd.f32 %v2601, %v2942
        %v2944 = vpop.f32.mrf.mxu0
        %v2945 = vadd.f32 %v2605, %v2944
        %v2946 = vpop.f32.mrf.mxu0
        %v2947 = vadd.f32 %v2601, %v2946
        %v2948 = vpop.f32.mrf.mxu0
        %v2949 = vadd.f32 %v2605, %v2948
        %2950 = vmatprep.mubr.bf16.mxu0 %v2671
        %2951 = vmatmul.mubr.bf16.gmra.mxu0 %v2670
        %v2952 = vpop.f32.mrf.mxu0
        %v2953 = vadd.f32 %v2601, %v2952
        %v2954 = vpop.f32.mrf.mxu0
        %v2955 = vadd.f32 %v2605, %v2954
        %v2956 = vpop.f32.mrf.mxu0
        %v2957 = vadd.f32 %v2601, %v2956
        %v2958 = vpop.f32.mrf.mxu0
        %v2959 = vadd.f32 %v2605, %v2958
        %2960 = vdwg.mxu0
        %v2961 = vld [vmem:[%s492] sm:$0xff]
        %v2962 = vld [vmem:[%s492 + $0x8] sm:$0xff]
        %v2963 = vld [vmem:[%s492 + $0x10] sm:$0xff]
        %v2964 = vld [vmem:[%s492 + $0x18] sm:$0xff]
        %v2965 = vld [vmem:[%s492 + $0x20] sm:$0xff]
        %v2966 = vld [vmem:[%s492 + $0x28] sm:$0xff]
        %v2967 = vld [vmem:[%s492 + $0x30] sm:$0xff]
        %v2968 = vld [vmem:[%s492 + $0x38] sm:$0xff]
        %v2969 = vld [vmem:[%s492 + $0x40] sm:$0xff]
        %v2970 = vld [vmem:[%s492 + $0x48] sm:$0xff]
        %v2971 = vld [vmem:[%s492 + $0x50] sm:$0xff]
        %v2972 = vld [vmem:[%s492 + $0x58] sm:$0xff]
        %v2973 = vld [vmem:[%s492 + $0x60] sm:$0xff]
        %v2974 = vld [vmem:[%s492 + $0x68] sm:$0xff]
        %v2975 = vld [vmem:[%s492 + $0x70] sm:$0xff]
        %v2976 = vld [vmem:[%s492 + $0x78] sm:$0xff]
        %v2977 = vld [vmem:[%s492 + $0x80] sm:$0xff]
        %v2978 = vld [vmem:[%s492 + $0x88] sm:$0xff]
        %v2979 = vld [vmem:[%s492 + $0x90] sm:$0xff]
        %v2980 = vld [vmem:[%s492 + $0x98] sm:$0xff]
        %v2981 = vld [vmem:[%s492 + $0xa0] sm:$0xff]
        %v2982 = vld [vmem:[%s492 + $0xa8] sm:$0xff]
        %v2983 = vld [vmem:[%s492 + $0xb0] sm:$0xff]
        %v2984 = vld [vmem:[%s492 + $0xb8] sm:$0xff]
        %v2985 = vld [vmem:[%s492 + $0xc0] sm:$0xff]
        %v2986 = vld [vmem:[%s492 + $0xc8] sm:$0xff]
        %v2987 = vld [vmem:[%s492 + $0xd0] sm:$0xff]
        %v2988 = vld [vmem:[%s492 + $0xd8] sm:$0xff]
        %v2989 = vld [vmem:[%s492 + $0xe0] sm:$0xff]
        %v2990 = vld [vmem:[%s492 + $0xe8] sm:$0xff]
        %v2991 = vld [vmem:[%s492 + $0xf0] sm:$0xff]
        %v2992 = vld [vmem:[%s492 + $0xf8] sm:$0xff]
        %v2993 = vadd.f32 %v2883, %v2961
        %v2994 = vadd.f32 %v2885, %v2962
        %v2995 = vadd.f32 %v2887, %v2963
        %v2996 = vadd.f32 %v2889, %v2964
        %v2997 = vadd.f32 %v2893, %v2965
        %v2998 = vadd.f32 %v2895, %v2966
        %v2999 = vadd.f32 %v2897, %v2967
        %v3000 = vadd.f32 %v2899, %v2968
        %v3001 = vadd.f32 %v2903, %v2969
        %v3002 = vadd.f32 %v2905, %v2970
        %v3003 = vadd.f32 %v2907, %v2971
        %v3004 = vadd.f32 %v2909, %v2972
        %v3005 = vadd.f32 %v2913, %v2973
        %v3006 = vadd.f32 %v2915, %v2974
        %v3007 = vadd.f32 %v2917, %v2975
        %v3008 = vadd.f32 %v2919, %v2976
        %v3009 = vadd.f32 %v2923, %v2977
        %v3010 = vadd.f32 %v2925, %v2978
        %v3011 = vadd.f32 %v2927, %v2979
        %v3012 = vadd.f32 %v2929, %v2980
        %v3013 = vadd.f32 %v2933, %v2981
        %v3014 = vadd.f32 %v2935, %v2982
        %v3015 = vadd.f32 %v2937, %v2983
        %v3016 = vadd.f32 %v2939, %v2984
        %v3017 = vadd.f32 %v2943, %v2985
        %v3018 = vadd.f32 %v2945, %v2986
        %v3019 = vadd.f32 %v2947, %v2987
        %v3020 = vadd.f32 %v2949, %v2988
        %v3021 = vadd.f32 %v2953, %v2989
        %v3022 = vadd.f32 %v2955, %v2990
        %v3023 = vadd.f32 %v2957, %v2991
        %v3024 = vadd.f32 %v2959, %v2992
        %v3025 = vadd.f32 %v2993, %v2994
        %3026 = vadd.xlane.f32.xlu0 %v3025
        %v3027 = vpop.xlane.xlu0 %3026
        %v3028 = vadd.f32 %v2995, %v2996
        %3029 = vadd.xlane.f32.xlu0 %v3028
        %v3030 = vpop.xlane.xlu0 %3029
        %v3031 = vadd.f32 %v2997, %v2998
        %3032 = vadd.xlane.f32.xlu0 %v3031
        %v3033 = vpop.xlane.xlu0 %3032
        %v3034 = vadd.f32 %v2999, %v3000
        %3035 = vadd.xlane.f32.xlu0 %v3034
        %v3036 = vpop.xlane.xlu0 %3035
        %v3037 = vadd.f32 %v3001, %v3002
        %3038 = vadd.xlane.f32.xlu0 %v3037
        %v3039 = vpop.xlane.xlu0 %3038
        %v3040 = vadd.f32 %v3003, %v3004
        %3041 = vadd.xlane.f32.xlu0 %v3040
        %v3042 = vpop.xlane.xlu0 %3041
        %v3043 = vadd.f32 %v3005, %v3006
        %3044 = vadd.xlane.f32.xlu0 %v3043
        %v3045 = vpop.xlane.xlu0 %3044
        %v3046 = vadd.f32 %v3007, %v3008
        %3047 = vadd.xlane.f32.xlu0 %v3046
        %v3048 = vpop.xlane.xlu0 %3047
        %v3049 = vadd.f32 %v3009, %v3010
        %3050 = vadd.xlane.f32.xlu0 %v3049
        %v3051 = vpop.xlane.xlu0 %3050
        %v3052 = vadd.f32 %v3011, %v3012
        %3053 = vadd.xlane.f32.xlu0 %v3052
        %v3054 = vpop.xlane.xlu0 %3053
        %v3055 = vadd.f32 %v3013, %v3014
        %3056 = vadd.xlane.f32.xlu0 %v3055
        %v3057 = vpop.xlane.xlu0 %3056
        %v3058 = vadd.f32 %v3015, %v3016
        %3059 = vadd.xlane.f32.xlu0 %v3058
        %v3060 = vpop.xlane.xlu0 %3059
        %v3061 = vadd.f32 %v3017, %v3018
        %3062 = vadd.xlane.f32.xlu0 %v3061
        %v3063 = vpop.xlane.xlu0 %3062
        %v3064 = vadd.f32 %v3019, %v3020
        %3065 = vadd.xlane.f32.xlu0 %v3064
        %v3066 = vpop.xlane.xlu0 %3065
        %v3067 = vadd.f32 %v3021, %v3022
        %3068 = vadd.xlane.f32.xlu0 %v3067
        %v3069 = vpop.xlane.xlu0 %3068
        %v3070 = vadd.f32 %v3023, %v3024
        %3071 = vadd.xlane.f32.xlu0 %v3070
        %v3072 = vpop.xlane.xlu0 %3071
        %v3073 = vrcp.pop 256.0
        %v3074 = vmul.f32 %v3027, %v3073
        %v3075 = vmul.f32 %v3030, %v3073
        %v3076 = vmul.f32 %v3033, %v3073
        %v3077 = vmul.f32 %v3036, %v3073
        %v3078 = vmul.f32 %v3039, %v3073
        %v3079 = vmul.f32 %v3042, %v3073
        %v3080 = vmul.f32 %v3045, %v3073
        %v3081 = vmul.f32 %v3048, %v3073
        %v3082 = vmul.f32 %v3051, %v3073
        %v3083 = vmul.f32 %v3054, %v3073
        %v3084 = vmul.f32 %v3057, %v3073
        %v3085 = vmul.f32 %v3060, %v3073
        %v3086 = vmul.f32 %v3063, %v3073
        %v3087 = vmul.f32 %v3066, %v3073
        %v3088 = vmul.f32 %v3069, %v3073
        %v3089 = vmul.f32 %v3072, %v3073
        %v3090 = vsub.f32 %v2993, %v3074
        %v3091 = vsub.f32 %v2994, %v3074
        %v3092 = vsub.f32 %v2995, %v3075
        %v3093 = vsub.f32 %v2996, %v3075
        %v3094 = vsub.f32 %v2997, %v3076
        %v3095 = vsub.f32 %v2998, %v3076
        %v3096 = vsub.f32 %v2999, %v3077
        %v3097 = vsub.f32 %v3000, %v3077
        %v3098 = vsub.f32 %v3001, %v3078
        %v3099 = vsub.f32 %v3002, %v3078
        %v3100 = vsub.f32 %v3003, %v3079
        %v3101 = vsub.f32 %v3004, %v3079
        %v3102 = vsub.f32 %v3005, %v3080
        %v3103 = vsub.f32 %v3006, %v3080
        %v3104 = vsub.f32 %v3007, %v3081
        %v3105 = vsub.f32 %v3008, %v3081
        %v3106 = vsub.f32 %v3009, %v3082
        %v3107 = vsub.f32 %v3010, %v3082
        %v3108 = vsub.f32 %v3011, %v3083
        %v3109 = vsub.f32 %v3012, %v3083
        %v3110 = vsub.f32 %v3013, %v3084
        %v3111 = vsub.f32 %v3014, %v3084
        %v3112 = vsub.f32 %v3015, %v3085
        %v3113 = vsub.f32 %v3016, %v3085
        %v3114 = vsub.f32 %v3017, %v3086
        %v3115 = vsub.f32 %v3018, %v3086
        %v3116 = vsub.f32 %v3019, %v3087
        %v3117 = vsub.f32 %v3020, %v3087
        %v3118 = vsub.f32 %v3021, %v3088
        %v3119 = vsub.f32 %v3022, %v3088
        %v3120 = vsub.f32 %v3023, %v3089
        %v3121 = vsub.f32 %v3024, %v3089
        %v3122 = vmul.f32 %v3090, %v3090
        %v3123 = vmul.f32 %v3091, %v3091
        %v3124 = vmul.f32 %v3092, %v3092
        %v3125 = vmul.f32 %v3093, %v3093
        %v3126 = vmul.f32 %v3094, %v3094
        %v3127 = vmul.f32 %v3095, %v3095
        %v3128 = vmul.f32 %v3096, %v3096
        %v3129 = vmul.f32 %v3097, %v3097
        %v3130 = vmul.f32 %v3098, %v3098
        %v3131 = vmul.f32 %v3099, %v3099
        %v3132 = vmul.f32 %v3100, %v3100
        %v3133 = vmul.f32 %v3101, %v3101
        %v3134 = vmul.f32 %v3102, %v3102
        %v3135 = vmul.f32 %v3103, %v3103
        %v3136 = vmul.f32 %v3104, %v3104
        %v3137 = vmul.f32 %v3105, %v3105
        %v3138 = vmul.f32 %v3106, %v3106
        %v3139 = vmul.f32 %v3107, %v3107
        %v3140 = vmul.f32 %v3108, %v3108
        %v3141 = vmul.f32 %v3109, %v3109
        %v3142 = vmul.f32 %v3110, %v3110
        %v3143 = vmul.f32 %v3111, %v3111
        %v3144 = vmul.f32 %v3112, %v3112
        %v3145 = vmul.f32 %v3113, %v3113
        %v3146 = vmul.f32 %v3114, %v3114
        %v3147 = vmul.f32 %v3115, %v3115
        %v3148 = vmul.f32 %v3116, %v3116
        %v3149 = vmul.f32 %v3117, %v3117
        %v3150 = vmul.f32 %v3118, %v3118
        %v3151 = vmul.f32 %v3119, %v3119
        %v3152 = vmul.f32 %v3120, %v3120
        %v3153 = vmul.f32 %v3121, %v3121
        %v3154 = vadd.f32 %v3122, %v3123
        %3155 = vadd.xlane.f32.xlu0 %v3154
        %v3156 = vpop.xlane.xlu0 %3155
        %v3157 = vadd.f32 %v3124, %v3125
        %3158 = vadd.xlane.f32.xlu0 %v3157
        %v3159 = vpop.xlane.xlu0 %3158
        %v3160 = vadd.f32 %v3126, %v3127
        %3161 = vadd.xlane.f32.xlu0 %v3160
        %v3162 = vpop.xlane.xlu0 %3161
        %v3163 = vadd.f32 %v3128, %v3129
        %3164 = vadd.xlane.f32.xlu0 %v3163
        %v3165 = vpop.xlane.xlu0 %3164
        %v3166 = vadd.f32 %v3130, %v3131
        %3167 = vadd.xlane.f32.xlu0 %v3166
        %v3168 = vpop.xlane.xlu0 %3167
        %v3169 = vadd.f32 %v3132, %v3133
        %3170 = vadd.xlane.f32.xlu0 %v3169
        %v3171 = vpop.xlane.xlu0 %3170
        %v3172 = vadd.f32 %v3134, %v3135
        %3173 = vadd.xlane.f32.xlu0 %v3172
        %v3174 = vpop.xlane.xlu0 %3173
        %v3175 = vadd.f32 %v3136, %v3137
        %3176 = vadd.xlane.f32.xlu0 %v3175
        %v3177 = vpop.xlane.xlu0 %3176
        %v3178 = vadd.f32 %v3138, %v3139
        %3179 = vadd.xlane.f32.xlu0 %v3178
        %v3180 = vpop.xlane.xlu0 %3179
        %v3181 = vadd.f32 %v3140, %v3141
        %3182 = vadd.xlane.f32.xlu0 %v3181
        %v3183 = vpop.xlane.xlu0 %3182
        %v3184 = vadd.f32 %v3142, %v3143
        %3185 = vadd.xlane.f32.xlu0 %v3184
        %v3186 = vpop.xlane.xlu0 %3185
        %v3187 = vadd.f32 %v3144, %v3145
        %3188 = vadd.xlane.f32.xlu0 %v3187
        %v3189 = vpop.xlane.xlu0 %3188
        %v3190 = vadd.f32 %v3146, %v3147
        %3191 = vadd.xlane.f32.xlu0 %v3190
        %v3192 = vpop.xlane.xlu0 %3191
        %v3193 = vadd.f32 %v3148, %v3149
        %3194 = vadd.xlane.f32.xlu0 %v3193
        %v3195 = vpop.xlane.xlu0 %3194
        %v3196 = vadd.f32 %v3150, %v3151
        %3197 = vadd.xlane.f32.xlu0 %v3196
        %v3198 = vpop.xlane.xlu0 %3197
        %v3199 = vadd.f32 %v3152, %v3153
        %3200 = vadd.xlane.f32.xlu0 %v3199
        %v3201 = vpop.xlane.xlu0 %3200
        %v3202 = vmul.f32 %v3156, %v3073
        %v3203 = vmul.f32 %v3159, %v3073
        %v3204 = vmul.f32 %v3162, %v3073
        %v3205 = vmul.f32 %v3165, %v3073
        %v3206 = vmul.f32 %v3168, %v3073
        %v3207 = vmul.f32 %v3171, %v3073
        %v3208 = vmul.f32 %v3174, %v3073
        %v3209 = vmul.f32 %v3177, %v3073
        %v3210 = vmul.f32 %v3180, %v3073
        %v3211 = vmul.f32 %v3183, %v3073
        %v3212 = vmul.f32 %v3186, %v3073
        %v3213 = vmul.f32 %v3189, %v3073
        %v3214 = vmul.f32 %v3192, %v3073
        %v3215 = vmul.f32 %v3195, %v3073
        %v3216 = vmul.f32 %v3198, %v3073
        %v3217 = vmul.f32 %v3201, %v3073
        %v3218 = vld [vmem:[%s5] sm:$0x3]
        %v3219 = vadd.f32 %v3202, 1e-05
        %v3220 = vadd.f32 %v3203, 1e-05
        %v3221 = vadd.f32 %v3204, 1e-05
        %v3222 = vadd.f32 %v3205, 1e-05
        %v3223 = vadd.f32 %v3206, 1e-05
        %v3224 = vadd.f32 %v3207, 1e-05
        %v3225 = vadd.f32 %v3208, 1e-05
        %v3226 = vadd.f32 %v3209, 1e-05
        %v3227 = vadd.f32 %v3210, 1e-05
        %v3228 = vadd.f32 %v3211, 1e-05
        %v3229 = vadd.f32 %v3212, 1e-05
        %v3230 = vadd.f32 %v3213, 1e-05
        %v3231 = vadd.f32 %v3214, 1e-05
        %v3232 = vadd.f32 %v3215, 1e-05
        %v3233 = vadd.f32 %v3216, 1e-05
        %v3234 = vadd.f32 %v3217, 1e-05
        %v3235 = vrsqrt.pop %v3219
        %v3236 = vrsqrt.pop %v3220
        %v3237 = vrsqrt.pop %v3221
        %v3238 = vrsqrt.pop %v3222
        %v3239 = vrsqrt.pop %v3223
        %v3240 = vrsqrt.pop %v3224
        %v3241 = vrsqrt.pop %v3225
        %v3242 = vrsqrt.pop %v3226
        %v3243 = vrsqrt.pop %v3227
        %v3244 = vrsqrt.pop %v3228
        %v3245 = vrsqrt.pop %v3229
        %v3246 = vrsqrt.pop %v3230
        %v3247 = vrsqrt.pop %v3231
        %v3248 = vrsqrt.pop %v3232
        %v3249 = vrsqrt.pop %v3233
        %v3250 = vrsqrt.pop %v3234
        %v3251 = vmul.f32 %v3090, %v3235
        %v3252 = vmul.f32 %v3091, %v3235
        %v3253 = vmul.f32 %v3092, %v3236
        %v3254 = vmul.f32 %v3093, %v3236
        %v3255 = vmul.f32 %v3094, %v3237
        %v3256 = vmul.f32 %v3095, %v3237
        %v3257 = vmul.f32 %v3096, %v3238
        %v3258 = vmul.f32 %v3097, %v3238
        %v3259 = vmul.f32 %v3098, %v3239
        %v3260 = vmul.f32 %v3099, %v3239
        %v3261 = vmul.f32 %v3100, %v3240
        %v3262 = vmul.f32 %v3101, %v3240
        %v3263 = vmul.f32 %v3102, %v3241
        %v3264 = vmul.f32 %v3103, %v3241
        %v3265 = vmul.f32 %v3104, %v3242
        %v3266 = vmul.f32 %v3105, %v3242
        %v3267 = vmul.f32 %v3106, %v3243
        %v3268 = vmul.f32 %v3107, %v3243
        %v3269 = vmul.f32 %v3108, %v3244
        %v3270 = vmul.f32 %v3109, %v3244
        %v3271 = vmul.f32 %v3110, %v3245
        %v3272 = vmul.f32 %v3111, %v3245
        %v3273 = vmul.f32 %v3112, %v3246
        %v3274 = vmul.f32 %v3113, %v3246
        %v3275 = vmul.f32 %v3114, %v3247
        %v3276 = vmul.f32 %v3115, %v3247
        %v3277 = vmul.f32 %v3116, %v3248
        %v3278 = vmul.f32 %v3117, %v3248
        %v3279 = vmul.f32 %v3118, %v3249
        %v3280 = vmul.f32 %v3119, %v3249
        %v3281 = vmul.f32 %v3120, %v3250
        %v3282 = vmul.f32 %v3121, %v3250
        %v3284 = vlaneseq
        %v3285 = vshrl.u32 %v3284, 7
        %v3286 = vsub.s32 0, %v3285
        %v3287 = vrot.slane %v3218, %v3286
        %v3288 = vlaneseq
        %v3289 = vshrl.u32 %v3288, 7
        %v3290 = vsub.s32 1, %v3289
        %v3291 = vrot.slane %v3218, %v3290
        %v3294 = vmul.f32 %v3287, %v3251
        %v3295 = vmul.f32 %v3291, %v3252
        %v3296 = vmul.f32 %v3287, %v3253
        %v3297 = vmul.f32 %v3291, %v3254
        %v3298 = vmul.f32 %v3287, %v3255
        %v3299 = vmul.f32 %v3291, %v3256
        %v3300 = vmul.f32 %v3287, %v3257
        %v3301 = vmul.f32 %v3291, %v3258
        %v3302 = vmul.f32 %v3287, %v3259
        %v3303 = vmul.f32 %v3291, %v3260
        %v3304 = vmul.f32 %v3287, %v3261
        %v3305 = vmul.f32 %v3291, %v3262
        %v3306 = vmul.f32 %v3287, %v3263
        %v3307 = vmul.f32 %v3291, %v3264
        %v3308 = vmul.f32 %v3287, %v3265
        %v3309 = vmul.f32 %v3291, %v3266
        %v3310 = vmul.f32 %v3287, %v3267
        %v3311 = vmul.f32 %v3291, %v3268
        %v3312 = vmul.f32 %v3287, %v3269
        %v3313 = vmul.f32 %v3291, %v3270
        %v3314 = vmul.f32 %v3287, %v3271
        %v3315 = vmul.f32 %v3291, %v3272
        %v3316 = vmul.f32 %v3287, %v3273
        %v3317 = vmul.f32 %v3291, %v3274
        %v3318 = vmul.f32 %v3287, %v3275
        %v3319 = vmul.f32 %v3291, %v3276
        %v3320 = vmul.f32 %v3287, %v3277
        %v3321 = vmul.f32 %v3291, %v3278
        %v3322 = vmul.f32 %v3287, %v3279
        %v3323 = vmul.f32 %v3291, %v3280
        %v3324 = vmul.f32 %v3287, %v3281
        %v3325 = vmul.f32 %v3291, %v3282
        %v3326 = vld [vmem:[#allocation10] sm:$0x3]
        %v3328 = vlaneseq
        %v3329 = vshrl.u32 %v3328, 7
        %v3330 = vsub.s32 0, %v3329
        %v3331 = vrot.slane %v3326, %v3330
        %v3332 = vlaneseq
        %v3333 = vshrl.u32 %v3332, 7
        %v3334 = vsub.s32 1, %v3333
        %v3335 = vrot.slane %v3326, %v3334
        %v3338 = vadd.f32 %v3294, %v3331
        %v3339 = vadd.f32 %v3295, %v3335
        %v3340 = vadd.f32 %v3296, %v3331
        %v3341 = vadd.f32 %v3297, %v3335
        %v3342 = vadd.f32 %v3298, %v3331
        %v3343 = vadd.f32 %v3299, %v3335
        %v3344 = vadd.f32 %v3300, %v3331
        %v3345 = vadd.f32 %v3301, %v3335
        %v3346 = vadd.f32 %v3302, %v3331
        %v3347 = vadd.f32 %v3303, %v3335
        %v3348 = vadd.f32 %v3304, %v3331
        %v3349 = vadd.f32 %v3305, %v3335
        %v3350 = vadd.f32 %v3306, %v3331
        %v3351 = vadd.f32 %v3307, %v3335
        %v3352 = vadd.f32 %v3308, %v3331
        %v3353 = vadd.f32 %v3309, %v3335
        %v3354 = vadd.f32 %v3310, %v3331
        %v3355 = vadd.f32 %v3311, %v3335
        %v3356 = vadd.f32 %v3312, %v3331
        %v3357 = vadd.f32 %v3313, %v3335
        %v3358 = vadd.f32 %v3314, %v3331
        %v3359 = vadd.f32 %v3315, %v3335
        %v3360 = vadd.f32 %v3316, %v3331
        %v3361 = vadd.f32 %v3317, %v3335
        %v3362 = vadd.f32 %v3318, %v3331
        %v3363 = vadd.f32 %v3319, %v3335
        %v3364 = vadd.f32 %v3320, %v3331
        %v3365 = vadd.f32 %v3321, %v3335
        %v3366 = vadd.f32 %v3322, %v3331
        %v3367 = vadd.f32 %v3323, %v3335
        %v3368 = vadd.f32 %v3324, %v3331
        %v3369 = vadd.f32 %v3325, %v3335
        %v3370 = vpack.c.bf16 %v3340, %v3338
        %v3371 = vpack.c.bf16 %v3341, %v3339
        %v3372 = vpack.c.bf16 %v3344, %v3342
        %v3373 = vpack.c.bf16 %v3345, %v3343
        %v3374 = vpack.c.bf16 %v3348, %v3346
        %v3375 = vpack.c.bf16 %v3349, %v3347
        %v3376 = vpack.c.bf16 %v3352, %v3350
        %v3377 = vpack.c.bf16 %v3353, %v3351
        %v3378 = vpack.c.bf16 %v3356, %v3354
        %v3379 = vpack.c.bf16 %v3357, %v3355
        %v3380 = vpack.c.bf16 %v3360, %v3358
        %v3381 = vpack.c.bf16 %v3361, %v3359
        %v3382 = vpack.c.bf16 %v3364, %v3362
        %v3383 = vpack.c.bf16 %v3365, %v3363
        %v3384 = vpack.c.bf16 %v3368, %v3366
        %v3385 = vpack.c.bf16 %v3369, %v3367
        %v3386 = vld [vmem:[#allocation12] sm:$0xf]
        %v3387 = vld [vmem:[#allocation12 + $0x4] sm:$0xf]
        %v3388 = vld [vmem:[#allocation12 + $0x8] sm:$0xf]
        %v3389 = vld [vmem:[#allocation12 + $0xc] sm:$0xf]
        %v3390 = vld [vmem:[#allocation12 + $0x10] sm:$0xf]
        %v3391 = vld [vmem:[#allocation12 + $0x14] sm:$0xf]
        %v3392 = vld [vmem:[#allocation12 + $0x18] sm:$0xf]
        %v3393 = vld [vmem:[#allocation12 + $0x1c] sm:$0xf]
        %v3394 = vld [vmem:[#allocation12 + $0x20] sm:$0xf]
        %v3395 = vld [vmem:[#allocation12 + $0x24] sm:$0xf]
        %v3396 = vld [vmem:[#allocation12 + $0x28] sm:$0xf]
        %v3397 = vld [vmem:[#allocation12 + $0x2c] sm:$0xf]
        %v3398 = vld [vmem:[#allocation12 + $0x30] sm:$0xf]
        %v3399 = vld [vmem:[#allocation12 + $0x34] sm:$0xf]
        %v3400 = vld [vmem:[#allocation12 + $0x38] sm:$0xf]
        %v3401 = vld [vmem:[#allocation12 + $0x3c] sm:$0xf]
        %v3402 = vld [vmem:[#allocation12 + $0x40] sm:$0xf]
        %v3403 = vld [vmem:[#allocation12 + $0x44] sm:$0xf]
        %v3404 = vld [vmem:[#allocation12 + $0x48] sm:$0xf]
        %v3405 = vld [vmem:[#allocation12 + $0x4c] sm:$0xf]
        %v3406 = vld [vmem:[#allocation12 + $0x50] sm:$0xf]
        %v3407 = vld [vmem:[#allocation12 + $0x54] sm:$0xf]
        %v3408 = vld [vmem:[#allocation12 + $0x58] sm:$0xf]
        %v3409 = vld [vmem:[#allocation12 + $0x5c] sm:$0xf]
        %v3410 = vld [vmem:[#allocation12 + $0x60] sm:$0xf]
        %v3411 = vld [vmem:[#allocation12 + $0x64] sm:$0xf]
        %v3412 = vld [vmem:[#allocation12 + $0x68] sm:$0xf]
        %v3413 = vld [vmem:[#allocation12 + $0x6c] sm:$0xf]
        %v3414 = vld [vmem:[#allocation12 + $0x70] sm:$0xf]
        %v3415 = vld [vmem:[#allocation12 + $0x74] sm:$0xf]
        %v3416 = vld [vmem:[#allocation12 + $0x78] sm:$0xf]
        %v3417 = vld [vmem:[#allocation12 + $0x7c] sm:$0xf]
        %v3418 = vld [vmem:[#allocation13] sm:$0x1]
        %v3420 = vlaneseq
        %v3421 = vshrl.u32 %v3420, 7
        %v3422 = vsub.s32 0, %v3421
        %v3423 = vrot.slane %v3418, %v3422
        %v3457 = vunpack.c.l.b16 %v3386
        %v3458 = vunpack.c.l.b16 %v3387
        %v3459 = vunpack.c.l.b16 %v3388
        %v3460 = vunpack.c.l.b16 %v3389
        %v3461 = vunpack.c.l.b16 %v3390
        %v3462 = vunpack.c.l.b16 %v3391
        %v3463 = vunpack.c.l.b16 %v3392
        %v3464 = vunpack.c.l.b16 %v3393
        %v3465 = vunpack.c.l.b16 %v3394
        %v3466 = vunpack.c.l.b16 %v3395
        %v3467 = vunpack.c.l.b16 %v3396
        %v3468 = vunpack.c.l.b16 %v3397
        %v3469 = vunpack.c.l.b16 %v3398
        %v3470 = vunpack.c.l.b16 %v3399
        %v3471 = vunpack.c.l.b16 %v3400
        %v3472 = vunpack.c.l.b16 %v3401
        %v3473 = vunpack.c.l.b16 %v3402
        %v3474 = vunpack.c.l.b16 %v3403
        %v3475 = vunpack.c.l.b16 %v3404
        %v3476 = vunpack.c.l.b16 %v3405
        %v3477 = vunpack.c.l.b16 %v3406
        %v3478 = vunpack.c.l.b16 %v3407
        %v3479 = vunpack.c.l.b16 %v3408
        %v3480 = vunpack.c.l.b16 %v3409
        %v3481 = vunpack.c.l.b16 %v3410
        %v3482 = vunpack.c.l.b16 %v3411
        %v3483 = vunpack.c.l.b16 %v3412
        %v3484 = vunpack.c.l.b16 %v3413
        %v3485 = vunpack.c.l.b16 %v3414
        %v3486 = vunpack.c.l.b16 %v3415
        %v3487 = vunpack.c.l.b16 %v3416
        %v3488 = vunpack.c.l.b16 %v3417
        %v3489 = vpack.c.b16 %v3458, %v3457
        %v3490 = vpack.c.b16 %v3460, %v3459
        %v3491 = vpack.c.b16 %v3462, %v3461
        %v3492 = vpack.c.b16 %v3464, %v3463
        %v3493 = vpack.c.b16 %v3466, %v3465
        %v3494 = vpack.c.b16 %v3468, %v3467
        %v3495 = vpack.c.b16 %v3470, %v3469
        %v3496 = vpack.c.b16 %v3472, %v3471
        %v3497 = vpack.c.b16 %v3474, %v3473
        %v3498 = vpack.c.b16 %v3476, %v3475
        %v3499 = vpack.c.b16 %v3478, %v3477
        %v3500 = vpack.c.b16 %v3480, %v3479
        %v3501 = vpack.c.b16 %v3482, %v3481
        %v3502 = vpack.c.b16 %v3484, %v3483
        %v3503 = vpack.c.b16 %v3486, %v3485
        %v3504 = vpack.c.b16 %v3488, %v3487
        %3521 = vmatprep.subr.bf16.mxu0 0
        %3522 = vmatpush1.bf16.msra.mxu0 %v3496
        %3523 = vmatprep.subr.bf16.mxu0 0
        %3524 = vmatpush1.bf16.msra.mxu0 %v3495
        %3525 = vmatprep.subr.bf16.mxu0 0
        %3526 = vmatpush1.bf16.msra.mxu0 %v3494
        %3527 = vmatprep.subr.bf16.mxu0 0
        %3528 = vmatpush1.bf16.msra.mxu0 %v3493
        %3529 = vmatprep.subr.bf16.mxu0 0
        %3530 = vmatpush1.bf16.msra.mxu0 %v3492
        %3531 = vmatprep.subr.bf16.mxu0 0
        %3532 = vmatpush1.bf16.msra.mxu0 %v3491
        %3533 = vmatprep.subr.bf16.mxu0 0
        %3534 = vmatpush1.bf16.msra.mxu0 %v3490
        %3535 = vmatprep.subr.bf16.mxu0 0
        %3536 = vmatpush1.bf16.msra.mxu0 %v3489
        %3537 = vmatprep.subr.bf16.mxu0 0
        %3538 = vmatpush2.bf16.msra.mxu0 %v3504
        %3539 = vmatprep.subr.bf16.mxu0 0
        %3540 = vmatpush2.bf16.msra.mxu0 %v3503
        %3541 = vmatprep.subr.bf16.mxu0 0
        %3542 = vmatpush2.bf16.msra.mxu0 %v3502
        %3543 = vmatprep.subr.bf16.mxu0 0
        %3544 = vmatpush2.bf16.msra.mxu0 %v3501
        %3545 = vmatprep.subr.bf16.mxu0 0
        %3546 = vmatpush2.bf16.msra.mxu0 %v3500
        %3547 = vmatprep.subr.bf16.mxu0 0
        %3548 = vmatpush2.bf16.msra.mxu0 %v3499
        %3549 = vmatprep.subr.bf16.mxu0 0
        %3550 = vmatpush2.bf16.msra.mxu0 %v3498
        %3551 = vmatprep.subr.bf16.mxu0 0
        %3552 = vmatpush2.bf16.msra.mxu0 %v3497
        %3553 = vmatprep.mubr.bf16.mxu0 %v3371
        %3554 = vmatmul.mubr.bf16.gmra.mxu0 %v3370
        %v3555 = vpop.f32.mrf.mxu0
        %v3556 = vadd.f32 %v3423, %v3555
        %v3557 = vpop.f32.mrf.mxu0
        %v3558 = vpop.f32.mrf.mxu0
        %v3559 = vadd.f32 %v3423, %v3558
        %v3560 = vpop.f32.mrf.mxu0
        %3561 = vmatprep.mubr.bf16.mxu0 %v3373
        %3562 = vmatmul.mubr.bf16.gmra.mxu0 %v3372
        %v3563 = vpop.f32.mrf.mxu0
        %v3564 = vadd.f32 %v3423, %v3563
        %v3565 = vpop.f32.mrf.mxu0
        %v3566 = vpop.f32.mrf.mxu0
        %v3567 = vadd.f32 %v3423, %v3566
        %v3568 = vpop.f32.mrf.mxu0
        %3569 = vmatprep.mubr.bf16.mxu0 %v3375
        %3570 = vmatmul.mubr.bf16.gmra.mxu0 %v3374
        %v3571 = vpop.f32.mrf.mxu0
        %v3572 = vadd.f32 %v3423, %v3571
        %v3573 = vpop.f32.mrf.mxu0
        %v3574 = vpop.f32.mrf.mxu0
        %v3575 = vadd.f32 %v3423, %v3574
        %v3576 = vpop.f32.mrf.mxu0
        %3577 = vmatprep.mubr.bf16.mxu0 %v3377
        %3578 = vmatmul.mubr.bf16.gmra.mxu0 %v3376
        %v3579 = vpop.f32.mrf.mxu0
        %v3580 = vadd.f32 %v3423, %v3579
        %v3581 = vpop.f32.mrf.mxu0
        %v3582 = vpop.f32.mrf.mxu0
        %v3583 = vadd.f32 %v3423, %v3582
        %v3584 = vpop.f32.mrf.mxu0
        %3585 = vmatprep.mubr.bf16.mxu0 %v3379
        %3586 = vmatmul.mubr.bf16.gmra.mxu0 %v3378
        %v3587 = vpop.f32.mrf.mxu0
        %v3588 = vadd.f32 %v3423, %v3587
        %v3589 = vpop.f32.mrf.mxu0
        %v3590 = vpop.f32.mrf.mxu0
        %v3591 = vadd.f32 %v3423, %v3590
        %v3592 = vpop.f32.mrf.mxu0
        %3593 = vmatprep.mubr.bf16.mxu0 %v3381
        %3594 = vmatmul.mubr.bf16.gmra.mxu0 %v3380
        %v3595 = vpop.f32.mrf.mxu0
        %v3596 = vadd.f32 %v3423, %v3595
        %v3597 = vpop.f32.mrf.mxu0
        %v3598 = vpop.f32.mrf.mxu0
        %v3599 = vadd.f32 %v3423, %v3598
        %v3600 = vpop.f32.mrf.mxu0
        %3601 = vmatprep.mubr.bf16.mxu0 %v3383
        %3602 = vmatmul.mubr.bf16.gmra.mxu0 %v3382
        %v3603 = vpop.f32.mrf.mxu0
        %v3604 = vadd.f32 %v3423, %v3603
        %v3605 = vpop.f32.mrf.mxu0
        %v3606 = vpop.f32.mrf.mxu0
        %v3607 = vadd.f32 %v3423, %v3606
        %v3608 = vpop.f32.mrf.mxu0
        %3609 = vmatprep.mubr.bf16.mxu0 %v3385
        %3610 = vmatmul.mubr.bf16.gmra.mxu0 %v3384
        %v3611 = vpop.f32.mrf.mxu0
        %v3612 = vadd.f32 %v3423, %v3611
        %v3613 = vpop.f32.mrf.mxu0
        %v3614 = vpop.f32.mrf.mxu0
        %v3615 = vadd.f32 %v3423, %v3614
        %v3616 = vpop.f32.mrf.mxu0
        %3617 = vdwg.mxu0
        %v3618 = vmax.f32 %v3556, 0.0
        %v3619 = vmax.f32 %v3559, 0.0
        %v3620 = vmax.f32 %v3564, 0.0
        %v3621 = vmax.f32 %v3567, 0.0
        %v3622 = vmax.f32 %v3572, 0.0
        %v3623 = vmax.f32 %v3575, 0.0
        %v3624 = vmax.f32 %v3580, 0.0
        %v3625 = vmax.f32 %v3583, 0.0
        %v3626 = vmax.f32 %v3588, 0.0
        %v3627 = vmax.f32 %v3591, 0.0
        %v3628 = vmax.f32 %v3596, 0.0
        %v3629 = vmax.f32 %v3599, 0.0
        %v3630 = vmax.f32 %v3604, 0.0
        %v3631 = vmax.f32 %v3607, 0.0
        %v3632 = vmax.f32 %v3612, 0.0
        %v3633 = vmax.f32 %v3615, 0.0
        %v3634 = vpack.c.bf16 %v3619, %v3618
        %v3635 = vpack.c.bf16 %v3621, %v3620
        %v3636 = vpack.c.bf16 %v3623, %v3622
        %v3637 = vpack.c.bf16 %v3625, %v3624
        %v3638 = vpack.c.bf16 %v3627, %v3626
        %v3639 = vpack.c.bf16 %v3629, %v3628
        %v3640 = vpack.c.bf16 %v3631, %v3630
        %v3641 = vpack.c.bf16 %v3633, %v3632
        %v3642 = vld [vmem:[#allocation15] sm:$0xff]
        %v3643 = vld [vmem:[#allocation15 + $0x8] sm:$0xff]
        %v3644 = vld [vmem:[#allocation15 + $0x10] sm:$0xff]
        %v3645 = vld [vmem:[#allocation15 + $0x18] sm:$0xff]
        %v3646 = vld [vmem:[#allocation15 + $0x20] sm:$0xff]
        %v3647 = vld [vmem:[#allocation15 + $0x28] sm:$0xff]
        %v3648 = vld [vmem:[#allocation15 + $0x30] sm:$0xff]
        %v3649 = vld [vmem:[#allocation15 + $0x38] sm:$0xff]
        %v3650 = vld [vmem:[#allocation15 + $0x40] sm:$0xff]
        %v3651 = vld [vmem:[#allocation15 + $0x48] sm:$0xff]
        %v3652 = vld [vmem:[#allocation15 + $0x50] sm:$0xff]
        %v3653 = vld [vmem:[#allocation15 + $0x58] sm:$0xff]
        %v3654 = vld [vmem:[#allocation15 + $0x60] sm:$0xff]
        %v3655 = vld [vmem:[#allocation15 + $0x68] sm:$0xff]
        %v3656 = vld [vmem:[#allocation15 + $0x70] sm:$0xff]
        %v3657 = vld [vmem:[#allocation15 + $0x78] sm:$0xff]
        %v3658 = vld [vmem:[#allocation16] sm:$0x3]
        %v3660 = vlaneseq
        %v3661 = vshrl.u32 %v3660, 7
        %v3662 = vsub.s32 0, %v3661
        %v3663 = vrot.slane %v3658, %v3662
        %v3664 = vlaneseq
        %v3665 = vshrl.u32 %v3664, 7
        %v3666 = vsub.s32 1, %v3665
        %v3667 = vrot.slane %v3658, %v3666
        %v3686 = vunpack.c.l.b16 %v3642
        %v3687 = vunpack.c.h.b16 %v3642
        %v3688 = vunpack.c.l.b16 %v3643
        %v3689 = vunpack.c.h.b16 %v3643
        %v3690 = vunpack.c.l.b16 %v3644
        %v3691 = vunpack.c.h.b16 %v3644
        %v3692 = vunpack.c.l.b16 %v3645
        %v3693 = vunpack.c.h.b16 %v3645
        %v3694 = vunpack.c.l.b16 %v3646
        %v3695 = vunpack.c.h.b16 %v3646
        %v3696 = vunpack.c.l.b16 %v3647
        %v3697 = vunpack.c.h.b16 %v3647
        %v3698 = vunpack.c.l.b16 %v3648
        %v3699 = vunpack.c.h.b16 %v3648
        %v3700 = vunpack.c.l.b16 %v3649
        %v3701 = vunpack.c.h.b16 %v3649
        %v3702 = vunpack.c.l.b16 %v3650
        %v3703 = vunpack.c.h.b16 %v3650
        %v3704 = vunpack.c.l.b16 %v3651
        %v3705 = vunpack.c.h.b16 %v3651
        %v3706 = vunpack.c.l.b16 %v3652
        %v3707 = vunpack.c.h.b16 %v3652
        %v3708 = vunpack.c.l.b16 %v3653
        %v3709 = vunpack.c.h.b16 %v3653
        %v3710 = vunpack.c.l.b16 %v3654
        %v3711 = vunpack.c.h.b16 %v3654
        %v3712 = vunpack.c.l.b16 %v3655
        %v3713 = vunpack.c.h.b16 %v3655
        %v3714 = vunpack.c.l.b16 %v3656
        %v3715 = vunpack.c.h.b16 %v3656
        %v3716 = vunpack.c.l.b16 %v3657
        %v3717 = vunpack.c.h.b16 %v3657
        %v3718 = vpack.c.b16 %v3688, %v3686
        %v3719 = vpack.c.b16 %v3689, %v3687
        %v3720 = vpack.c.b16 %v3692, %v3690
        %v3721 = vpack.c.b16 %v3693, %v3691
        %v3722 = vpack.c.b16 %v3696, %v3694
        %v3723 = vpack.c.b16 %v3697, %v3695
        %v3724 = vpack.c.b16 %v3700, %v3698
        %v3725 = vpack.c.b16 %v3701, %v3699
        %v3726 = vpack.c.b16 %v3704, %v3702
        %v3727 = vpack.c.b16 %v3705, %v3703
        %v3728 = vpack.c.b16 %v3708, %v3706
        %v3729 = vpack.c.b16 %v3709, %v3707
        %v3730 = vpack.c.b16 %v3712, %v3710
        %v3731 = vpack.c.b16 %v3713, %v3711
        %v3732 = vpack.c.b16 %v3716, %v3714
        %v3733 = vpack.c.b16 %v3717, %v3715
        %3750 = vmatprep.subr.bf16.mxu0 %v3733
        %3751 = vmatpush1.bf16.msra.mxu0 %v3732
        %3752 = vmatprep.subr.bf16.mxu0 %v3731
        %3753 = vmatpush1.bf16.msra.mxu0 %v3730
        %3754 = vmatprep.subr.bf16.mxu0 %v3729
        %3755 = vmatpush1.bf16.msra.mxu0 %v3728
        %3756 = vmatprep.subr.bf16.mxu0 %v3727
        %3757 = vmatpush1.bf16.msra.mxu0 %v3726
        %3758 = vmatprep.subr.bf16.mxu0 %v3725
        %3759 = vmatpush1.bf16.msra.mxu0 %v3724
        %3760 = vmatprep.subr.bf16.mxu0 %v3723
        %3761 = vmatpush1.bf16.msra.mxu0 %v3722
        %3762 = vmatprep.subr.bf16.mxu0 %v3721
        %3763 = vmatpush1.bf16.msra.mxu0 %v3720
        %3764 = vmatprep.subr.bf16.mxu0 %v3719
        %3765 = vmatpush1.bf16.msra.mxu0 %v3718
        %3766 = vmatprep.subr.bf16.mxu0 0
        %3767 = vmatpush2.bf16.msra.mxu0 0
        %3768 = vmatprep.subr.bf16.mxu0 0
        %3769 = vmatpush2.bf16.msra.mxu0 0
        %3770 = vmatprep.subr.bf16.mxu0 0
        %3771 = vmatpush2.bf16.msra.mxu0 0
        %3772 = vmatprep.subr.bf16.mxu0 0
        %3773 = vmatpush2.bf16.msra.mxu0 0
        %3774 = vmatprep.subr.bf16.mxu0 0
        %3775 = vmatpush2.bf16.msra.mxu0 0
        %3776 = vmatprep.subr.bf16.mxu0 0
        %3777 = vmatpush2.bf16.msra.mxu0 0
        %3778 = vmatprep.subr.bf16.mxu0 0
        %3779 = vmatpush2.bf16.msra.mxu0 0
        %3780 = vmatprep.subr.bf16.mxu0 0
        %3781 = vmatpush2.bf16.msra.mxu0 0
        %3782 = vmatprep.mubr.bf16.mxu0 0
        %3783 = vmatmul.mubr.bf16.gmra.mxu0 %v3634
        %v3784 = vpop.f32.mrf.mxu0
        %v3785 = vadd.f32 %v3663, %v3784
        %v3786 = vpop.f32.mrf.mxu0
        %v3787 = vadd.f32 %v3667, %v3786
        %v3788 = vpop.f32.mrf.mxu0
        %v3789 = vadd.f32 %v3663, %v3788
        %v3790 = vpop.f32.mrf.mxu0
        %v3791 = vadd.f32 %v3667, %v3790
        %3792 = vmatprep.mubr.bf16.mxu0 0
        %3793 = vmatmul.mubr.bf16.gmra.mxu0 %v3635
        %v3794 = vpop.f32.mrf.mxu0
        %v3795 = vadd.f32 %v3663, %v3794
        %v3796 = vpop.f32.mrf.mxu0
        %v3797 = vadd.f32 %v3667, %v3796
        %v3798 = vpop.f32.mrf.mxu0
        %v3799 = vadd.f32 %v3663, %v3798
        %v3800 = vpop.f32.mrf.mxu0
        %v3801 = vadd.f32 %v3667, %v3800
        %3802 = vmatprep.mubr.bf16.mxu0 0
        %3803 = vmatmul.mubr.bf16.gmra.mxu0 %v3636
        %v3804 = vpop.f32.mrf.mxu0
        %v3805 = vadd.f32 %v3663, %v3804
        %v3806 = vpop.f32.mrf.mxu0
        %v3807 = vadd.f32 %v3667, %v3806
        %v3808 = vpop.f32.mrf.mxu0
        %v3809 = vadd.f32 %v3663, %v3808
        %v3810 = vpop.f32.mrf.mxu0
        %v3811 = vadd.f32 %v3667, %v3810
        %3812 = vmatprep.mubr.bf16.mxu0 0
        %3813 = vmatmul.mubr.bf16.gmra.mxu0 %v3637
        %v3814 = vpop.f32.mrf.mxu0
        %v3815 = vadd.f32 %v3663, %v3814
        %v3816 = vpop.f32.mrf.mxu0
        %v3817 = vadd.f32 %v3667, %v3816
        %v3818 = vpop.f32.mrf.mxu0
        %v3819 = vadd.f32 %v3663, %v3818
        %v3820 = vpop.f32.mrf.mxu0
        %v3821 = vadd.f32 %v3667, %v3820
        %3822 = vmatprep.mubr.bf16.mxu0 0
        %3823 = vmatmul.mubr.bf16.gmra.mxu0 %v3638
        %v3824 = vpop.f32.mrf.mxu0
        %v3825 = vadd.f32 %v3663, %v3824
        %v3826 = vpop.f32.mrf.mxu0
        %v3827 = vadd.f32 %v3667, %v3826
        %v3828 = vpop.f32.mrf.mxu0
        %v3829 = vadd.f32 %v3663, %v3828
        %v3830 = vpop.f32.mrf.mxu0
        %v3831 = vadd.f32 %v3667, %v3830
        %3832 = vmatprep.mubr.bf16.mxu0 0
        %3833 = vmatmul.mubr.bf16.gmra.mxu0 %v3639
        %v3834 = vpop.f32.mrf.mxu0
        %v3835 = vadd.f32 %v3663, %v3834
        %v3836 = vpop.f32.mrf.mxu0
        %v3837 = vadd.f32 %v3667, %v3836
        %v3838 = vpop.f32.mrf.mxu0
        %v3839 = vadd.f32 %v3663, %v3838
        %v3840 = vpop.f32.mrf.mxu0
        %v3841 = vadd.f32 %v3667, %v3840
        %3842 = vmatprep.mubr.bf16.mxu0 0
        %3843 = vmatmul.mubr.bf16.gmra.mxu0 %v3640
        %v3844 = vpop.f32.mrf.mxu0
        %v3845 = vadd.f32 %v3663, %v3844
        %v3846 = vpop.f32.mrf.mxu0
        %v3847 = vadd.f32 %v3667, %v3846
        %v3848 = vpop.f32.mrf.mxu0
        %v3849 = vadd.f32 %v3663, %v3848
        %v3850 = vpop.f32.mrf.mxu0
        %v3851 = vadd.f32 %v3667, %v3850
        %3852 = vmatprep.mubr.bf16.mxu0 0
        %3853 = vmatmul.mubr.bf16.gmra.mxu0 %v3641
        %v3854 = vpop.f32.mrf.mxu0
        %v3855 = vadd.f32 %v3663, %v3854
        %v3856 = vpop.f32.mrf.mxu0
        %v3857 = vadd.f32 %v3667, %v3856
        %v3858 = vpop.f32.mrf.mxu0
        %v3859 = vadd.f32 %v3663, %v3858
        %v3860 = vpop.f32.mrf.mxu0
        %v3861 = vadd.f32 %v3667, %v3860
        %3862 = vdwg.mxu0
        %v3863 = vadd.f32 %v3785, %v3338
        %v3864 = vadd.f32 %v3787, %v3339
        %v3865 = vadd.f32 %v3789, %v3340
        %v3866 = vadd.f32 %v3791, %v3341
        %v3867 = vadd.f32 %v3795, %v3342
        %v3868 = vadd.f32 %v3797, %v3343
        %v3869 = vadd.f32 %v3799, %v3344
        %v3870 = vadd.f32 %v3801, %v3345
        %v3871 = vadd.f32 %v3805, %v3346
        %v3872 = vadd.f32 %v3807, %v3347
        %v3873 = vadd.f32 %v3809, %v3348
        %v3874 = vadd.f32 %v3811, %v3349
        %v3875 = vadd.f32 %v3815, %v3350
        %v3876 = vadd.f32 %v3817, %v3351
        %v3877 = vadd.f32 %v3819, %v3352
        %v3878 = vadd.f32 %v3821, %v3353
        %v3879 = vadd.f32 %v3825, %v3354
        %v3880 = vadd.f32 %v3827, %v3355
        %v3881 = vadd.f32 %v3829, %v3356
        %v3882 = vadd.f32 %v3831, %v3357
        %v3883 = vadd.f32 %v3835, %v3358
        %v3884 = vadd.f32 %v3837, %v3359
        %v3885 = vadd.f32 %v3839, %v3360
        %v3886 = vadd.f32 %v3841, %v3361
        %v3887 = vadd.f32 %v3845, %v3362
        %v3888 = vadd.f32 %v3847, %v3363
        %v3889 = vadd.f32 %v3849, %v3364
        %v3890 = vadd.f32 %v3851, %v3365
        %v3891 = vadd.f32 %v3855, %v3366
        %v3892 = vadd.f32 %v3857, %v3367
        %v3893 = vadd.f32 %v3859, %v3368
        %v3894 = vadd.f32 %v3861, %v3369
        %v3895 = vadd.f32 %v3863, %v3864
        %3896 = vadd.xlane.f32.xlu0 %v3895
        %v3897 = vpop.xlane.xlu0 %3896
        %v3898 = vadd.f32 %v3865, %v3866
        %3899 = vadd.xlane.f32.xlu0 %v3898
        %v3900 = vpop.xlane.xlu0 %3899
        %v3901 = vadd.f32 %v3867, %v3868
        %3902 = vadd.xlane.f32.xlu0 %v3901
        %v3903 = vpop.xlane.xlu0 %3902
        %v3904 = vadd.f32 %v3869, %v3870
        %3905 = vadd.xlane.f32.xlu0 %v3904
        %v3906 = vpop.xlane.xlu0 %3905
        %v3907 = vadd.f32 %v3871, %v3872
        %3908 = vadd.xlane.f32.xlu0 %v3907
        %v3909 = vpop.xlane.xlu0 %3908
        %v3910 = vadd.f32 %v3873, %v3874
        %3911 = vadd.xlane.f32.xlu0 %v3910
        %v3912 = vpop.xlane.xlu0 %3911
        %v3913 = vadd.f32 %v3875, %v3876
        %3914 = vadd.xlane.f32.xlu0 %v3913
        %v3915 = vpop.xlane.xlu0 %3914
        %v3916 = vadd.f32 %v3877, %v3878
        %3917 = vadd.xlane.f32.xlu0 %v3916
        %v3918 = vpop.xlane.xlu0 %3917
        %v3919 = vadd.f32 %v3879, %v3880
        %3920 = vadd.xlane.f32.xlu0 %v3919
        %v3921 = vpop.xlane.xlu0 %3920
        %v3922 = vadd.f32 %v3881, %v3882
        %3923 = vadd.xlane.f32.xlu0 %v3922
        %v3924 = vpop.xlane.xlu0 %3923
        %v3925 = vadd.f32 %v3883, %v3884
        %3926 = vadd.xlane.f32.xlu0 %v3925
        %v3927 = vpop.xlane.xlu0 %3926
        %v3928 = vadd.f32 %v3885, %v3886
        %3929 = vadd.xlane.f32.xlu0 %v3928
        %v3930 = vpop.xlane.xlu0 %3929
        %v3931 = vadd.f32 %v3887, %v3888
        %3932 = vadd.xlane.f32.xlu0 %v3931
        %v3933 = vpop.xlane.xlu0 %3932
        %v3934 = vadd.f32 %v3889, %v3890
        %3935 = vadd.xlane.f32.xlu0 %v3934
        %v3936 = vpop.xlane.xlu0 %3935
        %v3937 = vadd.f32 %v3891, %v3892
        %3938 = vadd.xlane.f32.xlu0 %v3937
        %v3939 = vpop.xlane.xlu0 %3938
        %v3940 = vadd.f32 %v3893, %v3894
        %3941 = vadd.xlane.f32.xlu0 %v3940
        %v3942 = vpop.xlane.xlu0 %3941
        %v3943 = vmul.f32 %v3897, %v3073
        %v3944 = vmul.f32 %v3900, %v3073
        %v3945 = vmul.f32 %v3903, %v3073
        %v3946 = vmul.f32 %v3906, %v3073
        %v3947 = vmul.f32 %v3909, %v3073
        %v3948 = vmul.f32 %v3912, %v3073
        %v3949 = vmul.f32 %v3915, %v3073
        %v3950 = vmul.f32 %v3918, %v3073
        %v3951 = vmul.f32 %v3921, %v3073
        %v3952 = vmul.f32 %v3924, %v3073
        %v3953 = vmul.f32 %v3927, %v3073
        %v3954 = vmul.f32 %v3930, %v3073
        %v3955 = vmul.f32 %v3933, %v3073
        %v3956 = vmul.f32 %v3936, %v3073
        %v3957 = vmul.f32 %v3939, %v3073
        %v3958 = vmul.f32 %v3942, %v3073
        %v3959 = vsub.f32 %v3863, %v3943
        %v3960 = vsub.f32 %v3864, %v3943
        %v3961 = vsub.f32 %v3865, %v3944
        %v3962 = vsub.f32 %v3866, %v3944
        %v3963 = vsub.f32 %v3867, %v3945
        %v3964 = vsub.f32 %v3868, %v3945
        %v3965 = vsub.f32 %v3869, %v3946
        %v3966 = vsub.f32 %v3870, %v3946
        %v3967 = vsub.f32 %v3871, %v3947
        %v3968 = vsub.f32 %v3872, %v3947
        %v3969 = vsub.f32 %v3873, %v3948
        %v3970 = vsub.f32 %v3874, %v3948
        %v3971 = vsub.f32 %v3875, %v3949
        %v3972 = vsub.f32 %v3876, %v3949
        %v3973 = vsub.f32 %v3877, %v3950
        %v3974 = vsub.f32 %v3878, %v3950
        %v3975 = vsub.f32 %v3879, %v3951
        %v3976 = vsub.f32 %v3880, %v3951
        %v3977 = vsub.f32 %v3881, %v3952
        %v3978 = vsub.f32 %v3882, %v3952
        %v3979 = vsub.f32 %v3883, %v3953
        %v3980 = vsub.f32 %v3884, %v3953
        %v3981 = vsub.f32 %v3885, %v3954
        %v3982 = vsub.f32 %v3886, %v3954
        %v3983 = vsub.f32 %v3887, %v3955
        %v3984 = vsub.f32 %v3888, %v3955
        %v3985 = vsub.f32 %v3889, %v3956
        %v3986 = vsub.f32 %v3890, %v3956
        %v3987 = vsub.f32 %v3891, %v3957
        %v3988 = vsub.f32 %v3892, %v3957
        %v3989 = vsub.f32 %v3893, %v3958
        %v3990 = vsub.f32 %v3894, %v3958
        %v3991 = vmul.f32 %v3959, %v3959
        %v3992 = vmul.f32 %v3960, %v3960
        %v3993 = vmul.f32 %v3961, %v3961
        %v3994 = vmul.f32 %v3962, %v3962
        %v3995 = vmul.f32 %v3963, %v3963
        %v3996 = vmul.f32 %v3964, %v3964
        %v3997 = vmul.f32 %v3965, %v3965
        %v3998 = vmul.f32 %v3966, %v3966
        %v3999 = vmul.f32 %v3967, %v3967
        %v4000 = vmul.f32 %v3968, %v3968
        %v4001 = vmul.f32 %v3969, %v3969
        %v4002 = vmul.f32 %v3970, %v3970
        %v4003 = vmul.f32 %v3971, %v3971
        %v4004 = vmul.f32 %v3972, %v3972
        %v4005 = vmul.f32 %v3973, %v3973
        %v4006 = vmul.f32 %v3974, %v3974
        %v4007 = vmul.f32 %v3975, %v3975
        %v4008 = vmul.f32 %v3976, %v3976
        %v4009 = vmul.f32 %v3977, %v3977
        %v4010 = vmul.f32 %v3978, %v3978
        %v4011 = vmul.f32 %v3979, %v3979
        %v4012 = vmul.f32 %v3980, %v3980
        %v4013 = vmul.f32 %v3981, %v3981
        %v4014 = vmul.f32 %v3982, %v3982
        %v4015 = vmul.f32 %v3983, %v3983
        %v4016 = vmul.f32 %v3984, %v3984
        %v4017 = vmul.f32 %v3985, %v3985
        %v4018 = vmul.f32 %v3986, %v3986
        %v4019 = vmul.f32 %v3987, %v3987
        %v4020 = vmul.f32 %v3988, %v3988
        %v4021 = vmul.f32 %v3989, %v3989
        %v4022 = vmul.f32 %v3990, %v3990
        %v4023 = vadd.f32 %v3991, %v3992
        %4024 = vadd.xlane.f32.xlu0 %v4023
        %v4025 = vpop.xlane.xlu0 %4024
        %v4026 = vadd.f32 %v3993, %v3994
        %4027 = vadd.xlane.f32.xlu0 %v4026
        %v4028 = vpop.xlane.xlu0 %4027
        %v4029 = vadd.f32 %v3995, %v3996
        %4030 = vadd.xlane.f32.xlu0 %v4029
        %v4031 = vpop.xlane.xlu0 %4030
        %v4032 = vadd.f32 %v3997, %v3998
        %4033 = vadd.xlane.f32.xlu0 %v4032
        %v4034 = vpop.xlane.xlu0 %4033
        %v4035 = vadd.f32 %v3999, %v4000
        %4036 = vadd.xlane.f32.xlu0 %v4035
        %v4037 = vpop.xlane.xlu0 %4036
        %v4038 = vadd.f32 %v4001, %v4002
        %4039 = vadd.xlane.f32.xlu0 %v4038
        %v4040 = vpop.xlane.xlu0 %4039
        %v4041 = vadd.f32 %v4003, %v4004
        %4042 = vadd.xlane.f32.xlu0 %v4041
        %v4043 = vpop.xlane.xlu0 %4042
        %v4044 = vadd.f32 %v4005, %v4006
        %4045 = vadd.xlane.f32.xlu0 %v4044
        %v4046 = vpop.xlane.xlu0 %4045
        %v4047 = vadd.f32 %v4007, %v4008
        %4048 = vadd.xlane.f32.xlu0 %v4047
        %v4049 = vpop.xlane.xlu0 %4048
        %v4050 = vadd.f32 %v4009, %v4010
        %4051 = vadd.xlane.f32.xlu0 %v4050
        %v4052 = vpop.xlane.xlu0 %4051
        %v4053 = vadd.f32 %v4011, %v4012
        %4054 = vadd.xlane.f32.xlu0 %v4053
        %v4055 = vpop.xlane.xlu0 %4054
        %v4056 = vadd.f32 %v4013, %v4014
        %4057 = vadd.xlane.f32.xlu0 %v4056
        %v4058 = vpop.xlane.xlu0 %4057
        %v4059 = vadd.f32 %v4015, %v4016
        %4060 = vadd.xlane.f32.xlu0 %v4059
        %v4061 = vpop.xlane.xlu0 %4060
        %v4062 = vadd.f32 %v4017, %v4018
        %4063 = vadd.xlane.f32.xlu0 %v4062
        %v4064 = vpop.xlane.xlu0 %4063
        %v4065 = vadd.f32 %v4019, %v4020
        %4066 = vadd.xlane.f32.xlu0 %v4065
        %v4067 = vpop.xlane.xlu0 %4066
        %v4068 = vadd.f32 %v4021, %v4022
        %4069 = vadd.xlane.f32.xlu0 %v4068
        %v4070 = vpop.xlane.xlu0 %4069
        %v4071 = vmul.f32 %v4025, %v3073
        %v4072 = vmul.f32 %v4028, %v3073
        %v4073 = vmul.f32 %v4031, %v3073
        %v4074 = vmul.f32 %v4034, %v3073
        %v4075 = vmul.f32 %v4037, %v3073
        %v4076 = vmul.f32 %v4040, %v3073
        %v4077 = vmul.f32 %v4043, %v3073
        %v4078 = vmul.f32 %v4046, %v3073
        %v4079 = vmul.f32 %v4049, %v3073
        %v4080 = vmul.f32 %v4052, %v3073
        %v4081 = vmul.f32 %v4055, %v3073
        %v4082 = vmul.f32 %v4058, %v3073
        %v4083 = vmul.f32 %v4061, %v3073
        %v4084 = vmul.f32 %v4064, %v3073
        %v4085 = vmul.f32 %v4067, %v3073
        %v4086 = vmul.f32 %v4070, %v3073
        %v4087 = vld [vmem:[%s11] sm:$0x3]
        %v4088 = vadd.f32 %v4071, 1e-05
        %v4089 = vadd.f32 %v4072, 1e-05
        %v4090 = vadd.f32 %v4073, 1e-05
        %v4091 = vadd.f32 %v4074, 1e-05
        %v4092 = vadd.f32 %v4075, 1e-05
        %v4093 = vadd.f32 %v4076, 1e-05
        %v4094 = vadd.f32 %v4077, 1e-05
        %v4095 = vadd.f32 %v4078, 1e-05
        %v4096 = vadd.f32 %v4079, 1e-05
        %v4097 = vadd.f32 %v4080, 1e-05
        %v4098 = vadd.f32 %v4081, 1e-05
        %v4099 = vadd.f32 %v4082, 1e-05
        %v4100 = vadd.f32 %v4083, 1e-05
        %v4101 = vadd.f32 %v4084, 1e-05
        %v4102 = vadd.f32 %v4085, 1e-05
        %v4103 = vadd.f32 %v4086, 1e-05
        %v4104 = vrsqrt.pop %v4088
        %v4105 = vrsqrt.pop %v4089
        %v4106 = vrsqrt.pop %v4090
        %v4107 = vrsqrt.pop %v4091
        %v4108 = vrsqrt.pop %v4092
        %v4109 = vrsqrt.pop %v4093
        %v4110 = vrsqrt.pop %v4094
        %v4111 = vrsqrt.pop %v4095
        %v4112 = vrsqrt.pop %v4096
        %v4113 = vrsqrt.pop %v4097
        %v4114 = vrsqrt.pop %v4098
        %v4115 = vrsqrt.pop %v4099
        %v4116 = vrsqrt.pop %v4100
        %v4117 = vrsqrt.pop %v4101
        %v4118 = vrsqrt.pop %v4102
        %v4119 = vrsqrt.pop %v4103
        %v4120 = vmul.f32 %v3959, %v4104
        %v4121 = vmul.f32 %v3960, %v4104
        %v4122 = vmul.f32 %v3961, %v4105
        %v4123 = vmul.f32 %v3962, %v4105
        %v4124 = vmul.f32 %v3963, %v4106
        %v4125 = vmul.f32 %v3964, %v4106
        %v4126 = vmul.f32 %v3965, %v4107
        %v4127 = vmul.f32 %v3966, %v4107
        %v4128 = vmul.f32 %v3967, %v4108
        %v4129 = vmul.f32 %v3968, %v4108
        %v4130 = vmul.f32 %v3969, %v4109
        %v4131 = vmul.f32 %v3970, %v4109
        %v4132 = vmul.f32 %v3971, %v4110
        %v4133 = vmul.f32 %v3972, %v4110
        %v4134 = vmul.f32 %v3973, %v4111
        %v4135 = vmul.f32 %v3974, %v4111
        %v4136 = vmul.f32 %v3975, %v4112
        %v4137 = vmul.f32 %v3976, %v4112
        %v4138 = vmul.f32 %v3977, %v4113
        %v4139 = vmul.f32 %v3978, %v4113
        %v4140 = vmul.f32 %v3979, %v4114
        %v4141 = vmul.f32 %v3980, %v4114
        %v4142 = vmul.f32 %v3981, %v4115
        %v4143 = vmul.f32 %v3982, %v4115
        %v4144 = vmul.f32 %v3983, %v4116
        %v4145 = vmul.f32 %v3984, %v4116
        %v4146 = vmul.f32 %v3985, %v4117
        %v4147 = vmul.f32 %v3986, %v4117
        %v4148 = vmul.f32 %v3987, %v4118
        %v4149 = vmul.f32 %v3988, %v4118
        %v4150 = vmul.f32 %v3989, %v4119
        %v4151 = vmul.f32 %v3990, %v4119
        %v4153 = vlaneseq
        %v4154 = vshrl.u32 %v4153, 7
        %v4155 = vsub.s32 0, %v4154
        %v4156 = vrot.slane %v4087, %v4155
        %v4157 = vlaneseq
        %v4158 = vshrl.u32 %v4157, 7
        %v4159 = vsub.s32 1, %v4158
        %v4160 = vrot.slane %v4087, %v4159
        %v4163 = vmul.f32 %v4156, %v4120
        %v4164 = vmul.f32 %v4160, %v4121
        %v4165 = vmul.f32 %v4156, %v4122
        %v4166 = vmul.f32 %v4160, %v4123
        %v4167 = vmul.f32 %v4156, %v4124
        %v4168 = vmul.f32 %v4160, %v4125
        %v4169 = vmul.f32 %v4156, %v4126
        %v4170 = vmul.f32 %v4160, %v4127
        %v4171 = vmul.f32 %v4156, %v4128
        %v4172 = vmul.f32 %v4160, %v4129
        %v4173 = vmul.f32 %v4156, %v4130
        %v4174 = vmul.f32 %v4160, %v4131
        %v4175 = vmul.f32 %v4156, %v4132
        %v4176 = vmul.f32 %v4160, %v4133
        %v4177 = vmul.f32 %v4156, %v4134
        %v4178 = vmul.f32 %v4160, %v4135
        %v4179 = vmul.f32 %v4156, %v4136
        %v4180 = vmul.f32 %v4160, %v4137
        %v4181 = vmul.f32 %v4156, %v4138
        %v4182 = vmul.f32 %v4160, %v4139
        %v4183 = vmul.f32 %v4156, %v4140
        %v4184 = vmul.f32 %v4160, %v4141
        %v4185 = vmul.f32 %v4156, %v4142
        %v4186 = vmul.f32 %v4160, %v4143
        %v4187 = vmul.f32 %v4156, %v4144
        %v4188 = vmul.f32 %v4160, %v4145
        %v4189 = vmul.f32 %v4156, %v4146
        %v4190 = vmul.f32 %v4160, %v4147
        %v4191 = vmul.f32 %v4156, %v4148
        %v4192 = vmul.f32 %v4160, %v4149
        %v4193 = vmul.f32 %v4156, %v4150
        %v4194 = vmul.f32 %v4160, %v4151
        %v4195 = vld [vmem:[#allocation18] sm:$0x3]
        %v4197 = vlaneseq
        %v4198 = vshrl.u32 %v4197, 7
        %v4199 = vsub.s32 0, %v4198
        %v4200 = vrot.slane %v4195, %v4199
        %v4201 = vlaneseq
        %v4202 = vshrl.u32 %v4201, 7
        %v4203 = vsub.s32 1, %v4202
        %v4204 = vrot.slane %v4195, %v4203
        %v4207 = vadd.f32 %v4163, %v4200
        %v4208 = vadd.f32 %v4164, %v4204
        %v4209 = vadd.f32 %v4165, %v4200
        %v4210 = vadd.f32 %v4166, %v4204
        %v4211 = vadd.f32 %v4167, %v4200
        %v4212 = vadd.f32 %v4168, %v4204
        %v4213 = vadd.f32 %v4169, %v4200
        %v4214 = vadd.f32 %v4170, %v4204
        %v4215 = vadd.f32 %v4171, %v4200
        %v4216 = vadd.f32 %v4172, %v4204
        %v4217 = vadd.f32 %v4173, %v4200
        %v4218 = vadd.f32 %v4174, %v4204
        %v4219 = vadd.f32 %v4175, %v4200
        %v4220 = vadd.f32 %v4176, %v4204
        %v4221 = vadd.f32 %v4177, %v4200
        %v4222 = vadd.f32 %v4178, %v4204
        %v4223 = vadd.f32 %v4179, %v4200
        %v4224 = vadd.f32 %v4180, %v4204
        %v4225 = vadd.f32 %v4181, %v4200
        %v4226 = vadd.f32 %v4182, %v4204
        %v4227 = vadd.f32 %v4183, %v4200
        %v4228 = vadd.f32 %v4184, %v4204
        %v4229 = vadd.f32 %v4185, %v4200
        %v4230 = vadd.f32 %v4186, %v4204
        %v4231 = vadd.f32 %v4187, %v4200
        %v4232 = vadd.f32 %v4188, %v4204
        %v4233 = vadd.f32 %v4189, %v4200
        %v4234 = vadd.f32 %v4190, %v4204
        %v4235 = vadd.f32 %v4191, %v4200
        %v4236 = vadd.f32 %v4192, %v4204
        %v4237 = vadd.f32 %v4193, %v4200
        %v4238 = vadd.f32 %v4194, %v4204
        %4239 = vst [vmem:[%s566] sm:$0xff] %v4207
        %4240 = vst [vmem:[%s566 + $0x8] sm:$0xff] %v4208
        %4241 = vst [vmem:[%s566 + $0x10] sm:$0xff] %v4209
        %4242 = vst [vmem:[%s566 + $0x18] sm:$0xff] %v4210
        %4243 = vst [vmem:[%s566 + $0x20] sm:$0xff] %v4211
        %4244 = vst [vmem:[%s566 + $0x28] sm:$0xff] %v4212
        %4245 = vst [vmem:[%s566 + $0x30] sm:$0xff] %v4213
        %4246 = vst [vmem:[%s566 + $0x38] sm:$0xff] %v4214
        %4247 = vst [vmem:[%s566 + $0x40] sm:$0xff] %v4215
        %4248 = vst [vmem:[%s566 + $0x48] sm:$0xff] %v4216
        %4249 = vst [vmem:[%s566 + $0x50] sm:$0xff] %v4217
        %4250 = vst [vmem:[%s566 + $0x58] sm:$0xff] %v4218
        %4251 = vst [vmem:[%s566 + $0x60] sm:$0xff] %v4219
        %4252 = vst [vmem:[%s566 + $0x68] sm:$0xff] %v4220
        %4253 = vst [vmem:[%s566 + $0x70] sm:$0xff] %v4221
        %4254 = vst [vmem:[%s566 + $0x78] sm:$0xff] %v4222
        %4255 = vst [vmem:[%s566 + $0x80] sm:$0xff] %v4223
        %4256 = vst [vmem:[%s566 + $0x88] sm:$0xff] %v4224
        %4257 = vst [vmem:[%s566 + $0x90] sm:$0xff] %v4225
        %4258 = vst [vmem:[%s566 + $0x98] sm:$0xff] %v4226
        %4259 = vst [vmem:[%s566 + $0xa0] sm:$0xff] %v4227
        %4260 = vst [vmem:[%s566 + $0xa8] sm:$0xff] %v4228
        %4261 = vst [vmem:[%s566 + $0xb0] sm:$0xff] %v4229
        %4262 = vst [vmem:[%s566 + $0xb8] sm:$0xff] %v4230
        %4263 = vst [vmem:[%s566 + $0xc0] sm:$0xff] %v4231
        %4264 = vst [vmem:[%s566 + $0xc8] sm:$0xff] %v4232
        %4265 = vst [vmem:[%s566 + $0xd0] sm:$0xff] %v4233
        %4266 = vst [vmem:[%s566 + $0xd8] sm:$0xff] %v4234
        %4267 = vst [vmem:[%s566 + $0xe0] sm:$0xff] %v4235
        %4268 = vst [vmem:[%s566 + $0xe8] sm:$0xff] %v4236
        %4269 = vst [vmem:[%s566 + $0xf0] sm:$0xff] %v4237
        %4270 = vst [vmem:[%s566 + $0xf8] sm:$0xff] %v4238
        %s4271 = sand.u32 %s320, 1
        %s4272 = scalar_lea.sflag [#allocation6], %s4271
        %s4273 = sand.u32 %s320, 1
        %s4274 = smul.addr %s4273, 256
        %s4275 = scalar_lea.vmem [#allocation19], %s4274
        // Predicated region
        $region109: #{encoder_layer.1} parent=71 // pred_check
          %p4276 = pneg %p330
        $region110: #{encoder_layer.1} parent=71 // pred_check_branch
          %4278 = sbr.rel (%p4276) target = $region112
        $region111: #{encoder_layer.1} parent=71 // pred_region
          %s4280 = ssub.s32 4096, 4096
          %4281 = vsyncadd %s4272, %s4280
          %s4282 = smul.addr %s34, 32
          %s4283 = smul.addr %s4282, 128
          %s4284 = scalar_lea.hbm %s13, %s4283
          %s4285 = sshll.u32 %s4275, 4
          %s4286 = int_to_ptr.vmem [resolvable:$true] %s4285
          %4291 = dma.vmem_to_hbm [thread:$0]  %s4286, 4096, %s4284, %s4272, 256, 256, 16
        $region112: #{encoder_layer.1} parent=71 // pred_fallthru
          _
      $region72: #{encoder_layer.1} parent=5 // pred_fallthru
        _
      %p4292 = scmp.le.s32.totalorder 2, %s29
      // Predicated region
      $region113: #{encoder_layer.1} parent=5 // pred_check
        %p4293 = pneg %p4292
      $region114: #{encoder_layer.1} parent=5 // pred_check_branch
        %4295 = sbr.rel (%p4293) target = $region116
      $region115: #{encoder_layer.1} parent=5 // pred_region
        %s4296 = ssub.s32 %s29, 2
        // Predicated region
        $region117: #{encoder_layer.1} parent=115 // pred_check
          %p4297 = pneg %p336
        $region118: #{encoder_layer.1} parent=115 // pred_check_branch
          %4299 = sbr.rel (%p4297) target = $region120
        $region119: #{encoder_layer.1} parent=115 // pred_region
          %s4300 = sand.u32 %s321, 1
          %s4301 = scalar_lea.sflag [#allocation6], %s4300
          %s4302 = sand.u32 %s321, 1
          %s4303 = smul.addr %s4302, 256
          %s4304 = scalar_lea.vmem [#allocation19], %s4303
          %4305 = dma.done %s4301, 4096
        $region120: #{encoder_layer.1} parent=115 // pred_fallthru
          _
      $region116: #{encoder_layer.1} parent=5 // pred_fallthru
        _
    $region6: #{encoder_layer.1} parent=1 // loop_footer
      %s33 = sadd.s32 1, %s29
    $region7: #{encoder_layer.1} parent=1 // loop_footer_branch
      %28 = sbr.rel target = $region3
    $region8: #{encoder_layer.1} parent=1 // loop_exit
      _
    %4306 = vsyncpa [#allocation5], 1
    %s4307 = scalar_lea.sflag [#allocation5], 1
    %4308 = vsyncpa %s4307, 1
    %4309 = vsyncpa [#allocation8], 1
    %4310 = vsyncpa [#allocation11], 1
    %4311 = vsyncpa [#allocation14], 1
    %4312 = vsyncpa [#allocation17], 1
    %4313 = vsyncpa [#allocation6], 1
    %s4314 = scalar_lea.sflag [#allocation6], 1
    %4315 = vsyncpa %s4314, 1

</llo_original>
